<compile_context>
chip_gen: v7x
topology: tpu7x:2x2x1
jax: 0.10.0
libtpu: 0.0.40
codegen_flags: <defaults>
</compile_context>

<pallas_src>
import numpy as np
import jax
import jax.numpy as jnp
from jax.experimental import pallas as pl
from jax.experimental.pallas import tpu as pltpu

N = 2
C_IN = 512
H = W = 14
POOL_K, POOL_S = 5, 3
H_OUT = (H - POOL_K) // POOL_S + 1          # 4
S_IN = H * W                                # 196
S_OUT = H_OUT * H_OUT                       # 16
C_CONV = 128
FLAT = C_CONV * S_OUT                       # 2048
HID = 1024
HEAD = 7                                    # 3 (xyz) + 4 (wpqr)
HEAD_PAD = 8                                # fused-head width (7 real cols + 1 pad)

K_TILES = 2                                 # grid tiles over the FC contraction dim
S_PER_TILE = S_OUT // K_TILES               # 8 spatial rows per tile
KT = S_PER_TILE * C_CONV                    # 1024 contraction rows per tile


def _loss_header_kernel(a_ref, x_ref, wconv_ref, bconv_ref, wfc_ref, bfc_ref,
                        whead_ref, bhead_ref, out_ref, flat_sc, fc_sc):
    t = pl.program_id(0)

    @pl.when(t == 0)
    def _():
        fc_sc[...] = jnp.zeros_like(fc_sc)
        for n in range(N):
            # 5x5 / stride-3 average pool as a matmul with the pooling matrix:
            # pooled[s, c] = sum_j A[s, j] * x[n, c, j]                  -> (16, 512)
            pooled = jax.lax.dot_general(
                a_ref[...], x_ref[n],
                dimension_numbers=(((1,), (1,)), ((), ())),
                preferred_element_type=jnp.float32)
            # 1x1 conv + bias + ReLU                                     -> (16, 128)
            conv = jnp.dot(pooled.astype(jnp.bfloat16), wconv_ref[...],
                           preferred_element_type=jnp.float32)
            feat = jnp.maximum(conv + bconv_ref[...], 0.0)
            # Single whole-tile, unmasked store per batch (no sublane scatter).
            flat_sc[n] = feat

    # Partial FC for this K tile: (N, KT) @ (KT, 1024), f32 accumulation.
    # One (N, S_PER_TILE, C_CONV) -> (N, KT) relayout per tile (s*128 + c order,
    # matching the host-permuted fc weight rows).
    s0 = pl.multiple_of(t * S_PER_TILE, S_PER_TILE)
    lhs = flat_sc[:, pl.ds(s0, S_PER_TILE), :].reshape(N, KT)
    fc_sc[...] += jnp.dot(lhs.astype(jnp.bfloat16), wfc_ref[...],
                          preferred_element_type=jnp.float32)

    @pl.when(t == K_TILES - 1)
    def _():
        fc = jnp.maximum(fc_sc[...] + bfc_ref[...], 0.0)
        # TODO(synk): Dropout(p=0.7) implemented as identity — inference/eval mode only.
        out = jnp.dot(fc.astype(jnp.bfloat16), whead_ref[...],
                      preferred_element_type=jnp.float32) + bhead_ref[...]
        out_ref[...] = out


def make_pool_matrix():
    A = np.zeros((S_OUT, S_IN), np.float32)
    inv = 1.0 / (POOL_K * POOL_K)
    for oh in range(H_OUT):
        for ow in range(H_OUT):
            s = oh * H_OUT + ow
            for dh in range(POOL_K):
                for dw in range(POOL_K):
                    A[s, (oh * POOL_S + dh) * W + (ow * POOL_S + dw)] = inv
    return jnp.asarray(A)


def prepare_params(params):
    """One-time weight preprocessing (amortized across forward calls)."""
    wconv = params["conv_w"].reshape(C_CONV, C_IN).T.astype(jnp.bfloat16)      # (512, 128)
    bconv = params["conv_b"].reshape(1, C_CONV).astype(jnp.float32)
    # fc weight: transpose to (FLAT, HID) and permute rows from PyTorch's flatten
    # order c*16+s to the kernel's s*128+c order (no activation transpose needed).
    wfc = (params["fc_w"].T.reshape(C_CONV, S_OUT, HID)
           .transpose(1, 0, 2).reshape(FLAT, HID).astype(jnp.bfloat16))        # (2048, 1024)
    bfc = params["fc_b"].reshape(1, HID).astype(jnp.float32)
    # Fuse the two heads into one narrow (1024, 8) weight: cols 0:3 xyz, 3:7 wpqr.
    whead = jnp.zeros((HID, HEAD_PAD), jnp.float32)
    whead = whead.at[:, 0:3].set(params["xyz_w"].T).at[:, 3:HEAD].set(params["wpqr_w"].T)
    whead = whead.astype(jnp.bfloat16)
    bhead = jnp.zeros((1, HEAD_PAD), jnp.float32)
    bhead = bhead.at[0, 0:3].set(params["xyz_b"]).at[0, 3:HEAD].set(params["wpqr_b"])
    return {"A": make_pool_matrix(), "wconv": wconv, "bconv": bconv,
            "wfc": wfc, "bfc": bfc, "whead": whead, "bhead": bhead}


def loss_header_forward(x_nchw, prep):
    # NCHW-native: flatten spatial only (free reshape, no transpose).
    x = x_nchw.reshape(N, C_IN, S_IN)

    flops = 2 * N * (S_OUT * S_IN * C_IN + S_OUT * C_IN * C_CONV
                     + FLAT * HID + HID * HEAD_PAD)
    bytes_accessed = (prep["A"].size * 4 + x.size * 4 + prep["wconv"].size * 2
                      + prep["bconv"].size * 4 + prep["wfc"].size * 2
                      + prep["bfc"].size * 4 + prep["whead"].size * 2
                      + prep["bhead"].size * 4 + N * HEAD_PAD * 4)

    out = pl.pallas_call(
        _loss_header_kernel,
        out_shape=jax.ShapeDtypeStruct((N, HEAD_PAD), jnp.float32),
        grid_spec=pltpu.PrefetchScalarGridSpec(
            num_scalar_prefetch=0,
            grid=(K_TILES,),
            in_specs=[
                pl.BlockSpec((S_OUT, S_IN), lambda t: (0, 0)),        # pooling matrix A
                pl.BlockSpec((N, C_IN, S_IN), lambda t: (0, 0, 0)),   # x (NCHW-native)
                pl.BlockSpec((C_IN, C_CONV), lambda t: (0, 0)),       # conv weight (bf16)
                pl.BlockSpec((1, C_CONV), lambda t: (0, 0)),          # conv bias
                pl.BlockSpec((KT, HID), lambda t: (t, 0)),            # fc weight, K-tiled (bf16)
                pl.BlockSpec((1, HID), lambda t: (0, 0)),             # fc bias
                pl.BlockSpec((HID, HEAD_PAD), lambda t: (0, 0)),      # fused head weight (bf16)
                pl.BlockSpec((1, HEAD_PAD), lambda t: (0, 0)),        # fused head bias
            ],
            out_specs=pl.BlockSpec((N, HEAD_PAD), lambda t: (0, 0)),
            scratch_shapes=[
                pltpu.VMEM((N, S_OUT, C_CONV), jnp.float32),          # conv features (N,16,128)
                pltpu.VMEM((N, HID), jnp.float32),                    # fc accumulator
            ],
        ),
        compiler_params=pltpu.CompilerParams(
            dimension_semantics=("arbitrary",),
            vmem_limit_bytes=16 * 1024 * 1024,
        ),
        cost_estimate=pl.CostEstimate(flops=flops, transcendentals=0,
                                      bytes_accessed=bytes_accessed),
    )(prep["A"], x, prep["wconv"], prep["bconv"], prep["wfc"], prep["bfc"],
      prep["whead"], prep["bhead"])

    return out[:, 0:3], out[:, 3:HEAD]


def ref_forward(x, params):
    pooled = jax.lax.reduce_window(x, 0.0, jax.lax.add,
                                   (1, 1, POOL_K, POOL_K),
                                   (1, 1, POOL_S, POOL_S), "VALID") / (POOL_K * POOL_K)
    conv = jnp.einsum("nchw,oc->nohw", pooled, params["conv_w"].reshape(C_CONV, C_IN),
                      precision=jax.lax.Precision.HIGHEST)
    conv = jnp.maximum(conv + params["conv_b"][None, :, None, None], 0.0)
    flat = conv.reshape(N, FLAT)
    fc = jnp.maximum(jnp.dot(flat, params["fc_w"].T, precision=jax.lax.Precision.HIGHEST)
                     + params["fc_b"], 0.0)
    xyz = jnp.dot(fc, params["xyz_w"].T, precision=jax.lax.Precision.HIGHEST) + params["xyz_b"]
    wpqr = jnp.dot(fc, params["wpqr_w"].T, precision=jax.lax.Precision.HIGHEST) + params["wpqr_b"]
    return xyz, wpqr


if __name__ == "__main__":
    key = jax.random.PRNGKey(0)
    ks = jax.random.split(key, 9)
    params = {
        "conv_w": 0.02 * jax.random.normal(ks[0], (C_CONV, C_IN, 1, 1), jnp.float32),
        "conv_b": 0.02 * jax.random.normal(ks[1], (C_CONV,), jnp.float32),
        "fc_w":   0.02 * jax.random.normal(ks[2], (HID, FLAT), jnp.float32),
        "fc_b":   0.02 * jax.random.normal(ks[3], (HID,), jnp.float32),
        "xyz_w":  0.02 * jax.random.normal(ks[4], (3, HID), jnp.float32),
        "xyz_b":  0.02 * jax.random.normal(ks[5], (3,), jnp.float32),
        "wpqr_w": 0.02 * jax.random.normal(ks[6], (4, HID), jnp.float32),
        "wpqr_b": 0.02 * jax.random.normal(ks[7], (4,), jnp.float32),
    }
    x = jax.random.normal(ks[8], (N, C_IN, H, W), jnp.float32)

    prep = prepare_params(params)               # one-time weight prep (amortized)
    fwd = jax.jit(loss_header_forward)
    xyz, wpqr = fwd(x, prep)
    jax.block_until_ready((xyz, wpqr))

    xyz_ref, wpqr_ref = ref_forward(x, params)
    assert np.allclose(np.asarray(xyz), np.asarray(xyz_ref), rtol=2e-2, atol=2e-2)
    assert np.allclose(np.asarray(wpqr), np.asarray(wpqr_ref), rtol=2e-2, atol=2e-2)
    assert xyz.shape == (N, 3) and wpqr.shape == (N, 4)

    print("KERNEL_OK")
</pallas_src>

<mosaic_0001>
module attributes {stable_mosaic.version = 11 : i64} {
  func.func @_loss_header_kernel(%arg0: i32, %arg1: memref<16x196xf32, #tpu.memory_space<vmem>>, %arg2: memref<2x512x196xf32, #tpu.memory_space<vmem>>, %arg3: memref<512x128xbf16, #tpu.memory_space<vmem>>, %arg4: memref<1x128xf32, #tpu.memory_space<vmem>>, %arg5: memref<1024x1024xbf16, #tpu.memory_space<vmem>>, %arg6: memref<1x1024xf32, #tpu.memory_space<vmem>>, %arg7: memref<1024x8xbf16, #tpu.memory_space<vmem>>, %arg8: memref<1x8xf32, #tpu.memory_space<vmem>>, %arg9: memref<2x8xf32, #tpu.memory_space<vmem>>, %arg10: memref<2x16x128xf32, #tpu.memory_space<vmem>>, %arg11: memref<2x1024xf32, #tpu.memory_space<vmem>>) attributes {dimension_semantics = [#tpu.dimension_semantics<arbitrary>], iteration_bounds = array<i64: 2>, scalar_prefetch = 0 : i64, scratch_operands = 2 : i64, tpu.core_type = #tpu.core_type<tc>, window_params = [{pipeline_mode = #tpu.pipeline_mode<synchronous>, transform_indices = @transform_0, window_bounds = array<i64: 16, 196>}, {pipeline_mode = #tpu.pipeline_mode<synchronous>, transform_indices = @transform_1, window_bounds = array<i64: 2, 512, 196>}, {pipeline_mode = #tpu.pipeline_mode<synchronous>, transform_indices = @transform_2, window_bounds = array<i64: 512, 128>}, {pipeline_mode = #tpu.pipeline_mode<synchronous>, transform_indices = @transform_3, window_bounds = array<i64: 1, 128>}, {transform_indices = @transform_4, window_bounds = array<i64: 1024, 1024>}, {pipeline_mode = #tpu.pipeline_mode<synchronous>, transform_indices = @transform_5, window_bounds = array<i64: 1, 1024>}, {pipeline_mode = #tpu.pipeline_mode<synchronous>, transform_indices = @transform_6, window_bounds = array<i64: 1024, 8>}, {pipeline_mode = #tpu.pipeline_mode<synchronous>, transform_indices = @transform_7, window_bounds = array<i64: 1, 8>}, {pipeline_mode = #tpu.pipeline_mode<synchronous>, transform_indices = @transform_8, window_bounds = array<i64: 2, 8>}]} {
    %c0_i32 = arith.constant 0 : i32
    %0 = arith.cmpi eq, %arg0, %c0_i32 : i32
    %1 = arith.extui %0 : i1 to i32
    %c0_i32_0 = arith.constant 0 : i32
    %2 = arith.cmpi ne, %1, %c0_i32_0 : i32
    scf.if %2 {
      %cst_9 = arith.constant 0.000000e+00 : f32
      %17 = vector.broadcast %cst_9 : f32 to vector<2x1024xf32>
      %c0_10 = arith.constant 0 : index
      %c0_11 = arith.constant 0 : index
      %18 = vector.load %arg11[%c0_10, %c0_11] : memref<2x1024xf32, #tpu.memory_space<vmem>>, vector<2x1024xf32>
      tpu.vector_store %arg11[%c0_10, %c0_11], %17 {strides = array<i32>} : memref<2x1024xf32, #tpu.memory_space<vmem>>, vector<2x1024xf32>,
      %c0_12 = arith.constant 0 : index
      %c0_13 = arith.constant 0 : index
      %19 = vector.load %arg1[%c0_12, %c0_13] : memref<16x196xf32, #tpu.memory_space<vmem>>, vector<16x196xf32>
      %c0_14 = arith.constant 0 : index
      %c0_15 = arith.constant 0 : index
      %c0_16 = arith.constant 0 : index
      %20 = vector.load %arg2[%c0_14, %c0_15, %c0_16] : memref<2x512x196xf32, #tpu.memory_space<vmem>>, vector<1x512x196xf32>
      %21 = vector.shape_cast %20 : vector<1x512x196xf32> to vector<512x196xf32>
      %cst_17 = arith.constant dense<0.000000e+00> : vector<16x512xf32>
      %22 = tpu.matmul %19, %21, %cst_17 {dimension_numbers = #tpu.dot_dimension_numbers<[1], [1], [0], [0], [0, 0, 1, 0], [], []>} : vector<16x196xf32>, vector<512x196xf32>, vector<16x512xf32> -> vector<16x512xf32>
      %23 = arith.truncf %22 : vector<16x512xf32> to vector<16x512xbf16>
      %c0_18 = arith.constant 0 : index
      %c0_19 = arith.constant 0 : index
      %24 = vector.load %arg3[%c0_18, %c0_19] : memref<512x128xbf16, #tpu.memory_space<vmem>>, vector<512x128xbf16>
      %cst_20 = arith.constant dense<0.000000e+00> : vector<16x128xf32>
      %25 = tpu.matmul %23, %24, %cst_20 {dimension_numbers = #tpu.dot_dimension_numbers<[1], [0], [0], [1], [0, 0, 1, 1], [], []>} : vector<16x512xbf16>, vector<512x128xbf16>, vector<16x128xf32> -> vector<16x128xf32>
      %c0_21 = arith.constant 0 : index
      %c0_22 = arith.constant 0 : index
      %26 = vector.load %arg4[%c0_21, %c0_22] : memref<1x128xf32, #tpu.memory_space<vmem>>, vector<1x128xf32>
      %27 = vector.broadcast %26 : vector<1x128xf32> to vector<16x128xf32>
      %28 = arith.addf %25, %27 : vector<16x128xf32>
      %cst_23 = arith.constant 0.000000e+00 : f32
      %29 = vector.broadcast %cst_23 : f32 to vector<16x128xf32>
      %30 = arith.maximumf %28, %29 : vector<16x128xf32>
      %c0_24 = arith.constant 0 : index
      %c0_25 = arith.constant 0 : index
      %c0_26 = arith.constant 0 : index
      %31 = vector.load %arg10[%c0_24, %c0_25, %c0_26] : memref<2x16x128xf32, #tpu.memory_space<vmem>>, vector<1x16x128xf32>
      %32 = vector.shape_cast %31 : vector<1x16x128xf32> to vector<16x128xf32>
      %33 = vector.shape_cast %30 : vector<16x128xf32> to vector<1x16x128xf32>
      tpu.vector_store %arg10[%c0_24, %c0_25, %c0_26], %33 {strides = array<i32>} : memref<2x16x128xf32, #tpu.memory_space<vmem>>, vector<1x16x128xf32>,
      %c0_27 = arith.constant 0 : index
      %c0_28 = arith.constant 0 : index
      %34 = vector.load %arg1[%c0_27, %c0_28] : memref<16x196xf32, #tpu.memory_space<vmem>>, vector<16x196xf32>
      %c1 = arith.constant 1 : index
      %c0_29 = arith.constant 0 : index
      %c0_30 = arith.constant 0 : index
      %35 = vector.load %arg2[%c1, %c0_29, %c0_30] : memref<2x512x196xf32, #tpu.memory_space<vmem>>, vector<1x512x196xf32>
      %36 = vector.shape_cast %35 : vector<1x512x196xf32> to vector<512x196xf32>
      %cst_31 = arith.constant dense<0.000000e+00> : vector<16x512xf32>
      %37 = tpu.matmul %34, %36, %cst_31 {dimension_numbers = #tpu.dot_dimension_numbers<[1], [1], [0], [0], [0, 0, 1, 0], [], []>} : vector<16x196xf32>, vector<512x196xf32>, vector<16x512xf32> -> vector<16x512xf32>
      %38 = arith.truncf %37 : vector<16x512xf32> to vector<16x512xbf16>
      %c0_32 = arith.constant 0 : index
      %c0_33 = arith.constant 0 : index
      %39 = vector.load %arg3[%c0_32, %c0_33] : memref<512x128xbf16, #tpu.memory_space<vmem>>, vector<512x128xbf16>
      %cst_34 = arith.constant dense<0.000000e+00> : vector<16x128xf32>
      %40 = tpu.matmul %38, %39, %cst_34 {dimension_numbers = #tpu.dot_dimension_numbers<[1], [0], [0], [1], [0, 0, 1, 1], [], []>} : vector<16x512xbf16>, vector<512x128xbf16>, vector<16x128xf32> -> vector<16x128xf32>
      %c0_35 = arith.constant 0 : index
      %c0_36 = arith.constant 0 : index
      %41 = vector.load %arg4[%c0_35, %c0_36] : memref<1x128xf32, #tpu.memory_space<vmem>>, vector<1x128xf32>
      %42 = vector.broadcast %41 : vector<1x128xf32> to vector<16x128xf32>
      %43 = arith.addf %40, %42 : vector<16x128xf32>
      %cst_37 = arith.constant 0.000000e+00 : f32
      %44 = vector.broadcast %cst_37 : f32 to vector<16x128xf32>
      %45 = arith.maximumf %43, %44 : vector<16x128xf32>
      %c1_38 = arith.constant 1 : index
      %c0_39 = arith.constant 0 : index
      %c0_40 = arith.constant 0 : index
      %46 = vector.load %arg10[%c1_38, %c0_39, %c0_40] : memref<2x16x128xf32, #tpu.memory_space<vmem>>, vector<1x16x128xf32>
      %47 = vector.shape_cast %46 : vector<1x16x128xf32> to vector<16x128xf32>
      %48 = vector.shape_cast %45 : vector<16x128xf32> to vector<1x16x128xf32>
      tpu.vector_store %arg10[%c1_38, %c0_39, %c0_40], %48 {strides = array<i32>} : memref<2x16x128xf32, #tpu.memory_space<vmem>>, vector<1x16x128xf32>,
    } else {
    }
    %c8_i32 = arith.constant 8 : i32
    %3 = arith.muli %arg0, %c8_i32 : i32
    %4 = tpu.assume_multiple %3, 8 : i32
    %c0 = arith.constant 0 : index
    %5 = arith.index_cast %4 : i32 to index
    %c0_1 = arith.constant 0 : index
    %6 = vector.load %arg10[%c0, %5, %c0_1] : memref<2x16x128xf32, #tpu.memory_space<vmem>>, vector<2x8x128xf32>
    %7 = vector.shape_cast %6 : vector<2x8x128xf32> to vector<2x1024xf32>
    %c0_2 = arith.constant 0 : index
    %c0_3 = arith.constant 0 : index
    %8 = vector.load %arg11[%c0_2, %c0_3] : memref<2x1024xf32, #tpu.memory_space<vmem>>, vector<2x1024xf32>
    %9 = arith.truncf %7 : vector<2x1024xf32> to vector<2x1024xbf16>
    %c0_4 = arith.constant 0 : index
    %c0_5 = arith.constant 0 : index
    %10 = vector.load %arg5[%c0_4, %c0_5] : memref<1024x1024xbf16, #tpu.memory_space<vmem>>, vector<1024x1024xbf16>
    %cst = arith.constant dense<0.000000e+00> : vector<2x1024xf32>
    %11 = tpu.matmul %9, %10, %cst {dimension_numbers = #tpu.dot_dimension_numbers<[1], [0], [0], [1], [0, 0, 1, 1], [], []>} : vector<2x1024xbf16>, vector<1024x1024xbf16>, vector<2x1024xf32> -> vector<2x1024xf32>
    %12 = arith.addf %8, %11 : vector<2x1024xf32>
    %c0_6 = arith.constant 0 : index
    %c0_7 = arith.constant 0 : index
    %13 = vector.load %arg11[%c0_6, %c0_7] : memref<2x1024xf32, #tpu.memory_space<vmem>>, vector<2x1024xf32>
    tpu.vector_store %arg11[%c0_6, %c0_7], %12 {strides = array<i32>} : memref<2x1024xf32, #tpu.memory_space<vmem>>, vector<2x1024xf32>,
    %c1_i32 = arith.constant 1 : i32
    %14 = arith.cmpi eq, %arg0, %c1_i32 : i32
    %15 = arith.extui %14 : i1 to i32
    %c0_i32_8 = arith.constant 0 : i32
    %16 = arith.cmpi ne, %15, %c0_i32_8 : i32
    scf.if %16 {
      %c0_9 = arith.constant 0 : index
      %c0_10 = arith.constant 0 : index
      %17 = vector.load %arg11[%c0_9, %c0_10] : memref<2x1024xf32, #tpu.memory_space<vmem>>, vector<2x1024xf32>
      %c0_11 = arith.constant 0 : index
      %c0_12 = arith.constant 0 : index
      %18 = vector.load %arg6[%c0_11, %c0_12] : memref<1x1024xf32, #tpu.memory_space<vmem>>, vector<1x1024xf32>
      %19 = vector.broadcast %18 : vector<1x1024xf32> to vector<2x1024xf32>
      %20 = arith.addf %17, %19 : vector<2x1024xf32>
      %cst_13 = arith.constant 0.000000e+00 : f32
      %21 = vector.broadcast %cst_13 : f32 to vector<2x1024xf32>
      %22 = arith.maximumf %20, %21 : vector<2x1024xf32>
      %23 = arith.truncf %22 : vector<2x1024xf32> to vector<2x1024xbf16>
      %c0_14 = arith.constant 0 : index
      %c0_15 = arith.constant 0 : index
      %24 = vector.load %arg7[%c0_14, %c0_15] : memref<1024x8xbf16, #tpu.memory_space<vmem>>, vector<1024x8xbf16>
      %cst_16 = arith.constant dense<0.000000e+00> : vector<2x8xf32>
      %25 = tpu.matmul %23, %24, %cst_16 {dimension_numbers = #tpu.dot_dimension_numbers<[1], [0], [0], [1], [0, 0, 1, 1], [], []>} : vector<2x1024xbf16>, vector<1024x8xbf16>, vector<2x8xf32> -> vector<2x8xf32>
      %c0_17 = arith.constant 0 : index
      %c0_18 = arith.constant 0 : index
      %26 = vector.load %arg8[%c0_17, %c0_18] : memref<1x8xf32, #tpu.memory_space<vmem>>, vector<1x8xf32>
      %27 = vector.broadcast %26 : vector<1x8xf32> to vector<2x8xf32>
      %28 = arith.addf %25, %27 : vector<2x8xf32>
      %c0_19 = arith.constant 0 : index
      %c0_20 = arith.constant 0 : index
      %29 = vector.load %arg9[%c0_19, %c0_20] : memref<2x8xf32, #tpu.memory_space<vmem>>, vector<2x8xf32>
      tpu.vector_store %arg9[%c0_19, %c0_20], %28 {strides = array<i32>} : memref<2x8xf32, #tpu.memory_space<vmem>>, vector<2x8xf32>,
    } else {
    }
    return
  }
  func.func @transform_0(%arg0: i32) -> (i32, i32) {
    %c0_i32 = arith.constant 0 : i32
    %c0_i32_0 = arith.constant 0 : i32
    %c0_i32_1 = arith.constant 0 : i32
    return %c0_i32, %c0_i32_0 : i32, i32
  }
  func.func @transform_1(%arg0: i32) -> (i32, i32, i32) {
    %c0_i32 = arith.constant 0 : i32
    %c0_i32_0 = arith.constant 0 : i32
    %c0_i32_1 = arith.constant 0 : i32
    %c0_i32_2 = arith.constant 0 : i32
    return %c0_i32, %c0_i32_0, %c0_i32_1 : i32, i32, i32
  }
  func.func @transform_2(%arg0: i32) -> (i32, i32) {
    %c0_i32 = arith.constant 0 : i32
    %c0_i32_0 = arith.constant 0 : i32
    %c0_i32_1 = arith.constant 0 : i32
    return %c0_i32, %c0_i32_0 : i32, i32
  }
  func.func @transform_3(%arg0: i32) -> (i32, i32) {
    %c0_i32 = arith.constant 0 : i32
    %c0_i32_0 = arith.constant 0 : i32
    %c0_i32_1 = arith.constant 0 : i32
    return %c0_i32, %c0_i32_0 : i32, i32
  }
  func.func @transform_4(%arg0: i32) -> (i32, i32) {
    %c0_i32 = arith.constant 0 : i32
    %c0_i32_0 = arith.constant 0 : i32
    return %arg0, %c0_i32 : i32, i32
  }
  func.func @transform_5(%arg0: i32) -> (i32, i32) {
    %c0_i32 = arith.constant 0 : i32
    %c0_i32_0 = arith.constant 0 : i32
    %c0_i32_1 = arith.constant 0 : i32
    return %c0_i32, %c0_i32_0 : i32, i32
  }
  func.func @transform_6(%arg0: i32) -> (i32, i32) {
    %c0_i32 = arith.constant 0 : i32
    %c0_i32_0 = arith.constant 0 : i32
    %c0_i32_1 = arith.constant 0 : i32
    return %c0_i32, %c0_i32_0 : i32, i32
  }
  func.func @transform_7(%arg0: i32) -> (i32, i32) {
    %c0_i32 = arith.constant 0 : i32
    %c0_i32_0 = arith.constant 0 : i32
    %c0_i32_1 = arith.constant 0 : i32
    return %c0_i32, %c0_i32_0 : i32, i32
  }
  func.func @transform_8(%arg0: i32) -> (i32, i32) {
    %c0_i32 = arith.constant 0 : i32
    %c0_i32_0 = arith.constant 0 : i32
    %c0_i32_1 = arith.constant 0 : i32
    return %c0_i32, %c0_i32_0 : i32, i32
  }
}

</mosaic_0001>

<llo_original>
// kernel: loss_header_forward.1
$region0: #{loss_header_forward.1}
  #allocation0 [shape = 'u32[]', space=smem, size = 0x4, offset = 0x4, fixed_abs, tag = 'smem constant byte address 0x4 - core index']
  #allocation1 [shape = 'u32[144,128]{1,0:T(1,128)}', space=vmem, size = 0x12000, scoped, tag = 'internal scratch']
  #allocation2 [shape = 'f32[2,16,128]{2,1,0:T(8,128)}', space=vmem, size = 0x4000, scoped, tag = 'scratch operand']
  #allocation3 [shape = 'f32[2,1024]{1,0:T(2,128)}', space=vmem, size = 0x2000, scoped, tag = 'scratch operand']
  %s0 = inlined_call_operand.hbm [shape: f32[16,196], index: 0, kind: input, shape index: {}]
  %s1 = inlined_call_operand.vmem [shape: f32[2,512,196], index: 1, kind: input, shape index: {}]
  %s2 = inlined_call_operand.hbm [shape: bf16[512,128], index: 2, kind: input, shape index: {}]
  %s3 = inlined_call_operand.hbm [shape: f32[1,128], index: 3, kind: input, shape index: {}]
  %s4 = inlined_call_operand.hbm [shape: bf16[2048,1024], index: 4, kind: input, shape index: {}]
  %s5 = inlined_call_operand.hbm [shape: f32[1,1024], index: 5, kind: input, shape index: {}]
  %s6 = inlined_call_operand.vmem [shape: bf16[1024,8], index: 6, kind: input, shape index: {}]
  %s7 = inlined_call_operand.hbm [shape: f32[1,8], index: 7, kind: input, shape index: {}]
  %s8 = inlined_call_operand.vmem [shape: f32[2,8], index: 8, kind: output, shape index: {}]
  %s9 = sld [smem:[#allocation0]]
  $region97: #{loss_header_forward.1} parent=0
    _
  %s11 = ssub.s32 1, %s9
  %s12 = scalar_select 0, %s11, %s9
  $region1: #{loss_header_forward.1} parent=0
    #allocation4 [shape = 'u8[16384]{0}', space=vmem, size = 0x4000, scoped, tag = 'input window, operand 0, single buffered']
    #allocation5 [shape = 's32[2]{0}', space=sflag, size = 0x8, scoped, tag = 'scoped memory for loss_header_forward.1']
    #allocation6 [shape = 'u8[131072]{0}', space=vmem, size = 0x20000, scoped, tag = 'input window, operand 2, single buffered']
    #allocation7 [shape = 's32[1]{0}', space=sflag, size = 0x4, scoped, tag = 'scoped memory for loss_header_forward.1']
    #allocation8 [shape = 'u8[512]{0}', space=vmem, size = 0x400, scoped, tag = 'input window, operand 3, single buffered']
    #allocation9 [shape = 'u8[4194304]{0}', space=vmem, size = 0x400000, scoped, tag = 'input window, operand 4']
    #allocation10 [shape = 's32[2]{0}', space=sflag, size = 0x8, scoped, tag = 'scoped memory for loss_header_forward.1']
    #allocation11 [shape = 'u8[4096]{0}', space=vmem, size = 0x1000, scoped, tag = 'input window, operand 5, single buffered']
    #allocation12 [shape = 'u8[512]{0}', space=vmem, size = 0x400, scoped, tag = 'input window, operand 7, single buffered']
    #allocation13 [shape = 's32[1]{0}', space=sflag, size = 0x4, scoped, tag = 'scoped memory for loss_header_forward.1']
    %13 = vsyncpa [#allocation5], 0
    %14 = vsyncpa [#allocation7], 0
    %15 = vsyncpa [#allocation10], 0
    %s16 = scalar_lea.sflag [#allocation10], 1
    %17 = vsyncpa %s16, 0
    %18 = vsyncpa [#allocation13], 0
    loop: start=0, step=1, limit=4
    $region2: #{loss_header_forward.1} parent=1 // loop_pre_header
      _
    $region3: #{loss_header_forward.1} parent=1 // loop_header
      %s20 = sphi 0, %s24
      %p21 = scmp.ge.s32.totalorder %s20, 4
      %s28 = sphi 0, %s28
      %s30 = sphi 0, %s28
      %s31 = sphi 0, %s30
      %s45 = sphi 0, %s31
      %s49 = sphi 0, %s49
      %s51 = sphi 0, %s49
      %s52 = sphi 0, %s51
      %s66 = sphi 0, %s52
      %s70 = sphi 0, %s70
      %s72 = sphi 0, %s70
      %s73 = sphi 0, %s72
      %s87 = sphi 0, %s73
      %s91 = sphi 0, %s91
      %s93 = sphi 0, %s91
      %s94 = sphi 0, %s93
      %s108 = sphi 0, %s94
      %s114 = sphi 0, %s116
      %s117 = sphi 0, %s114
      %s118 = sphi 0, %s117
      %s134 = sphi 0, %s118
      %s138 = sphi 0, %s138
      %s140 = sphi 0, %s138
      %s141 = sphi 0, %s140
      %s155 = sphi 0, %s141
      %s159 = sphi 0, %s159
      %s161 = sphi 0, %s159
      %s162 = sphi 0, %s161
      %s176 = sphi 0, %s162
      %s180 = sphi 0, %s180
      %s182 = sphi 0, %s180
      %s183 = sphi 0, %s182
      %s197 = sphi 0, %s183
      %s201 = sphi 0, %s201
      %s203 = sphi 0, %s201
      %s204 = sphi 0, %s203
      %s218 = sphi 0, %s204
    $region4: #{loss_header_forward.1} parent=1 // loop_header_branch
      %23 = sbr.rel (%p21) target = $region8
    $region5: #{loss_header_forward.1} parent=1 // loop_body
      %s25 = ssub.s32 %s20, 1
      %s26 = ssub.s32 %s20, 2
      %s27 = sadd.s32 %s20, 1
      %s29 = sadd.s32 %s28, 1
      %p32 = scmp.eq.s32.totalorder %s20, 1
      %p33 = scmp.ne.s32.totalorder %s28, %s30
      %p34 = scmp.eq.s32.totalorder %s20, 0
      %p35 = por %p33, %p34
      %p36 = scmp.ne.s32.totalorder %s28, %s30
      %p37 = scmp.eq.s32.totalorder %s25, 1
      %p38 = por %p36, %p37
      %p39 = scmp.ne.s32.totalorder %s30, %s31
      %p40 = scmp.eq.s32.totalorder %s25, 0
      %p41 = por %p39, %p40
      %p42 = scmp.ne.s32.totalorder %s30, %s31
      %p43 = scmp.eq.s32.totalorder %s26, 1
      %p44 = por %p42, %p43
      %p46 = scmp.ne.s32.totalorder %s31, %s45
      %p47 = scmp.eq.s32.totalorder %s26, 0
      %p48 = por %p46, %p47
      %s50 = sadd.s32 %s49, 1
      %p53 = scmp.eq.s32.totalorder %s20, 1
      %p54 = scmp.ne.s32.totalorder %s49, %s51
      %p55 = scmp.eq.s32.totalorder %s20, 0
      %p56 = por %p54, %p55
      %p57 = scmp.ne.s32.totalorder %s49, %s51
      %p58 = scmp.eq.s32.totalorder %s25, 1
      %p59 = por %p57, %p58
      %p60 = scmp.ne.s32.totalorder %s51, %s52
      %p61 = scmp.eq.s32.totalorder %s25, 0
      %p62 = por %p60, %p61
      %p63 = scmp.ne.s32.totalorder %s51, %s52
      %p64 = scmp.eq.s32.totalorder %s26, 1
      %p65 = por %p63, %p64
      %p67 = scmp.ne.s32.totalorder %s52, %s66
      %p68 = scmp.eq.s32.totalorder %s26, 0
      %p69 = por %p67, %p68
      %s71 = sadd.s32 %s70, 1
      %p74 = scmp.eq.s32.totalorder %s20, 1
      %p75 = scmp.ne.s32.totalorder %s70, %s72
      %p76 = scmp.eq.s32.totalorder %s20, 0
      %p77 = por %p75, %p76
      %p78 = scmp.ne.s32.totalorder %s70, %s72
      %p79 = scmp.eq.s32.totalorder %s25, 1
      %p80 = por %p78, %p79
      %p81 = scmp.ne.s32.totalorder %s72, %s73
      %p82 = scmp.eq.s32.totalorder %s25, 0
      %p83 = por %p81, %p82
      %p84 = scmp.ne.s32.totalorder %s72, %s73
      %p85 = scmp.eq.s32.totalorder %s26, 1
      %p86 = por %p84, %p85
      %p88 = scmp.ne.s32.totalorder %s73, %s87
      %p89 = scmp.eq.s32.totalorder %s26, 0
      %p90 = por %p88, %p89
      %s92 = sadd.s32 %s91, 1
      %p95 = scmp.eq.s32.totalorder %s20, 1
      %p96 = scmp.ne.s32.totalorder %s91, %s93
      %p97 = scmp.eq.s32.totalorder %s20, 0
      %p98 = por %p96, %p97
      %p99 = scmp.ne.s32.totalorder %s91, %s93
      %p100 = scmp.eq.s32.totalorder %s25, 1
      %p101 = por %p99, %p100
      %p102 = scmp.ne.s32.totalorder %s93, %s94
      %p103 = scmp.eq.s32.totalorder %s25, 0
      %p104 = por %p102, %p103
      %p105 = scmp.ne.s32.totalorder %s93, %s94
      %p106 = scmp.eq.s32.totalorder %s26, 1
      %p107 = por %p105, %p106
      %p109 = scmp.ne.s32.totalorder %s94, %s108
      %p110 = scmp.eq.s32.totalorder %s26, 0
      %p111 = por %p109, %p110
      %s112 = ssub.s32 %s20, %s27
      %p113 = scmp.eq.s32.totalorder %s112, 0
      %s115 = sadd.s32 %s114, 1
      %s116 = scalar_select %p113, %s114, %s115
      %p119 = pneg %p113
      %p120 = scmp.eq.s32.totalorder %s20, 1
      %p121 = por %p119, %p120
      %p122 = scmp.ne.s32.totalorder %s114, %s117
      %p123 = scmp.eq.s32.totalorder %s20, 0
      %p124 = por %p122, %p123
      %p125 = scmp.ne.s32.totalorder %s114, %s117
      %p126 = scmp.eq.s32.totalorder %s25, 1
      %p127 = por %p125, %p126
      %p128 = scmp.ne.s32.totalorder %s117, %s118
      %p129 = scmp.eq.s32.totalorder %s25, 0
      %p130 = por %p128, %p129
      %p131 = scmp.ne.s32.totalorder %s117, %s118
      %p132 = scmp.eq.s32.totalorder %s26, 1
      %p133 = por %p131, %p132
      %p135 = scmp.ne.s32.totalorder %s118, %s134
      %p136 = scmp.eq.s32.totalorder %s26, 0
      %p137 = por %p135, %p136
      %s139 = sadd.s32 %s138, 1
      %p142 = scmp.eq.s32.totalorder %s20, 1
      %p143 = scmp.ne.s32.totalorder %s138, %s140
      %p144 = scmp.eq.s32.totalorder %s20, 0
      %p145 = por %p143, %p144
      %p146 = scmp.ne.s32.totalorder %s138, %s140
      %p147 = scmp.eq.s32.totalorder %s25, 1
      %p148 = por %p146, %p147
      %p149 = scmp.ne.s32.totalorder %s140, %s141
      %p150 = scmp.eq.s32.totalorder %s25, 0
      %p151 = por %p149, %p150
      %p152 = scmp.ne.s32.totalorder %s140, %s141
      %p153 = scmp.eq.s32.totalorder %s26, 1
      %p154 = por %p152, %p153
      %p156 = scmp.ne.s32.totalorder %s141, %s155
      %p157 = scmp.eq.s32.totalorder %s26, 0
      %p158 = por %p156, %p157
      %s160 = sadd.s32 %s159, 1
      %p163 = scmp.eq.s32.totalorder %s20, 1
      %p164 = scmp.ne.s32.totalorder %s159, %s161
      %p165 = scmp.eq.s32.totalorder %s20, 0
      %p166 = por %p164, %p165
      %p167 = scmp.ne.s32.totalorder %s159, %s161
      %p168 = scmp.eq.s32.totalorder %s25, 1
      %p169 = por %p167, %p168
      %p170 = scmp.ne.s32.totalorder %s161, %s162
      %p171 = scmp.eq.s32.totalorder %s25, 0
      %p172 = por %p170, %p171
      %p173 = scmp.ne.s32.totalorder %s161, %s162
      %p174 = scmp.eq.s32.totalorder %s26, 1
      %p175 = por %p173, %p174
      %p177 = scmp.ne.s32.totalorder %s162, %s176
      %p178 = scmp.eq.s32.totalorder %s26, 0
      %p179 = por %p177, %p178
      %s181 = sadd.s32 %s180, 1
      %p184 = scmp.eq.s32.totalorder %s20, 1
      %p185 = scmp.ne.s32.totalorder %s180, %s182
      %p186 = scmp.eq.s32.totalorder %s20, 0
      %p187 = por %p185, %p186
      %p188 = scmp.ne.s32.totalorder %s180, %s182
      %p189 = scmp.eq.s32.totalorder %s25, 1
      %p190 = por %p188, %p189
      %p191 = scmp.ne.s32.totalorder %s182, %s183
      %p192 = scmp.eq.s32.totalorder %s25, 0
      %p193 = por %p191, %p192
      %p194 = scmp.ne.s32.totalorder %s182, %s183
      %p195 = scmp.eq.s32.totalorder %s26, 1
      %p196 = por %p194, %p195
      %p198 = scmp.ne.s32.totalorder %s183, %s197
      %p199 = scmp.eq.s32.totalorder %s26, 0
      %p200 = por %p198, %p199
      %s202 = sadd.s32 %s201, 1
      %p205 = scmp.eq.s32.totalorder %s20, 1
      %p206 = scmp.ne.s32.totalorder %s201, %s203
      %p207 = scmp.eq.s32.totalorder %s20, 0
      %p208 = por %p206, %p207
      %p209 = scmp.ne.s32.totalorder %s201, %s203
      %p210 = scmp.eq.s32.totalorder %s25, 1
      %p211 = por %p209, %p210
      %p212 = scmp.ne.s32.totalorder %s203, %s204
      %p213 = scmp.eq.s32.totalorder %s25, 0
      %p214 = por %p212, %p213
      %p215 = scmp.ne.s32.totalorder %s203, %s204
      %p216 = scmp.eq.s32.totalorder %s26, 1
      %p217 = por %p215, %p216
      %p219 = scmp.ne.s32.totalorder %s204, %s218
      %p220 = scmp.eq.s32.totalorder %s26, 0
      %p221 = por %p219, %p220
      %p222 = scmp.le.s32.totalorder 1, %s20
      %p223 = scmp.lt.s32.totalorder %s20, 3
      %p224 = pnand %p222, %p223
      %p225 = pneg %p224
      // Predicated region
      $region9: #{loss_header_forward.1} parent=5 // pred_check
        _
      $region10: #{loss_header_forward.1} parent=5 // pred_check_branch
        %227 = sbr.rel (%p224) target = $region12
      $region11: #{loss_header_forward.1} parent=5 // pred_region
        %s228 = ssub.s32 %s20, 1
        // Predicated region
        $region13: #{loss_header_forward.1} parent=11 // pred_check
          %p229 = pneg %p41
        $region14: #{loss_header_forward.1} parent=11 // pred_check_branch
          %231 = sbr.rel (%p229) target = $region16
        $region15: #{loss_header_forward.1} parent=11 // pred_region
          %s233 = ssub.s32 512, 512
          %234 = vsyncadd [#allocation5], %s233
          %s235 = sshll.u32 [#allocation4], 4
          %s236 = int_to_ptr.vmem [resolvable:$true] %s235
          %241 = dma.hbm_to_vmem [thread:$0]  %s0, 512, %s236, [#allocation5], 256, 256, 16
        $region16: #{loss_header_forward.1} parent=11 // pred_fallthru
          _
        // Predicated region
        $region17: #{loss_header_forward.1} parent=11 // pred_check
          %p242 = pneg %p62
        $region18: #{loss_header_forward.1} parent=11 // pred_check_branch
          %244 = sbr.rel (%p242) target = $region20
        $region19: #{loss_header_forward.1} parent=11 // pred_region
          _
        $region20: #{loss_header_forward.1} parent=11 // pred_fallthru
          _
        // Predicated region
        $region21: #{loss_header_forward.1} parent=11 // pred_check
          %p245 = pneg %p83
        $region22: #{loss_header_forward.1} parent=11 // pred_check_branch
          %247 = sbr.rel (%p245) target = $region24
        $region23: #{loss_header_forward.1} parent=11 // pred_region
          %s249 = ssub.s32 4096, 4096
          %250 = vsyncadd [#allocation7], %s249
          %s251 = sshll.u32 [#allocation6], 4
          %s252 = int_to_ptr.vmem [resolvable:$true] %s251
          %257 = dma.hbm_to_vmem [thread:$0]  %s2, 4096, %s252, [#allocation7], 64, 64, 4
        $region24: #{loss_header_forward.1} parent=11 // pred_fallthru
          _
        // Predicated region
        $region25: #{loss_header_forward.1} parent=11 // pred_check
          %p258 = pneg %p104
        $region26: #{loss_header_forward.1} parent=11 // pred_check_branch
          %260 = sbr.rel (%p258) target = $region28
        $region27: #{loss_header_forward.1} parent=11 // pred_region
          %s262 = ssub.s32 16, 16
          %263 = vsyncadd [#allocation7], %s262
          %s265 = sshll.u32 [#allocation8], 4
          %s266 = int_to_ptr.vmem [resolvable:$true] %s265
          %268 = dma.hbm_to_vmem [thread:$0]  %s3, 16, %s266, [#allocation7]
        $region28: #{loss_header_forward.1} parent=11 // pred_fallthru
          _
        // Predicated region
        $region29: #{loss_header_forward.1} parent=11 // pred_check
          %p269 = pneg %p151
        $region30: #{loss_header_forward.1} parent=11 // pred_check_branch
          %271 = sbr.rel (%p269) target = $region32
        $region31: #{loss_header_forward.1} parent=11 // pred_region
          %s273 = ssub.s32 128, 128
          %274 = vsyncadd [#allocation10], %s273
          %s276 = sshll.u32 [#allocation11], 4
          %s277 = int_to_ptr.vmem [resolvable:$true] %s276
          %279 = dma.hbm_to_vmem [thread:$0]  %s5, 128, %s277, [#allocation10]
        $region32: #{loss_header_forward.1} parent=11 // pred_fallthru
          _
        // Predicated region
        $region33: #{loss_header_forward.1} parent=11 // pred_check
          %p280 = pneg %p172
        $region34: #{loss_header_forward.1} parent=11 // pred_check_branch
          %282 = sbr.rel (%p280) target = $region36
        $region35: #{loss_header_forward.1} parent=11 // pred_region
          _
        $region36: #{loss_header_forward.1} parent=11 // pred_fallthru
          _
        // Predicated region
        $region37: #{loss_header_forward.1} parent=11 // pred_check
          %p283 = pneg %p193
        $region38: #{loss_header_forward.1} parent=11 // pred_check_branch
          %285 = sbr.rel (%p283) target = $region40
        $region39: #{loss_header_forward.1} parent=11 // pred_region
          %s287 = ssub.s32 16, 16
          %288 = vsyncadd [#allocation13], %s287
          %s290 = sshll.u32 [#allocation12], 4
          %s291 = int_to_ptr.vmem [resolvable:$true] %s290
          %293 = dma.hbm_to_vmem [thread:$0]  %s7, 16, %s291, [#allocation13]
        $region40: #{loss_header_forward.1} parent=11 // pred_fallthru
          _
      $region12: #{loss_header_forward.1} parent=5 // pred_fallthru
        _
      %p294 = scmp.lt.s32.totalorder %s20, 2
      // Predicated region
      $region41: #{loss_header_forward.1} parent=5 // pred_check
        %p295 = pneg %p294
      $region42: #{loss_header_forward.1} parent=5 // pred_check_branch
        %297 = sbr.rel (%p295) target = $region44
      $region43: #{loss_header_forward.1} parent=5 // pred_region
        // Predicated region
        $region45: #{loss_header_forward.1} parent=43 // pred_check
          %p298 = pneg %p124
        $region46: #{loss_header_forward.1} parent=43 // pred_check_branch
          %300 = sbr.rel (%p298) target = $region48
        $region47: #{loss_header_forward.1} parent=43 // pred_region
          %s301 = sand.u32 %s20, 1
          %s302 = scalar_lea.sflag [#allocation10], %s301
          %s303 = sand.u32 %s114, 1
          %s304 = smul.addr %s303, 4096
          %s305 = scalar_lea.vmem [#allocation9], %s304
          %s306 = smul.u32 128, %s20
          %s308 = ssub.s32 65536, 65536
          %309 = vsyncadd %s302, %s308
          %s310 = smul.addr %s306, 8
          %s311 = smul.addr %s310, 64
          %s312 = scalar_lea.hbm %s4, %s311
          %s313 = sshll.u32 %s305, 4
          %s314 = int_to_ptr.vmem [resolvable:$true] %s313
          %319 = dma.hbm_to_vmem [thread:$0]  %s312, 65536, %s314, %s302, 512, 512, 32
        $region48: #{loss_header_forward.1} parent=43 // pred_fallthru
          _
      $region44: #{loss_header_forward.1} parent=5 // pred_fallthru
        _
      %p320 = scmp.le.s32.totalorder 1, %s20
      %p321 = scmp.lt.s32.totalorder %s20, 3
      %p322 = pnand %p320, %p321
      %p323 = pneg %p322
      // Predicated region
      $region49: #{loss_header_forward.1} parent=5 // pred_check
        _
      $region50: #{loss_header_forward.1} parent=5 // pred_check_branch
        %325 = sbr.rel (%p322) target = $region52
      $region51: #{loss_header_forward.1} parent=5 // pred_region
        %s326 = ssub.s32 %s20, 1
        // Predicated region
        $region53: #{loss_header_forward.1} parent=51 // pred_check
          %p327 = pneg %p41
        $region54: #{loss_header_forward.1} parent=51 // pred_check_branch
          %329 = sbr.rel (%p327) target = $region56
        $region55: #{loss_header_forward.1} parent=51 // pred_region
          %330 = dma.done [#allocation5], 512
        $region56: #{loss_header_forward.1} parent=51 // pred_fallthru
          _
        // Predicated region
        $region57: #{loss_header_forward.1} parent=51 // pred_check
          %p331 = pneg %p83
        $region58: #{loss_header_forward.1} parent=51 // pred_check_branch
          %333 = sbr.rel (%p331) target = $region60
        $region59: #{loss_header_forward.1} parent=51 // pred_region
          %334 = dma.done [#allocation7], 4096
        $region60: #{loss_header_forward.1} parent=51 // pred_fallthru
          _
        // Predicated region
        $region61: #{loss_header_forward.1} parent=51 // pred_check
          %p335 = pneg %p104
        $region62: #{loss_header_forward.1} parent=51 // pred_check_branch
          %337 = sbr.rel (%p335) target = $region64
        $region63: #{loss_header_forward.1} parent=51 // pred_region
          %338 = dma.done [#allocation7], 16
        $region64: #{loss_header_forward.1} parent=51 // pred_fallthru
          _
        %s339 = sand.u32 %s25, 1
        %s340 = scalar_lea.sflag [#allocation10], %s339
        %s341 = sand.u32 %s117, 1
        %s342 = smul.addr %s341, 4096
        %s343 = scalar_lea.vmem [#allocation9], %s342
        // Predicated region
        $region65: #{loss_header_forward.1} parent=51 // pred_check
          %p344 = pneg %p130
        $region66: #{loss_header_forward.1} parent=51 // pred_check_branch
          %346 = sbr.rel (%p344) target = $region68
        $region67: #{loss_header_forward.1} parent=51 // pred_region
          %347 = dma.done %s340, 65536
        $region68: #{loss_header_forward.1} parent=51 // pred_fallthru
          _
        // Predicated region
        $region69: #{loss_header_forward.1} parent=51 // pred_check
          %p348 = pneg %p151
        $region70: #{loss_header_forward.1} parent=51 // pred_check_branch
          %350 = sbr.rel (%p348) target = $region72
        $region71: #{loss_header_forward.1} parent=51 // pred_region
          %351 = dma.done [#allocation10], 128
        $region72: #{loss_header_forward.1} parent=51 // pred_fallthru
          _
        // Predicated region
        $region73: #{loss_header_forward.1} parent=51 // pred_check
          %p352 = pneg %p193
        $region74: #{loss_header_forward.1} parent=51 // pred_check_branch
          %354 = sbr.rel (%p352) target = $region76
        $region75: #{loss_header_forward.1} parent=51 // pred_region
          %355 = dma.done [#allocation13], 16
        $region76: #{loss_header_forward.1} parent=51 // pred_fallthru
          _
        %p356 = pneg %p41
        %p357 = pneg %p38
        %p358 = pneg %p62
        %p359 = pneg %p59
        %p360 = pneg %p83
        %p361 = pneg %p80
        %p362 = pneg %p104
        %p363 = pneg %p101
        %s364 = sand.u32 %s25, 1
        %s365 = scalar_lea.sflag [#allocation10], %s364
        %s366 = sand.u32 %s117, 1
        %s367 = smul.addr %s366, 4096
        %s368 = scalar_lea.vmem [#allocation9], %s367
        %p369 = pneg %p130
        %p370 = pneg %p127
        %p371 = pneg %p151
        %p372 = pneg %p148
        %p373 = pneg %p172
        %p374 = pneg %p169
        %p375 = pneg %p193
        %p376 = pneg %p190
        %p377 = pneg %p214
        %p378 = pneg %p211
        %s379 = smul.u32 128, %s25
        %p381 = scmp.eq.s32.totalorder %s25, 0
        // Predicated region
        $region77: #{loss_header_forward.1} parent=51 // pred_check
          %p382 = pneg %p381
        $region78: #{loss_header_forward.1} parent=51 // pred_check_branch
          %384 = sbr.rel (%p382) target = $region80
        $region79: #{loss_header_forward.1} parent=51 // pred_region
          %385 = vst [vmem:[#allocation3] sm:$0xff] 0.0
          %386 = vst [vmem:[#allocation3 + $0x8] sm:$0xff] 0.0
          %v387 = vld [vmem:[#allocation4] sm:$0xff]
          %v388 = vld [vmem:[#allocation4 + $0x8] sm:$0xff]
          %v389 = vld [vmem:[#allocation4 + $0x10] sm:$0xff]
          %v390 = vld [vmem:[#allocation4 + $0x18] sm:$0xff]
          %v391 = vld [vmem:[%s1] sm:$0xff]
          %v392 = vld [vmem:[%s1 + $0x8] sm:$0xff]
          %v393 = vld [vmem:[%s1 + $0x10] sm:$0xff]
          %v394 = vld [vmem:[%s1 + $0x18] sm:$0xff]
          %v395 = vld [vmem:[%s1 + $0x20] sm:$0xff]
          %v396 = vld [vmem:[%s1 + $0x28] sm:$0xff]
          %v397 = vld [vmem:[%s1 + $0x30] sm:$0xff]
          %v398 = vld [vmem:[%s1 + $0x38] sm:$0xff]
          %v399 = vld [vmem:[%s1 + $0x40] sm:$0xff]
          %v400 = vld [vmem:[%s1 + $0x48] sm:$0xff]
          %v401 = vld [vmem:[%s1 + $0x50] sm:$0xff]
          %v402 = vld [vmem:[%s1 + $0x58] sm:$0xff]
          %v403 = vld [vmem:[%s1 + $0x60] sm:$0xff]
          %v404 = vld [vmem:[%s1 + $0x68] sm:$0xff]
          %v405 = vld [vmem:[%s1 + $0x70] sm:$0xff]
          %v406 = vld [vmem:[%s1 + $0x78] sm:$0xff]
          %v407 = vld [vmem:[%s1 + $0x80] sm:$0xff]
          %v408 = vld [vmem:[%s1 + $0x88] sm:$0xff]
          %v409 = vld [vmem:[%s1 + $0x90] sm:$0xff]
          %v410 = vld [vmem:[%s1 + $0x98] sm:$0xff]
          %v411 = vld [vmem:[%s1 + $0xa0] sm:$0xff]
          %v412 = vld [vmem:[%s1 + $0xa8] sm:$0xff]
          %v413 = vld [vmem:[%s1 + $0xb0] sm:$0xff]
          %v414 = vld [vmem:[%s1 + $0xb8] sm:$0xff]
          %v415 = vld [vmem:[%s1 + $0xc0] sm:$0xff]
          %v416 = vld [vmem:[%s1 + $0xc8] sm:$0xff]
          %v417 = vld [vmem:[%s1 + $0xd0] sm:$0xff]
          %v418 = vld [vmem:[%s1 + $0xd8] sm:$0xff]
          %v419 = vld [vmem:[%s1 + $0xe0] sm:$0xff]
          %v420 = vld [vmem:[%s1 + $0xe8] sm:$0xff]
          %v421 = vld [vmem:[%s1 + $0xf0] sm:$0xff]
          %v422 = vld [vmem:[%s1 + $0xf8] sm:$0xff]
          %v423 = vld [vmem:[%s1 + $0x100] sm:$0xff]
          %v424 = vld [vmem:[%s1 + $0x108] sm:$0xff]
          %v425 = vld [vmem:[%s1 + $0x110] sm:$0xff]
          %v426 = vld [vmem:[%s1 + $0x118] sm:$0xff]
          %v427 = vld [vmem:[%s1 + $0x120] sm:$0xff]
          %v428 = vld [vmem:[%s1 + $0x128] sm:$0xff]
          %v429 = vld [vmem:[%s1 + $0x130] sm:$0xff]
          %v430 = vld [vmem:[%s1 + $0x138] sm:$0xff]
          %v431 = vld [vmem:[%s1 + $0x140] sm:$0xff]
          %v432 = vld [vmem:[%s1 + $0x148] sm:$0xff]
          %v433 = vld [vmem:[%s1 + $0x150] sm:$0xff]
          %v434 = vld [vmem:[%s1 + $0x158] sm:$0xff]
          %v435 = vld [vmem:[%s1 + $0x160] sm:$0xff]
          %v436 = vld [vmem:[%s1 + $0x168] sm:$0xff]
          %v437 = vld [vmem:[%s1 + $0x170] sm:$0xff]
          %v438 = vld [vmem:[%s1 + $0x178] sm:$0xff]
          %v439 = vld [vmem:[%s1 + $0x180] sm:$0xff]
          %v440 = vld [vmem:[%s1 + $0x188] sm:$0xff]
          %v441 = vld [vmem:[%s1 + $0x190] sm:$0xff]
          %v442 = vld [vmem:[%s1 + $0x198] sm:$0xff]
          %v443 = vld [vmem:[%s1 + $0x1a0] sm:$0xff]
          %v444 = vld [vmem:[%s1 + $0x1a8] sm:$0xff]
          %v445 = vld [vmem:[%s1 + $0x1b0] sm:$0xff]
          %v446 = vld [vmem:[%s1 + $0x1b8] sm:$0xff]
          %v447 = vld [vmem:[%s1 + $0x1c0] sm:$0xff]
          %v448 = vld [vmem:[%s1 + $0x1c8] sm:$0xff]
          %v449 = vld [vmem:[%s1 + $0x1d0] sm:$0xff]
          %v450 = vld [vmem:[%s1 + $0x1d8] sm:$0xff]
          %v451 = vld [vmem:[%s1 + $0x1e0] sm:$0xff]
          %v452 = vld [vmem:[%s1 + $0x1e8] sm:$0xff]
          %v453 = vld [vmem:[%s1 + $0x1f0] sm:$0xff]
          %v454 = vld [vmem:[%s1 + $0x1f8] sm:$0xff]
          %v455 = vld [vmem:[%s1 + $0x200] sm:$0xff]
          %v456 = vld [vmem:[%s1 + $0x208] sm:$0xff]
          %v457 = vld [vmem:[%s1 + $0x210] sm:$0xff]
          %v458 = vld [vmem:[%s1 + $0x218] sm:$0xff]
          %v459 = vld [vmem:[%s1 + $0x220] sm:$0xff]
          %v460 = vld [vmem:[%s1 + $0x228] sm:$0xff]
          %v461 = vld [vmem:[%s1 + $0x230] sm:$0xff]
          %v462 = vld [vmem:[%s1 + $0x238] sm:$0xff]
          %v463 = vld [vmem:[%s1 + $0x240] sm:$0xff]
          %v464 = vld [vmem:[%s1 + $0x248] sm:$0xff]
          %v465 = vld [vmem:[%s1 + $0x250] sm:$0xff]
          %v466 = vld [vmem:[%s1 + $0x258] sm:$0xff]
          %v467 = vld [vmem:[%s1 + $0x260] sm:$0xff]
          %v468 = vld [vmem:[%s1 + $0x268] sm:$0xff]
          %v469 = vld [vmem:[%s1 + $0x270] sm:$0xff]
          %v470 = vld [vmem:[%s1 + $0x278] sm:$0xff]
          %v471 = vld [vmem:[%s1 + $0x280] sm:$0xff]
          %v472 = vld [vmem:[%s1 + $0x288] sm:$0xff]
          %v473 = vld [vmem:[%s1 + $0x290] sm:$0xff]
          %v474 = vld [vmem:[%s1 + $0x298] sm:$0xff]
          %v475 = vld [vmem:[%s1 + $0x2a0] sm:$0xff]
          %v476 = vld [vmem:[%s1 + $0x2a8] sm:$0xff]
          %v477 = vld [vmem:[%s1 + $0x2b0] sm:$0xff]
          %v478 = vld [vmem:[%s1 + $0x2b8] sm:$0xff]
          %v479 = vld [vmem:[%s1 + $0x2c0] sm:$0xff]
          %v480 = vld [vmem:[%s1 + $0x2c8] sm:$0xff]
          %v481 = vld [vmem:[%s1 + $0x2d0] sm:$0xff]
          %v482 = vld [vmem:[%s1 + $0x2d8] sm:$0xff]
          %v483 = vld [vmem:[%s1 + $0x2e0] sm:$0xff]
          %v484 = vld [vmem:[%s1 + $0x2e8] sm:$0xff]
          %v485 = vld [vmem:[%s1 + $0x2f0] sm:$0xff]
          %v486 = vld [vmem:[%s1 + $0x2f8] sm:$0xff]
          %v487 = vld [vmem:[%s1 + $0x300] sm:$0xff]
          %v488 = vld [vmem:[%s1 + $0x308] sm:$0xff]
          %v489 = vld [vmem:[%s1 + $0x310] sm:$0xff]
          %v490 = vld [vmem:[%s1 + $0x318] sm:$0xff]
          %v491 = vld [vmem:[%s1 + $0x320] sm:$0xff]
          %v492 = vld [vmem:[%s1 + $0x328] sm:$0xff]
          %v493 = vld [vmem:[%s1 + $0x330] sm:$0xff]
          %v494 = vld [vmem:[%s1 + $0x338] sm:$0xff]
          %v495 = vld [vmem:[%s1 + $0x340] sm:$0xff]
          %v496 = vld [vmem:[%s1 + $0x348] sm:$0xff]
          %v497 = vld [vmem:[%s1 + $0x350] sm:$0xff]
          %v498 = vld [vmem:[%s1 + $0x358] sm:$0xff]
          %v499 = vld [vmem:[%s1 + $0x360] sm:$0xff]
          %v500 = vld [vmem:[%s1 + $0x368] sm:$0xff]
          %v501 = vld [vmem:[%s1 + $0x370] sm:$0xff]
          %v502 = vld [vmem:[%s1 + $0x378] sm:$0xff]
          %v503 = vld [vmem:[%s1 + $0x380] sm:$0xff]
          %v504 = vld [vmem:[%s1 + $0x388] sm:$0xff]
          %v505 = vld [vmem:[%s1 + $0x390] sm:$0xff]
          %v506 = vld [vmem:[%s1 + $0x398] sm:$0xff]
          %v507 = vld [vmem:[%s1 + $0x3a0] sm:$0xff]
          %v508 = vld [vmem:[%s1 + $0x3a8] sm:$0xff]
          %v509 = vld [vmem:[%s1 + $0x3b0] sm:$0xff]
          %v510 = vld [vmem:[%s1 + $0x3b8] sm:$0xff]
          %v511 = vld [vmem:[%s1 + $0x3c0] sm:$0xff]
          %v512 = vld [vmem:[%s1 + $0x3c8] sm:$0xff]
          %v513 = vld [vmem:[%s1 + $0x3d0] sm:$0xff]
          %v514 = vld [vmem:[%s1 + $0x3d8] sm:$0xff]
          %v515 = vld [vmem:[%s1 + $0x3e0] sm:$0xff]
          %v516 = vld [vmem:[%s1 + $0x3e8] sm:$0xff]
          %v517 = vld [vmem:[%s1 + $0x3f0] sm:$0xff]
          %v518 = vld [vmem:[%s1 + $0x3f8] sm:$0xff]
          %vm519 = vcmask 556032
          %v521 = vsel %vm519, %v388, 0
          %v524 = vsel %vm519, %v390, 0
          %v527 = vsel %vm519, %v392, 0
          %v530 = vsel %vm519, %v394, 0
          %v533 = vsel %vm519, %v396, 0
          %v536 = vsel %vm519, %v398, 0
          %v539 = vsel %vm519, %v400, 0
          %v542 = vsel %vm519, %v402, 0
          %v545 = vsel %vm519, %v404, 0
          %v548 = vsel %vm519, %v406, 0
          %v551 = vsel %vm519, %v408, 0
          %v554 = vsel %vm519, %v410, 0
          %v557 = vsel %vm519, %v412, 0
          %v560 = vsel %vm519, %v414, 0
          %v563 = vsel %vm519, %v416, 0
          %v566 = vsel %vm519, %v418, 0
          %v569 = vsel %vm519, %v420, 0
          %v572 = vsel %vm519, %v422, 0
          %v575 = vsel %vm519, %v424, 0
          %v578 = vsel %vm519, %v426, 0
          %v581 = vsel %vm519, %v428, 0
          %v584 = vsel %vm519, %v430, 0
          %v587 = vsel %vm519, %v432, 0
          %v590 = vsel %vm519, %v434, 0
          %v593 = vsel %vm519, %v436, 0
          %v596 = vsel %vm519, %v438, 0
          %v599 = vsel %vm519, %v440, 0
          %v602 = vsel %vm519, %v442, 0
          %v605 = vsel %vm519, %v444, 0
          %v608 = vsel %vm519, %v446, 0
          %v611 = vsel %vm519, %v448, 0
          %v614 = vsel %vm519, %v450, 0
          %v617 = vsel %vm519, %v452, 0
          %v620 = vsel %vm519, %v454, 0
          %v623 = vsel %vm519, %v456, 0
          %v626 = vsel %vm519, %v458, 0
          %v629 = vsel %vm519, %v460, 0
          %v632 = vsel %vm519, %v462, 0
          %v635 = vsel %vm519, %v464, 0
          %v638 = vsel %vm519, %v466, 0
          %v641 = vsel %vm519, %v468, 0
          %v644 = vsel %vm519, %v470, 0
          %v647 = vsel %vm519, %v472, 0
          %v650 = vsel %vm519, %v474, 0
          %v653 = vsel %vm519, %v476, 0
          %v656 = vsel %vm519, %v478, 0
          %v659 = vsel %vm519, %v480, 0
          %v662 = vsel %vm519, %v482, 0
          %v665 = vsel %vm519, %v484, 0
          %v668 = vsel %vm519, %v486, 0
          %v671 = vsel %vm519, %v488, 0
          %v674 = vsel %vm519, %v490, 0
          %v677 = vsel %vm519, %v492, 0
          %v680 = vsel %vm519, %v494, 0
          %v683 = vsel %vm519, %v496, 0
          %v686 = vsel %vm519, %v498, 0
          %v689 = vsel %vm519, %v500, 0
          %v692 = vsel %vm519, %v502, 0
          %v695 = vsel %vm519, %v504, 0
          %v698 = vsel %vm519, %v506, 0
          %v701 = vsel %vm519, %v508, 0
          %v704 = vsel %vm519, %v510, 0
          %v707 = vsel %vm519, %v512, 0
          %v710 = vsel %vm519, %v514, 0
          %v713 = vsel %vm519, %v516, 0
          %v716 = vsel %vm519, %v518, 0
          %718 = vmatprep.subr.mxu0 %v527
          %719 = vmatpush1.xpose.msra.mxu0 %v391
          %720 = vmatprep.subr.mxu0 %v530
          %721 = vmatpush1.xpose.msra.mxu0 %v393
          %722 = vmatprep.subr.mxu0 %v533
          %723 = vmatpush1.xpose.msra.mxu0 %v395
          %724 = vmatprep.subr.mxu0 %v536
          %725 = vmatpush1.xpose.msra.mxu0 %v397
          %726 = vmatprep.subr.mxu0 %v539
          %727 = vmatpush1.xpose.msra.mxu0 %v399
          %728 = vmatprep.subr.mxu0 %v542
          %729 = vmatpush1.xpose.msra.mxu0 %v401
          %730 = vmatprep.subr.mxu0 %v545
          %731 = vmatpush1.xpose.msra.mxu0 %v403
          %732 = vmatprep.subr.mxu0 %v548
          %733 = vmatpush1.xpose.msra.mxu0 %v405
          %734 = vmatprep.subr.mxu0 %v551
          %735 = vmatpush1.xpose.msra.mxu0 %v407
          %736 = vmatprep.subr.mxu0 %v554
          %737 = vmatpush1.xpose.msra.mxu0 %v409
          %738 = vmatprep.subr.mxu0 %v557
          %739 = vmatpush1.xpose.msra.mxu0 %v411
          %740 = vmatprep.subr.mxu0 %v560
          %741 = vmatpush1.xpose.msra.mxu0 %v413
          %742 = vmatprep.subr.mxu0 %v563
          %743 = vmatpush1.xpose.msra.mxu0 %v415
          %744 = vmatprep.subr.mxu0 %v566
          %745 = vmatpush1.xpose.msra.mxu0 %v417
          %746 = vmatprep.subr.mxu0 %v569
          %747 = vmatpush1.xpose.msra.mxu0 %v419
          %748 = vmatprep.subr.mxu0 %v572
          %749 = vmatpush1.xpose.msra.mxu0 %v421
          %750 = vmatprep.subr.mxu0 %v575
          %751 = vmatpush1.xpose.msra.mxu0 %v423
          %752 = vmatprep.subr.mxu0 %v578
          %753 = vmatpush1.xpose.msra.mxu0 %v425
          %754 = vmatprep.subr.mxu0 %v581
          %755 = vmatpush1.xpose.msra.mxu0 %v427
          %756 = vmatprep.subr.mxu0 %v584
          %757 = vmatpush1.xpose.msra.mxu0 %v429
          %758 = vmatprep.subr.mxu0 %v587
          %759 = vmatpush1.xpose.msra.mxu0 %v431
          %760 = vmatprep.subr.mxu0 %v590
          %761 = vmatpush1.xpose.msra.mxu0 %v433
          %762 = vmatprep.subr.mxu0 %v593
          %763 = vmatpush1.xpose.msra.mxu0 %v435
          %764 = vmatprep.subr.mxu0 %v596
          %765 = vmatpush1.xpose.msra.mxu0 %v437
          %766 = vmatprep.subr.mxu0 %v599
          %767 = vmatpush1.xpose.msra.mxu0 %v439
          %768 = vmatprep.subr.mxu0 %v602
          %769 = vmatpush1.xpose.msra.mxu0 %v441
          %770 = vmatprep.subr.mxu0 %v605
          %771 = vmatpush1.xpose.msra.mxu0 %v443
          %772 = vmatprep.subr.mxu0 %v608
          %773 = vmatpush1.xpose.msra.mxu0 %v445
          %774 = vmatprep.subr.mxu0 %v611
          %775 = vmatpush1.xpose.msra.mxu0 %v447
          %776 = vmatprep.subr.mxu0 %v614
          %777 = vmatpush1.xpose.msra.mxu0 %v449
          %778 = vmatprep.subr.mxu0 %v617
          %779 = vmatpush1.xpose.msra.mxu0 %v451
          %780 = vmatprep.subr.mxu0 %v620
          %781 = vmatpush1.xpose.msra.mxu0 %v453
          %782 = vmatprep.mubr.f32.mxu0 %v521
          %783 = vmatmul.mubr.f32.gmra.mrb[0].mxu0 %v387
          %v784 = vpop.f32.mrb[0].mxu0
          %v785 = vadd.f32 0.0, %v784
          %v786 = vpop.f32.mrb[0].mxu0
          %v787 = vadd.f32 0.0, %v786
          %788 = vmatprep.mubr.f32.mxu0 %v524
          %789 = vmatmul.mubr.f32.gmra.mrb[0].mxu0 %v389
          %v790 = vpop.f32.mrb[0].mxu0
          %v791 = vadd.f32 0.0, %v790
          %v792 = vpop.f32.mrb[0].mxu0
          %v793 = vadd.f32 0.0, %v792
          %794 = vdwg.mxu0
          %795 = vmatprep.subr.mxu0 %v623
          %796 = vmatpush1.xpose.msra.mxu0 %v455
          %797 = vmatprep.subr.mxu0 %v626
          %798 = vmatpush1.xpose.msra.mxu0 %v457
          %799 = vmatprep.subr.mxu0 %v629
          %800 = vmatpush1.xpose.msra.mxu0 %v459
          %801 = vmatprep.subr.mxu0 %v632
          %802 = vmatpush1.xpose.msra.mxu0 %v461
          %803 = vmatprep.subr.mxu0 %v635
          %804 = vmatpush1.xpose.msra.mxu0 %v463
          %805 = vmatprep.subr.mxu0 %v638
          %806 = vmatpush1.xpose.msra.mxu0 %v465
          %807 = vmatprep.subr.mxu0 %v641
          %808 = vmatpush1.xpose.msra.mxu0 %v467
          %809 = vmatprep.subr.mxu0 %v644
          %810 = vmatpush1.xpose.msra.mxu0 %v469
          %811 = vmatprep.subr.mxu0 %v647
          %812 = vmatpush1.xpose.msra.mxu0 %v471
          %813 = vmatprep.subr.mxu0 %v650
          %814 = vmatpush1.xpose.msra.mxu0 %v473
          %815 = vmatprep.subr.mxu0 %v653
          %816 = vmatpush1.xpose.msra.mxu0 %v475
          %817 = vmatprep.subr.mxu0 %v656
          %818 = vmatpush1.xpose.msra.mxu0 %v477
          %819 = vmatprep.subr.mxu0 %v659
          %820 = vmatpush1.xpose.msra.mxu0 %v479
          %821 = vmatprep.subr.mxu0 %v662
          %822 = vmatpush1.xpose.msra.mxu0 %v481
          %823 = vmatprep.subr.mxu0 %v665
          %824 = vmatpush1.xpose.msra.mxu0 %v483
          %825 = vmatprep.subr.mxu0 %v668
          %826 = vmatpush1.xpose.msra.mxu0 %v485
          %827 = vmatprep.subr.mxu0 %v671
          %828 = vmatpush1.xpose.msra.mxu0 %v487
          %829 = vmatprep.subr.mxu0 %v674
          %830 = vmatpush1.xpose.msra.mxu0 %v489
          %831 = vmatprep.subr.mxu0 %v677
          %832 = vmatpush1.xpose.msra.mxu0 %v491
          %833 = vmatprep.subr.mxu0 %v680
          %834 = vmatpush1.xpose.msra.mxu0 %v493
          %835 = vmatprep.subr.mxu0 %v683
          %836 = vmatpush1.xpose.msra.mxu0 %v495
          %837 = vmatprep.subr.mxu0 %v686
          %838 = vmatpush1.xpose.msra.mxu0 %v497
          %839 = vmatprep.subr.mxu0 %v689
          %840 = vmatpush1.xpose.msra.mxu0 %v499
          %841 = vmatprep.subr.mxu0 %v692
          %842 = vmatpush1.xpose.msra.mxu0 %v501
          %843 = vmatprep.subr.mxu0 %v695
          %844 = vmatpush1.xpose.msra.mxu0 %v503
          %845 = vmatprep.subr.mxu0 %v698
          %846 = vmatpush1.xpose.msra.mxu0 %v505
          %847 = vmatprep.subr.mxu0 %v701
          %848 = vmatpush1.xpose.msra.mxu0 %v507
          %849 = vmatprep.subr.mxu0 %v704
          %850 = vmatpush1.xpose.msra.mxu0 %v509
          %851 = vmatprep.subr.mxu0 %v707
          %852 = vmatpush1.xpose.msra.mxu0 %v511
          %853 = vmatprep.subr.mxu0 %v710
          %854 = vmatpush1.xpose.msra.mxu0 %v513
          %855 = vmatprep.subr.mxu0 %v713
          %856 = vmatpush1.xpose.msra.mxu0 %v515
          %857 = vmatprep.subr.mxu0 %v716
          %858 = vmatpush1.xpose.msra.mxu0 %v517
          %859 = vmatprep.mubr.f32.mxu0 %v521
          %860 = vmatmul.mubr.f32.gmra.mrb[0].mxu0 %v387
          %v861 = vpop.f32.mrb[0].mxu0
          %v862 = vadd.f32 0.0, %v861
          %v863 = vpop.f32.mrb[0].mxu0
          %v864 = vadd.f32 0.0, %v863
          %865 = vmatprep.mubr.f32.mxu0 %v524
          %866 = vmatmul.mubr.f32.gmra.mrb[0].mxu0 %v389
          %v867 = vpop.f32.mrb[0].mxu0
          %v868 = vadd.f32 0.0, %v867
          %v869 = vpop.f32.mrb[0].mxu0
          %v870 = vadd.f32 0.0, %v869
          %871 = vdwg.mxu0
          %v872 = vpack.c.bf16 %v791, %v785
          %v873 = vpack.c.bf16 %v793, %v787
          %v874 = vpack.c.bf16 %v868, %v862
          %v875 = vpack.c.bf16 %v870, %v864
          %v876 = vld [vmem:[#allocation6] sm:$0xf]
          %v877 = vld [vmem:[#allocation6 + $0x4] sm:$0xf]
          %v878 = vld [vmem:[#allocation6 + $0x8] sm:$0xf]
          %v879 = vld [vmem:[#allocation6 + $0xc] sm:$0xf]
          %v880 = vld [vmem:[#allocation6 + $0x10] sm:$0xf]
          %v881 = vld [vmem:[#allocation6 + $0x14] sm:$0xf]
          %v882 = vld [vmem:[#allocation6 + $0x18] sm:$0xf]
          %v883 = vld [vmem:[#allocation6 + $0x1c] sm:$0xf]
          %v884 = vld [vmem:[#allocation6 + $0x20] sm:$0xf]
          %v885 = vld [vmem:[#allocation6 + $0x24] sm:$0xf]
          %v886 = vld [vmem:[#allocation6 + $0x28] sm:$0xf]
          %v887 = vld [vmem:[#allocation6 + $0x2c] sm:$0xf]
          %v888 = vld [vmem:[#allocation6 + $0x30] sm:$0xf]
          %v889 = vld [vmem:[#allocation6 + $0x34] sm:$0xf]
          %v890 = vld [vmem:[#allocation6 + $0x38] sm:$0xf]
          %v891 = vld [vmem:[#allocation6 + $0x3c] sm:$0xf]
          %v892 = vld [vmem:[#allocation6 + $0x40] sm:$0xf]
          %v893 = vld [vmem:[#allocation6 + $0x44] sm:$0xf]
          %v894 = vld [vmem:[#allocation6 + $0x48] sm:$0xf]
          %v895 = vld [vmem:[#allocation6 + $0x4c] sm:$0xf]
          %v896 = vld [vmem:[#allocation6 + $0x50] sm:$0xf]
          %v897 = vld [vmem:[#allocation6 + $0x54] sm:$0xf]
          %v898 = vld [vmem:[#allocation6 + $0x58] sm:$0xf]
          %v899 = vld [vmem:[#allocation6 + $0x5c] sm:$0xf]
          %v900 = vld [vmem:[#allocation6 + $0x60] sm:$0xf]
          %v901 = vld [vmem:[#allocation6 + $0x64] sm:$0xf]
          %v902 = vld [vmem:[#allocation6 + $0x68] sm:$0xf]
          %v903 = vld [vmem:[#allocation6 + $0x6c] sm:$0xf]
          %v904 = vld [vmem:[#allocation6 + $0x70] sm:$0xf]
          %v905 = vld [vmem:[#allocation6 + $0x74] sm:$0xf]
          %v906 = vld [vmem:[#allocation6 + $0x78] sm:$0xf]
          %v907 = vld [vmem:[#allocation6 + $0x7c] sm:$0xf]
          %v908 = vld [vmem:[#allocation6 + $0x80] sm:$0xf]
          %v909 = vld [vmem:[#allocation6 + $0x84] sm:$0xf]
          %v910 = vld [vmem:[#allocation6 + $0x88] sm:$0xf]
          %v911 = vld [vmem:[#allocation6 + $0x8c] sm:$0xf]
          %v912 = vld [vmem:[#allocation6 + $0x90] sm:$0xf]
          %v913 = vld [vmem:[#allocation6 + $0x94] sm:$0xf]
          %v914 = vld [vmem:[#allocation6 + $0x98] sm:$0xf]
          %v915 = vld [vmem:[#allocation6 + $0x9c] sm:$0xf]
          %v916 = vld [vmem:[#allocation6 + $0xa0] sm:$0xf]
          %v917 = vld [vmem:[#allocation6 + $0xa4] sm:$0xf]
          %v918 = vld [vmem:[#allocation6 + $0xa8] sm:$0xf]
          %v919 = vld [vmem:[#allocation6 + $0xac] sm:$0xf]
          %v920 = vld [vmem:[#allocation6 + $0xb0] sm:$0xf]
          %v921 = vld [vmem:[#allocation6 + $0xb4] sm:$0xf]
          %v922 = vld [vmem:[#allocation6 + $0xb8] sm:$0xf]
          %v923 = vld [vmem:[#allocation6 + $0xbc] sm:$0xf]
          %v924 = vld [vmem:[#allocation6 + $0xc0] sm:$0xf]
          %v925 = vld [vmem:[#allocation6 + $0xc4] sm:$0xf]
          %v926 = vld [vmem:[#allocation6 + $0xc8] sm:$0xf]
          %v927 = vld [vmem:[#allocation6 + $0xcc] sm:$0xf]
          %v928 = vld [vmem:[#allocation6 + $0xd0] sm:$0xf]
          %v929 = vld [vmem:[#allocation6 + $0xd4] sm:$0xf]
          %v930 = vld [vmem:[#allocation6 + $0xd8] sm:$0xf]
          %v931 = vld [vmem:[#allocation6 + $0xdc] sm:$0xf]
          %v932 = vld [vmem:[#allocation6 + $0xe0] sm:$0xf]
          %v933 = vld [vmem:[#allocation6 + $0xe4] sm:$0xf]
          %v934 = vld [vmem:[#allocation6 + $0xe8] sm:$0xf]
          %v935 = vld [vmem:[#allocation6 + $0xec] sm:$0xf]
          %v936 = vld [vmem:[#allocation6 + $0xf0] sm:$0xf]
          %v937 = vld [vmem:[#allocation6 + $0xf4] sm:$0xf]
          %v938 = vld [vmem:[#allocation6 + $0xf8] sm:$0xf]
          %v939 = vld [vmem:[#allocation6 + $0xfc] sm:$0xf]
          %v940 = vld [vmem:[#allocation8] sm:$0x1]
          %v942 = vlaneseq
          %v943 = vshrl.u32 %v942, 7
          %v944 = vsub.s32 0, %v943
          %v945 = vrot.slane %v940, %v944
          %v1011 = vunpack.c.l.b16 %v876
          %v1012 = vunpack.c.l.b16 %v877
          %v1013 = vunpack.c.l.b16 %v878
          %v1014 = vunpack.c.l.b16 %v879
          %v1015 = vunpack.c.l.b16 %v880
          %v1016 = vunpack.c.l.b16 %v881
          %v1017 = vunpack.c.l.b16 %v882
          %v1018 = vunpack.c.l.b16 %v883
          %v1019 = vunpack.c.l.b16 %v884
          %v1020 = vunpack.c.l.b16 %v885
          %v1021 = vunpack.c.l.b16 %v886
          %v1022 = vunpack.c.l.b16 %v887
          %v1023 = vunpack.c.l.b16 %v888
          %v1024 = vunpack.c.l.b16 %v889
          %v1025 = vunpack.c.l.b16 %v890
          %v1026 = vunpack.c.l.b16 %v891
          %v1027 = vunpack.c.l.b16 %v892
          %v1028 = vunpack.c.l.b16 %v893
          %v1029 = vunpack.c.l.b16 %v894
          %v1030 = vunpack.c.l.b16 %v895
          %v1031 = vunpack.c.l.b16 %v896
          %v1032 = vunpack.c.l.b16 %v897
          %v1033 = vunpack.c.l.b16 %v898
          %v1034 = vunpack.c.l.b16 %v899
          %v1035 = vunpack.c.l.b16 %v900
          %v1036 = vunpack.c.l.b16 %v901
          %v1037 = vunpack.c.l.b16 %v902
          %v1038 = vunpack.c.l.b16 %v903
          %v1039 = vunpack.c.l.b16 %v904
          %v1040 = vunpack.c.l.b16 %v905
          %v1041 = vunpack.c.l.b16 %v906
          %v1042 = vunpack.c.l.b16 %v907
          %v1043 = vunpack.c.l.b16 %v908
          %v1044 = vunpack.c.l.b16 %v909
          %v1045 = vunpack.c.l.b16 %v910
          %v1046 = vunpack.c.l.b16 %v911
          %v1047 = vunpack.c.l.b16 %v912
          %v1048 = vunpack.c.l.b16 %v913
          %v1049 = vunpack.c.l.b16 %v914
          %v1050 = vunpack.c.l.b16 %v915
          %v1051 = vunpack.c.l.b16 %v916
          %v1052 = vunpack.c.l.b16 %v917
          %v1053 = vunpack.c.l.b16 %v918
          %v1054 = vunpack.c.l.b16 %v919
          %v1055 = vunpack.c.l.b16 %v920
          %v1056 = vunpack.c.l.b16 %v921
          %v1057 = vunpack.c.l.b16 %v922
          %v1058 = vunpack.c.l.b16 %v923
          %v1059 = vunpack.c.l.b16 %v924
          %v1060 = vunpack.c.l.b16 %v925
          %v1061 = vunpack.c.l.b16 %v926
          %v1062 = vunpack.c.l.b16 %v927
          %v1063 = vunpack.c.l.b16 %v928
          %v1064 = vunpack.c.l.b16 %v929
          %v1065 = vunpack.c.l.b16 %v930
          %v1066 = vunpack.c.l.b16 %v931
          %v1067 = vunpack.c.l.b16 %v932
          %v1068 = vunpack.c.l.b16 %v933
          %v1069 = vunpack.c.l.b16 %v934
          %v1070 = vunpack.c.l.b16 %v935
          %v1071 = vunpack.c.l.b16 %v936
          %v1072 = vunpack.c.l.b16 %v937
          %v1073 = vunpack.c.l.b16 %v938
          %v1074 = vunpack.c.l.b16 %v939
          %v1075 = vpack.c.b16 %v1012, %v1011
          %v1076 = vpack.c.b16 %v1014, %v1013
          %v1077 = vpack.c.b16 %v1016, %v1015
          %v1078 = vpack.c.b16 %v1018, %v1017
          %v1079 = vpack.c.b16 %v1020, %v1019
          %v1080 = vpack.c.b16 %v1022, %v1021
          %v1081 = vpack.c.b16 %v1024, %v1023
          %v1082 = vpack.c.b16 %v1026, %v1025
          %v1083 = vpack.c.b16 %v1028, %v1027
          %v1084 = vpack.c.b16 %v1030, %v1029
          %v1085 = vpack.c.b16 %v1032, %v1031
          %v1086 = vpack.c.b16 %v1034, %v1033
          %v1087 = vpack.c.b16 %v1036, %v1035
          %v1088 = vpack.c.b16 %v1038, %v1037
          %v1089 = vpack.c.b16 %v1040, %v1039
          %v1090 = vpack.c.b16 %v1042, %v1041
          %v1091 = vpack.c.b16 %v1044, %v1043
          %v1092 = vpack.c.b16 %v1046, %v1045
          %v1093 = vpack.c.b16 %v1048, %v1047
          %v1094 = vpack.c.b16 %v1050, %v1049
          %v1095 = vpack.c.b16 %v1052, %v1051
          %v1096 = vpack.c.b16 %v1054, %v1053
          %v1097 = vpack.c.b16 %v1056, %v1055
          %v1098 = vpack.c.b16 %v1058, %v1057
          %v1099 = vpack.c.b16 %v1060, %v1059
          %v1100 = vpack.c.b16 %v1062, %v1061
          %v1101 = vpack.c.b16 %v1064, %v1063
          %v1102 = vpack.c.b16 %v1066, %v1065
          %v1103 = vpack.c.b16 %v1068, %v1067
          %v1104 = vpack.c.b16 %v1070, %v1069
          %v1105 = vpack.c.b16 %v1072, %v1071
          %v1106 = vpack.c.b16 %v1074, %v1073
          %1139 = vmatprep.subr.bf16.mxu0 0
          %1140 = vmatpush1.bf16.msra.mxu0 %v1075
          %1141 = vmatprep.subr.bf16.mxu0 0
          %1142 = vmatpush1.bf16.msra.mxu0 %v1076
          %1143 = vmatprep.subr.bf16.mxu0 0
          %1144 = vmatpush1.bf16.msra.mxu0 %v1077
          %1145 = vmatprep.subr.bf16.mxu0 0
          %1146 = vmatpush1.bf16.msra.mxu0 %v1078
          %1147 = vmatprep.subr.bf16.mxu0 0
          %1148 = vmatpush1.bf16.msra.mxu0 %v1079
          %1149 = vmatprep.subr.bf16.mxu0 0
          %1150 = vmatpush1.bf16.msra.mxu0 %v1080
          %1151 = vmatprep.subr.bf16.mxu0 0
          %1152 = vmatpush1.bf16.msra.mxu0 %v1081
          %1153 = vmatprep.subr.bf16.mxu0 0
          %1154 = vmatpush1.bf16.msra.mxu0 %v1082
          %1155 = vmatprep.subr.bf16.mxu0 0
          %1156 = vmatpush1.bf16.msra.mxu0 %v1083
          %1157 = vmatprep.subr.bf16.mxu0 0
          %1158 = vmatpush1.bf16.msra.mxu0 %v1084
          %1159 = vmatprep.subr.bf16.mxu0 0
          %1160 = vmatpush1.bf16.msra.mxu0 %v1085
          %1161 = vmatprep.subr.bf16.mxu0 0
          %1162 = vmatpush1.bf16.msra.mxu0 %v1086
          %1163 = vmatprep.subr.bf16.mxu0 0
          %1164 = vmatpush1.bf16.msra.mxu0 %v1087
          %1165 = vmatprep.subr.bf16.mxu0 0
          %1166 = vmatpush1.bf16.msra.mxu0 %v1088
          %1167 = vmatprep.subr.bf16.mxu0 0
          %1168 = vmatpush1.bf16.msra.mxu0 %v1089
          %1169 = vmatprep.subr.bf16.mxu0 0
          %1170 = vmatpush1.bf16.msra.mxu0 %v1090
          %1171 = vmatprep.mubr.bf16.mxu0 %v873
          %1172 = vmatmul.mubr.bf16.gmra.mrb[0].mxu0 %v872
          %v1173 = vpop.f32.mrb[0].mxu0
          %v1174 = vadd.f32 %v945, %v1173
          %v1175 = vpop.f32.mrb[0].mxu0
          %v1176 = vpop.f32.mrb[0].mxu0
          %v1177 = vadd.f32 %v945, %v1176
          %v1178 = vpop.f32.mrb[0].mxu0
          %1179 = vdwg.mxu0
          %1180 = vmatprep.subr.bf16.mxu0 0
          %1181 = vmatpush1.bf16.msra.mxu0 %v1091
          %1182 = vmatprep.subr.bf16.mxu0 0
          %1183 = vmatpush1.bf16.msra.mxu0 %v1092
          %1184 = vmatprep.subr.bf16.mxu0 0
          %1185 = vmatpush1.bf16.msra.mxu0 %v1093
          %1186 = vmatprep.subr.bf16.mxu0 0
          %1187 = vmatpush1.bf16.msra.mxu0 %v1094
          %1188 = vmatprep.subr.bf16.mxu0 0
          %1189 = vmatpush1.bf16.msra.mxu0 %v1095
          %1190 = vmatprep.subr.bf16.mxu0 0
          %1191 = vmatpush1.bf16.msra.mxu0 %v1096
          %1192 = vmatprep.subr.bf16.mxu0 0
          %1193 = vmatpush1.bf16.msra.mxu0 %v1097
          %1194 = vmatprep.subr.bf16.mxu0 0
          %1195 = vmatpush1.bf16.msra.mxu0 %v1098
          %1196 = vmatprep.subr.bf16.mxu0 0
          %1197 = vmatpush1.bf16.msra.mxu0 %v1099
          %1198 = vmatprep.subr.bf16.mxu0 0
          %1199 = vmatpush1.bf16.msra.mxu0 %v1100
          %1200 = vmatprep.subr.bf16.mxu0 0
          %1201 = vmatpush1.bf16.msra.mxu0 %v1101
          %1202 = vmatprep.subr.bf16.mxu0 0
          %1203 = vmatpush1.bf16.msra.mxu0 %v1102
          %1204 = vmatprep.subr.bf16.mxu0 0
          %1205 = vmatpush1.bf16.msra.mxu0 %v1103
          %1206 = vmatprep.subr.bf16.mxu0 0
          %1207 = vmatpush1.bf16.msra.mxu0 %v1104
          %1208 = vmatprep.subr.bf16.mxu0 0
          %1209 = vmatpush1.bf16.msra.mxu0 %v1105
          %1210 = vmatprep.subr.bf16.mxu0 0
          %1211 = vmatpush1.bf16.msra.mxu0 %v1106
          %1212 = vmatprep.mubr.bf16.mxu0 %v875
          %1213 = vmatmul.mubr.bf16.gmra.mrb[0].mxu0 %v874
          %v1214 = vpop.f32.mrb[0].mxu0
          %v1215 = vadd.f32 %v1174, %v1214
          %v1216 = vpop.f32.mrb[0].mxu0
          %v1217 = vpop.f32.mrb[0].mxu0
          %v1218 = vadd.f32 %v1177, %v1217
          %v1219 = vpop.f32.mrb[0].mxu0
          %1220 = vdwg.mxu0
          %v1221 = vmax.f32 %v1215, 0.0
          %v1222 = vmax.f32 %v1218, 0.0
          %1223 = vst [vmem:[#allocation2] sm:$0xff] %v1221
          %1224 = vst [vmem:[#allocation2 + $0x8] sm:$0xff] %v1222
          %v1225 = vld [vmem:[#allocation4] sm:$0xff]
          %v1226 = vld [vmem:[#allocation4 + $0x8] sm:$0xff]
          %v1227 = vld [vmem:[#allocation4 + $0x10] sm:$0xff]
          %v1228 = vld [vmem:[#allocation4 + $0x18] sm:$0xff]
          %s1229 = scalar_lea.vmem %s1, 1024
          %v1230 = vld [vmem:[%s1229] sm:$0xff]
          %v1231 = vld [vmem:[%s1229 + $0x8] sm:$0xff]
          %v1232 = vld [vmem:[%s1229 + $0x10] sm:$0xff]
          %v1233 = vld [vmem:[%s1229 + $0x18] sm:$0xff]
          %v1234 = vld [vmem:[%s1229 + $0x20] sm:$0xff]
          %v1235 = vld [vmem:[%s1229 + $0x28] sm:$0xff]
          %v1236 = vld [vmem:[%s1229 + $0x30] sm:$0xff]
          %v1237 = vld [vmem:[%s1229 + $0x38] sm:$0xff]
          %v1238 = vld [vmem:[%s1229 + $0x40] sm:$0xff]
          %v1239 = vld [vmem:[%s1229 + $0x48] sm:$0xff]
          %v1240 = vld [vmem:[%s1229 + $0x50] sm:$0xff]
          %v1241 = vld [vmem:[%s1229 + $0x58] sm:$0xff]
          %v1242 = vld [vmem:[%s1229 + $0x60] sm:$0xff]
          %v1243 = vld [vmem:[%s1229 + $0x68] sm:$0xff]
          %v1244 = vld [vmem:[%s1229 + $0x70] sm:$0xff]
          %v1245 = vld [vmem:[%s1229 + $0x78] sm:$0xff]
          %v1246 = vld [vmem:[%s1229 + $0x80] sm:$0xff]
          %v1247 = vld [vmem:[%s1229 + $0x88] sm:$0xff]
          %v1248 = vld [vmem:[%s1229 + $0x90] sm:$0xff]
          %v1249 = vld [vmem:[%s1229 + $0x98] sm:$0xff]
          %v1250 = vld [vmem:[%s1229 + $0xa0] sm:$0xff]
          %v1251 = vld [vmem:[%s1229 + $0xa8] sm:$0xff]
          %v1252 = vld [vmem:[%s1229 + $0xb0] sm:$0xff]
          %v1253 = vld [vmem:[%s1229 + $0xb8] sm:$0xff]
          %v1254 = vld [vmem:[%s1229 + $0xc0] sm:$0xff]
          %v1255 = vld [vmem:[%s1229 + $0xc8] sm:$0xff]
          %v1256 = vld [vmem:[%s1229 + $0xd0] sm:$0xff]
          %v1257 = vld [vmem:[%s1229 + $0xd8] sm:$0xff]
          %v1258 = vld [vmem:[%s1229 + $0xe0] sm:$0xff]
          %v1259 = vld [vmem:[%s1229 + $0xe8] sm:$0xff]
          %v1260 = vld [vmem:[%s1229 + $0xf0] sm:$0xff]
          %v1261 = vld [vmem:[%s1229 + $0xf8] sm:$0xff]
          %v1262 = vld [vmem:[%s1229 + $0x100] sm:$0xff]
          %v1263 = vld [vmem:[%s1229 + $0x108] sm:$0xff]
          %v1264 = vld [vmem:[%s1229 + $0x110] sm:$0xff]
          %v1265 = vld [vmem:[%s1229 + $0x118] sm:$0xff]
          %v1266 = vld [vmem:[%s1229 + $0x120] sm:$0xff]
          %v1267 = vld [vmem:[%s1229 + $0x128] sm:$0xff]
          %v1268 = vld [vmem:[%s1229 + $0x130] sm:$0xff]
          %v1269 = vld [vmem:[%s1229 + $0x138] sm:$0xff]
          %v1270 = vld [vmem:[%s1229 + $0x140] sm:$0xff]
          %v1271 = vld [vmem:[%s1229 + $0x148] sm:$0xff]
          %v1272 = vld [vmem:[%s1229 + $0x150] sm:$0xff]
          %v1273 = vld [vmem:[%s1229 + $0x158] sm:$0xff]
          %v1274 = vld [vmem:[%s1229 + $0x160] sm:$0xff]
          %v1275 = vld [vmem:[%s1229 + $0x168] sm:$0xff]
          %v1276 = vld [vmem:[%s1229 + $0x170] sm:$0xff]
          %v1277 = vld [vmem:[%s1229 + $0x178] sm:$0xff]
          %v1278 = vld [vmem:[%s1229 + $0x180] sm:$0xff]
          %v1279 = vld [vmem:[%s1229 + $0x188] sm:$0xff]
          %v1280 = vld [vmem:[%s1229 + $0x190] sm:$0xff]
          %v1281 = vld [vmem:[%s1229 + $0x198] sm:$0xff]
          %v1282 = vld [vmem:[%s1229 + $0x1a0] sm:$0xff]
          %v1283 = vld [vmem:[%s1229 + $0x1a8] sm:$0xff]
          %v1284 = vld [vmem:[%s1229 + $0x1b0] sm:$0xff]
          %v1285 = vld [vmem:[%s1229 + $0x1b8] sm:$0xff]
          %v1286 = vld [vmem:[%s1229 + $0x1c0] sm:$0xff]
          %v1287 = vld [vmem:[%s1229 + $0x1c8] sm:$0xff]
          %v1288 = vld [vmem:[%s1229 + $0x1d0] sm:$0xff]
          %v1289 = vld [vmem:[%s1229 + $0x1d8] sm:$0xff]
          %v1290 = vld [vmem:[%s1229 + $0x1e0] sm:$0xff]
          %v1291 = vld [vmem:[%s1229 + $0x1e8] sm:$0xff]
          %v1292 = vld [vmem:[%s1229 + $0x1f0] sm:$0xff]
          %v1293 = vld [vmem:[%s1229 + $0x1f8] sm:$0xff]
          %v1294 = vld [vmem:[%s1229 + $0x200] sm:$0xff]
          %v1295 = vld [vmem:[%s1229 + $0x208] sm:$0xff]
          %v1296 = vld [vmem:[%s1229 + $0x210] sm:$0xff]
          %v1297 = vld [vmem:[%s1229 + $0x218] sm:$0xff]
          %v1298 = vld [vmem:[%s1229 + $0x220] sm:$0xff]
          %v1299 = vld [vmem:[%s1229 + $0x228] sm:$0xff]
          %v1300 = vld [vmem:[%s1229 + $0x230] sm:$0xff]
          %v1301 = vld [vmem:[%s1229 + $0x238] sm:$0xff]
          %v1302 = vld [vmem:[%s1229 + $0x240] sm:$0xff]
          %v1303 = vld [vmem:[%s1229 + $0x248] sm:$0xff]
          %v1304 = vld [vmem:[%s1229 + $0x250] sm:$0xff]
          %v1305 = vld [vmem:[%s1229 + $0x258] sm:$0xff]
          %v1306 = vld [vmem:[%s1229 + $0x260] sm:$0xff]
          %v1307 = vld [vmem:[%s1229 + $0x268] sm:$0xff]
          %v1308 = vld [vmem:[%s1229 + $0x270] sm:$0xff]
          %v1309 = vld [vmem:[%s1229 + $0x278] sm:$0xff]
          %v1310 = vld [vmem:[%s1229 + $0x280] sm:$0xff]
          %v1311 = vld [vmem:[%s1229 + $0x288] sm:$0xff]
          %v1312 = vld [vmem:[%s1229 + $0x290] sm:$0xff]
          %v1313 = vld [vmem:[%s1229 + $0x298] sm:$0xff]
          %v1314 = vld [vmem:[%s1229 + $0x2a0] sm:$0xff]
          %v1315 = vld [vmem:[%s1229 + $0x2a8] sm:$0xff]
          %v1316 = vld [vmem:[%s1229 + $0x2b0] sm:$0xff]
          %v1317 = vld [vmem:[%s1229 + $0x2b8] sm:$0xff]
          %v1318 = vld [vmem:[%s1229 + $0x2c0] sm:$0xff]
          %v1319 = vld [vmem:[%s1229 + $0x2c8] sm:$0xff]
          %v1320 = vld [vmem:[%s1229 + $0x2d0] sm:$0xff]
          %v1321 = vld [vmem:[%s1229 + $0x2d8] sm:$0xff]
          %v1322 = vld [vmem:[%s1229 + $0x2e0] sm:$0xff]
          %v1323 = vld [vmem:[%s1229 + $0x2e8] sm:$0xff]
          %v1324 = vld [vmem:[%s1229 + $0x2f0] sm:$0xff]
          %v1325 = vld [vmem:[%s1229 + $0x2f8] sm:$0xff]
          %v1326 = vld [vmem:[%s1229 + $0x300] sm:$0xff]
          %v1327 = vld [vmem:[%s1229 + $0x308] sm:$0xff]
          %v1328 = vld [vmem:[%s1229 + $0x310] sm:$0xff]
          %v1329 = vld [vmem:[%s1229 + $0x318] sm:$0xff]
          %v1330 = vld [vmem:[%s1229 + $0x320] sm:$0xff]
          %v1331 = vld [vmem:[%s1229 + $0x328] sm:$0xff]
          %v1332 = vld [vmem:[%s1229 + $0x330] sm:$0xff]
          %v1333 = vld [vmem:[%s1229 + $0x338] sm:$0xff]
          %v1334 = vld [vmem:[%s1229 + $0x340] sm:$0xff]
          %v1335 = vld [vmem:[%s1229 + $0x348] sm:$0xff]
          %v1336 = vld [vmem:[%s1229 + $0x350] sm:$0xff]
          %v1337 = vld [vmem:[%s1229 + $0x358] sm:$0xff]
          %v1338 = vld [vmem:[%s1229 + $0x360] sm:$0xff]
          %v1339 = vld [vmem:[%s1229 + $0x368] sm:$0xff]
          %v1340 = vld [vmem:[%s1229 + $0x370] sm:$0xff]
          %v1341 = vld [vmem:[%s1229 + $0x378] sm:$0xff]
          %v1342 = vld [vmem:[%s1229 + $0x380] sm:$0xff]
          %v1343 = vld [vmem:[%s1229 + $0x388] sm:$0xff]
          %v1344 = vld [vmem:[%s1229 + $0x390] sm:$0xff]
          %v1345 = vld [vmem:[%s1229 + $0x398] sm:$0xff]
          %v1346 = vld [vmem:[%s1229 + $0x3a0] sm:$0xff]
          %v1347 = vld [vmem:[%s1229 + $0x3a8] sm:$0xff]
          %v1348 = vld [vmem:[%s1229 + $0x3b0] sm:$0xff]
          %v1349 = vld [vmem:[%s1229 + $0x3b8] sm:$0xff]
          %v1350 = vld [vmem:[%s1229 + $0x3c0] sm:$0xff]
          %v1351 = vld [vmem:[%s1229 + $0x3c8] sm:$0xff]
          %v1352 = vld [vmem:[%s1229 + $0x3d0] sm:$0xff]
          %v1353 = vld [vmem:[%s1229 + $0x3d8] sm:$0xff]
          %v1354 = vld [vmem:[%s1229 + $0x3e0] sm:$0xff]
          %v1355 = vld [vmem:[%s1229 + $0x3e8] sm:$0xff]
          %v1356 = vld [vmem:[%s1229 + $0x3f0] sm:$0xff]
          %v1357 = vld [vmem:[%s1229 + $0x3f8] sm:$0xff]
          %v1359 = vsel %vm519, %v1226, 0
          %v1362 = vsel %vm519, %v1228, 0
          %v1365 = vsel %vm519, %v1231, 0
          %v1368 = vsel %vm519, %v1233, 0
          %v1371 = vsel %vm519, %v1235, 0
          %v1374 = vsel %vm519, %v1237, 0
          %v1377 = vsel %vm519, %v1239, 0
          %v1380 = vsel %vm519, %v1241, 0
          %v1383 = vsel %vm519, %v1243, 0
          %v1386 = vsel %vm519, %v1245, 0
          %v1389 = vsel %vm519, %v1247, 0
          %v1392 = vsel %vm519, %v1249, 0
          %v1395 = vsel %vm519, %v1251, 0
          %v1398 = vsel %vm519, %v1253, 0
          %v1401 = vsel %vm519, %v1255, 0
          %v1404 = vsel %vm519, %v1257, 0
          %v1407 = vsel %vm519, %v1259, 0
          %v1410 = vsel %vm519, %v1261, 0
          %v1413 = vsel %vm519, %v1263, 0
          %v1416 = vsel %vm519, %v1265, 0
          %v1419 = vsel %vm519, %v1267, 0
          %v1422 = vsel %vm519, %v1269, 0
          %v1425 = vsel %vm519, %v1271, 0
          %v1428 = vsel %vm519, %v1273, 0
          %v1431 = vsel %vm519, %v1275, 0
          %v1434 = vsel %vm519, %v1277, 0
          %v1437 = vsel %vm519, %v1279, 0
          %v1440 = vsel %vm519, %v1281, 0
          %v1443 = vsel %vm519, %v1283, 0
          %v1446 = vsel %vm519, %v1285, 0
          %v1449 = vsel %vm519, %v1287, 0
          %v1452 = vsel %vm519, %v1289, 0
          %v1455 = vsel %vm519, %v1291, 0
          %v1458 = vsel %vm519, %v1293, 0
          %v1461 = vsel %vm519, %v1295, 0
          %v1464 = vsel %vm519, %v1297, 0
          %v1467 = vsel %vm519, %v1299, 0
          %v1470 = vsel %vm519, %v1301, 0
          %v1473 = vsel %vm519, %v1303, 0
          %v1476 = vsel %vm519, %v1305, 0
          %v1479 = vsel %vm519, %v1307, 0
          %v1482 = vsel %vm519, %v1309, 0
          %v1485 = vsel %vm519, %v1311, 0
          %v1488 = vsel %vm519, %v1313, 0
          %v1491 = vsel %vm519, %v1315, 0
          %v1494 = vsel %vm519, %v1317, 0
          %v1497 = vsel %vm519, %v1319, 0
          %v1500 = vsel %vm519, %v1321, 0
          %v1503 = vsel %vm519, %v1323, 0
          %v1506 = vsel %vm519, %v1325, 0
          %v1509 = vsel %vm519, %v1327, 0
          %v1512 = vsel %vm519, %v1329, 0
          %v1515 = vsel %vm519, %v1331, 0
          %v1518 = vsel %vm519, %v1333, 0
          %v1521 = vsel %vm519, %v1335, 0
          %v1524 = vsel %vm519, %v1337, 0
          %v1527 = vsel %vm519, %v1339, 0
          %v1530 = vsel %vm519, %v1341, 0
          %v1533 = vsel %vm519, %v1343, 0
          %v1536 = vsel %vm519, %v1345, 0
          %v1539 = vsel %vm519, %v1347, 0
          %v1542 = vsel %vm519, %v1349, 0
          %v1545 = vsel %vm519, %v1351, 0
          %v1548 = vsel %vm519, %v1353, 0
          %v1551 = vsel %vm519, %v1355, 0
          %v1554 = vsel %vm519, %v1357, 0
          %1556 = vmatprep.subr.mxu0 %v1365
          %1557 = vmatpush1.xpose.msra.mxu0 %v1230
          %1558 = vmatprep.subr.mxu0 %v1368
          %1559 = vmatpush1.xpose.msra.mxu0 %v1232
          %1560 = vmatprep.subr.mxu0 %v1371
          %1561 = vmatpush1.xpose.msra.mxu0 %v1234
          %1562 = vmatprep.subr.mxu0 %v1374
          %1563 = vmatpush1.xpose.msra.mxu0 %v1236
          %1564 = vmatprep.subr.mxu0 %v1377
          %1565 = vmatpush1.xpose.msra.mxu0 %v1238
          %1566 = vmatprep.subr.mxu0 %v1380
          %1567 = vmatpush1.xpose.msra.mxu0 %v1240
          %1568 = vmatprep.subr.mxu0 %v1383
          %1569 = vmatpush1.xpose.msra.mxu0 %v1242
          %1570 = vmatprep.subr.mxu0 %v1386
          %1571 = vmatpush1.xpose.msra.mxu0 %v1244
          %1572 = vmatprep.subr.mxu0 %v1389
          %1573 = vmatpush1.xpose.msra.mxu0 %v1246
          %1574 = vmatprep.subr.mxu0 %v1392
          %1575 = vmatpush1.xpose.msra.mxu0 %v1248
          %1576 = vmatprep.subr.mxu0 %v1395
          %1577 = vmatpush1.xpose.msra.mxu0 %v1250
          %1578 = vmatprep.subr.mxu0 %v1398
          %1579 = vmatpush1.xpose.msra.mxu0 %v1252
          %1580 = vmatprep.subr.mxu0 %v1401
          %1581 = vmatpush1.xpose.msra.mxu0 %v1254
          %1582 = vmatprep.subr.mxu0 %v1404
          %1583 = vmatpush1.xpose.msra.mxu0 %v1256
          %1584 = vmatprep.subr.mxu0 %v1407
          %1585 = vmatpush1.xpose.msra.mxu0 %v1258
          %1586 = vmatprep.subr.mxu0 %v1410
          %1587 = vmatpush1.xpose.msra.mxu0 %v1260
          %1588 = vmatprep.subr.mxu0 %v1413
          %1589 = vmatpush1.xpose.msra.mxu0 %v1262
          %1590 = vmatprep.subr.mxu0 %v1416
          %1591 = vmatpush1.xpose.msra.mxu0 %v1264
          %1592 = vmatprep.subr.mxu0 %v1419
          %1593 = vmatpush1.xpose.msra.mxu0 %v1266
          %1594 = vmatprep.subr.mxu0 %v1422
          %1595 = vmatpush1.xpose.msra.mxu0 %v1268
          %1596 = vmatprep.subr.mxu0 %v1425
          %1597 = vmatpush1.xpose.msra.mxu0 %v1270
          %1598 = vmatprep.subr.mxu0 %v1428
          %1599 = vmatpush1.xpose.msra.mxu0 %v1272
          %1600 = vmatprep.subr.mxu0 %v1431
          %1601 = vmatpush1.xpose.msra.mxu0 %v1274
          %1602 = vmatprep.subr.mxu0 %v1434
          %1603 = vmatpush1.xpose.msra.mxu0 %v1276
          %1604 = vmatprep.subr.mxu0 %v1437
          %1605 = vmatpush1.xpose.msra.mxu0 %v1278
          %1606 = vmatprep.subr.mxu0 %v1440
          %1607 = vmatpush1.xpose.msra.mxu0 %v1280
          %1608 = vmatprep.subr.mxu0 %v1443
          %1609 = vmatpush1.xpose.msra.mxu0 %v1282
          %1610 = vmatprep.subr.mxu0 %v1446
          %1611 = vmatpush1.xpose.msra.mxu0 %v1284
          %1612 = vmatprep.subr.mxu0 %v1449
          %1613 = vmatpush1.xpose.msra.mxu0 %v1286
          %1614 = vmatprep.subr.mxu0 %v1452
          %1615 = vmatpush1.xpose.msra.mxu0 %v1288
          %1616 = vmatprep.subr.mxu0 %v1455
          %1617 = vmatpush1.xpose.msra.mxu0 %v1290
          %1618 = vmatprep.subr.mxu0 %v1458
          %1619 = vmatpush1.xpose.msra.mxu0 %v1292
          %1620 = vmatprep.mubr.f32.mxu0 %v1359
          %1621 = vmatmul.mubr.f32.gmra.mrb[0].mxu0 %v1225
          %v1622 = vpop.f32.mrb[0].mxu0
          %v1623 = vadd.f32 0.0, %v1622
          %v1624 = vpop.f32.mrb[0].mxu0
          %v1625 = vadd.f32 0.0, %v1624
          %1626 = vmatprep.mubr.f32.mxu0 %v1362
          %1627 = vmatmul.mubr.f32.gmra.mrb[0].mxu0 %v1227
          %v1628 = vpop.f32.mrb[0].mxu0
          %v1629 = vadd.f32 0.0, %v1628
          %v1630 = vpop.f32.mrb[0].mxu0
          %v1631 = vadd.f32 0.0, %v1630
          %1632 = vdwg.mxu0
          %1633 = vmatprep.subr.mxu0 %v1461
          %1634 = vmatpush1.xpose.msra.mxu0 %v1294
          %1635 = vmatprep.subr.mxu0 %v1464
          %1636 = vmatpush1.xpose.msra.mxu0 %v1296
          %1637 = vmatprep.subr.mxu0 %v1467
          %1638 = vmatpush1.xpose.msra.mxu0 %v1298
          %1639 = vmatprep.subr.mxu0 %v1470
          %1640 = vmatpush1.xpose.msra.mxu0 %v1300
          %1641 = vmatprep.subr.mxu0 %v1473
          %1642 = vmatpush1.xpose.msra.mxu0 %v1302
          %1643 = vmatprep.subr.mxu0 %v1476
          %1644 = vmatpush1.xpose.msra.mxu0 %v1304
          %1645 = vmatprep.subr.mxu0 %v1479
          %1646 = vmatpush1.xpose.msra.mxu0 %v1306
          %1647 = vmatprep.subr.mxu0 %v1482
          %1648 = vmatpush1.xpose.msra.mxu0 %v1308
          %1649 = vmatprep.subr.mxu0 %v1485
          %1650 = vmatpush1.xpose.msra.mxu0 %v1310
          %1651 = vmatprep.subr.mxu0 %v1488
          %1652 = vmatpush1.xpose.msra.mxu0 %v1312
          %1653 = vmatprep.subr.mxu0 %v1491
          %1654 = vmatpush1.xpose.msra.mxu0 %v1314
          %1655 = vmatprep.subr.mxu0 %v1494
          %1656 = vmatpush1.xpose.msra.mxu0 %v1316
          %1657 = vmatprep.subr.mxu0 %v1497
          %1658 = vmatpush1.xpose.msra.mxu0 %v1318
          %1659 = vmatprep.subr.mxu0 %v1500
          %1660 = vmatpush1.xpose.msra.mxu0 %v1320
          %1661 = vmatprep.subr.mxu0 %v1503
          %1662 = vmatpush1.xpose.msra.mxu0 %v1322
          %1663 = vmatprep.subr.mxu0 %v1506
          %1664 = vmatpush1.xpose.msra.mxu0 %v1324
          %1665 = vmatprep.subr.mxu0 %v1509
          %1666 = vmatpush1.xpose.msra.mxu0 %v1326
          %1667 = vmatprep.subr.mxu0 %v1512
          %1668 = vmatpush1.xpose.msra.mxu0 %v1328
          %1669 = vmatprep.subr.mxu0 %v1515
          %1670 = vmatpush1.xpose.msra.mxu0 %v1330
          %1671 = vmatprep.subr.mxu0 %v1518
          %1672 = vmatpush1.xpose.msra.mxu0 %v1332
          %1673 = vmatprep.subr.mxu0 %v1521
          %1674 = vmatpush1.xpose.msra.mxu0 %v1334
          %1675 = vmatprep.subr.mxu0 %v1524
          %1676 = vmatpush1.xpose.msra.mxu0 %v1336
          %1677 = vmatprep.subr.mxu0 %v1527
          %1678 = vmatpush1.xpose.msra.mxu0 %v1338
          %1679 = vmatprep.subr.mxu0 %v1530
          %1680 = vmatpush1.xpose.msra.mxu0 %v1340
          %1681 = vmatprep.subr.mxu0 %v1533
          %1682 = vmatpush1.xpose.msra.mxu0 %v1342
          %1683 = vmatprep.subr.mxu0 %v1536
          %1684 = vmatpush1.xpose.msra.mxu0 %v1344
          %1685 = vmatprep.subr.mxu0 %v1539
          %1686 = vmatpush1.xpose.msra.mxu0 %v1346
          %1687 = vmatprep.subr.mxu0 %v1542
          %1688 = vmatpush1.xpose.msra.mxu0 %v1348
          %1689 = vmatprep.subr.mxu0 %v1545
          %1690 = vmatpush1.xpose.msra.mxu0 %v1350
          %1691 = vmatprep.subr.mxu0 %v1548
          %1692 = vmatpush1.xpose.msra.mxu0 %v1352
          %1693 = vmatprep.subr.mxu0 %v1551
          %1694 = vmatpush1.xpose.msra.mxu0 %v1354
          %1695 = vmatprep.subr.mxu0 %v1554
          %1696 = vmatpush1.xpose.msra.mxu0 %v1356
          %1697 = vmatprep.mubr.f32.mxu0 %v1359
          %1698 = vmatmul.mubr.f32.gmra.mrb[0].mxu0 %v1225
          %v1699 = vpop.f32.mrb[0].mxu0
          %v1700 = vadd.f32 0.0, %v1699
          %v1701 = vpop.f32.mrb[0].mxu0
          %v1702 = vadd.f32 0.0, %v1701
          %1703 = vmatprep.mubr.f32.mxu0 %v1362
          %1704 = vmatmul.mubr.f32.gmra.mrb[0].mxu0 %v1227
          %v1705 = vpop.f32.mrb[0].mxu0
          %v1706 = vadd.f32 0.0, %v1705
          %v1707 = vpop.f32.mrb[0].mxu0
          %v1708 = vadd.f32 0.0, %v1707
          %1709 = vdwg.mxu0
          %v1710 = vpack.c.bf16 %v1629, %v1623
          %v1711 = vpack.c.bf16 %v1631, %v1625
          %v1712 = vpack.c.bf16 %v1706, %v1700
          %v1713 = vpack.c.bf16 %v1708, %v1702
          %v1714 = vld [vmem:[#allocation6] sm:$0xf]
          %v1715 = vld [vmem:[#allocation6 + $0x4] sm:$0xf]
          %v1716 = vld [vmem:[#allocation6 + $0x8] sm:$0xf]
          %v1717 = vld [vmem:[#allocation6 + $0xc] sm:$0xf]
          %v1718 = vld [vmem:[#allocation6 + $0x10] sm:$0xf]
          %v1719 = vld [vmem:[#allocation6 + $0x14] sm:$0xf]
          %v1720 = vld [vmem:[#allocation6 + $0x18] sm:$0xf]
          %v1721 = vld [vmem:[#allocation6 + $0x1c] sm:$0xf]
          %v1722 = vld [vmem:[#allocation6 + $0x20] sm:$0xf]
          %v1723 = vld [vmem:[#allocation6 + $0x24] sm:$0xf]
          %v1724 = vld [vmem:[#allocation6 + $0x28] sm:$0xf]
          %v1725 = vld [vmem:[#allocation6 + $0x2c] sm:$0xf]
          %v1726 = vld [vmem:[#allocation6 + $0x30] sm:$0xf]
          %v1727 = vld [vmem:[#allocation6 + $0x34] sm:$0xf]
          %v1728 = vld [vmem:[#allocation6 + $0x38] sm:$0xf]
          %v1729 = vld [vmem:[#allocation6 + $0x3c] sm:$0xf]
          %v1730 = vld [vmem:[#allocation6 + $0x40] sm:$0xf]
          %v1731 = vld [vmem:[#allocation6 + $0x44] sm:$0xf]
          %v1732 = vld [vmem:[#allocation6 + $0x48] sm:$0xf]
          %v1733 = vld [vmem:[#allocation6 + $0x4c] sm:$0xf]
          %v1734 = vld [vmem:[#allocation6 + $0x50] sm:$0xf]
          %v1735 = vld [vmem:[#allocation6 + $0x54] sm:$0xf]
          %v1736 = vld [vmem:[#allocation6 + $0x58] sm:$0xf]
          %v1737 = vld [vmem:[#allocation6 + $0x5c] sm:$0xf]
          %v1738 = vld [vmem:[#allocation6 + $0x60] sm:$0xf]
          %v1739 = vld [vmem:[#allocation6 + $0x64] sm:$0xf]
          %v1740 = vld [vmem:[#allocation6 + $0x68] sm:$0xf]
          %v1741 = vld [vmem:[#allocation6 + $0x6c] sm:$0xf]
          %v1742 = vld [vmem:[#allocation6 + $0x70] sm:$0xf]
          %v1743 = vld [vmem:[#allocation6 + $0x74] sm:$0xf]
          %v1744 = vld [vmem:[#allocation6 + $0x78] sm:$0xf]
          %v1745 = vld [vmem:[#allocation6 + $0x7c] sm:$0xf]
          %v1746 = vld [vmem:[#allocation6 + $0x80] sm:$0xf]
          %v1747 = vld [vmem:[#allocation6 + $0x84] sm:$0xf]
          %v1748 = vld [vmem:[#allocation6 + $0x88] sm:$0xf]
          %v1749 = vld [vmem:[#allocation6 + $0x8c] sm:$0xf]
          %v1750 = vld [vmem:[#allocation6 + $0x90] sm:$0xf]
          %v1751 = vld [vmem:[#allocation6 + $0x94] sm:$0xf]
          %v1752 = vld [vmem:[#allocation6 + $0x98] sm:$0xf]
          %v1753 = vld [vmem:[#allocation6 + $0x9c] sm:$0xf]
          %v1754 = vld [vmem:[#allocation6 + $0xa0] sm:$0xf]
          %v1755 = vld [vmem:[#allocation6 + $0xa4] sm:$0xf]
          %v1756 = vld [vmem:[#allocation6 + $0xa8] sm:$0xf]
          %v1757 = vld [vmem:[#allocation6 + $0xac] sm:$0xf]
          %v1758 = vld [vmem:[#allocation6 + $0xb0] sm:$0xf]
          %v1759 = vld [vmem:[#allocation6 + $0xb4] sm:$0xf]
          %v1760 = vld [vmem:[#allocation6 + $0xb8] sm:$0xf]
          %v1761 = vld [vmem:[#allocation6 + $0xbc] sm:$0xf]
          %v1762 = vld [vmem:[#allocation6 + $0xc0] sm:$0xf]
          %v1763 = vld [vmem:[#allocation6 + $0xc4] sm:$0xf]
          %v1764 = vld [vmem:[#allocation6 + $0xc8] sm:$0xf]
          %v1765 = vld [vmem:[#allocation6 + $0xcc] sm:$0xf]
          %v1766 = vld [vmem:[#allocation6 + $0xd0] sm:$0xf]
          %v1767 = vld [vmem:[#allocation6 + $0xd4] sm:$0xf]
          %v1768 = vld [vmem:[#allocation6 + $0xd8] sm:$0xf]
          %v1769 = vld [vmem:[#allocation6 + $0xdc] sm:$0xf]
          %v1770 = vld [vmem:[#allocation6 + $0xe0] sm:$0xf]
          %v1771 = vld [vmem:[#allocation6 + $0xe4] sm:$0xf]
          %v1772 = vld [vmem:[#allocation6 + $0xe8] sm:$0xf]
          %v1773 = vld [vmem:[#allocation6 + $0xec] sm:$0xf]
          %v1774 = vld [vmem:[#allocation6 + $0xf0] sm:$0xf]
          %v1775 = vld [vmem:[#allocation6 + $0xf4] sm:$0xf]
          %v1776 = vld [vmem:[#allocation6 + $0xf8] sm:$0xf]
          %v1777 = vld [vmem:[#allocation6 + $0xfc] sm:$0xf]
          %v1778 = vld [vmem:[#allocation8] sm:$0x1]
          %v1780 = vlaneseq
          %v1781 = vshrl.u32 %v1780, 7
          %v1782 = vsub.s32 0, %v1781
          %v1783 = vrot.slane %v1778, %v1782
          %v1849 = vunpack.c.l.b16 %v1714
          %v1850 = vunpack.c.l.b16 %v1715
          %v1851 = vunpack.c.l.b16 %v1716
          %v1852 = vunpack.c.l.b16 %v1717
          %v1853 = vunpack.c.l.b16 %v1718
          %v1854 = vunpack.c.l.b16 %v1719
          %v1855 = vunpack.c.l.b16 %v1720
          %v1856 = vunpack.c.l.b16 %v1721
          %v1857 = vunpack.c.l.b16 %v1722
          %v1858 = vunpack.c.l.b16 %v1723
          %v1859 = vunpack.c.l.b16 %v1724
          %v1860 = vunpack.c.l.b16 %v1725
          %v1861 = vunpack.c.l.b16 %v1726
          %v1862 = vunpack.c.l.b16 %v1727
          %v1863 = vunpack.c.l.b16 %v1728
          %v1864 = vunpack.c.l.b16 %v1729
          %v1865 = vunpack.c.l.b16 %v1730
          %v1866 = vunpack.c.l.b16 %v1731
          %v1867 = vunpack.c.l.b16 %v1732
          %v1868 = vunpack.c.l.b16 %v1733
          %v1869 = vunpack.c.l.b16 %v1734
          %v1870 = vunpack.c.l.b16 %v1735
          %v1871 = vunpack.c.l.b16 %v1736
          %v1872 = vunpack.c.l.b16 %v1737
          %v1873 = vunpack.c.l.b16 %v1738
          %v1874 = vunpack.c.l.b16 %v1739
          %v1875 = vunpack.c.l.b16 %v1740
          %v1876 = vunpack.c.l.b16 %v1741
          %v1877 = vunpack.c.l.b16 %v1742
          %v1878 = vunpack.c.l.b16 %v1743
          %v1879 = vunpack.c.l.b16 %v1744
          %v1880 = vunpack.c.l.b16 %v1745
          %v1881 = vunpack.c.l.b16 %v1746
          %v1882 = vunpack.c.l.b16 %v1747
          %v1883 = vunpack.c.l.b16 %v1748
          %v1884 = vunpack.c.l.b16 %v1749
          %v1885 = vunpack.c.l.b16 %v1750
          %v1886 = vunpack.c.l.b16 %v1751
          %v1887 = vunpack.c.l.b16 %v1752
          %v1888 = vunpack.c.l.b16 %v1753
          %v1889 = vunpack.c.l.b16 %v1754
          %v1890 = vunpack.c.l.b16 %v1755
          %v1891 = vunpack.c.l.b16 %v1756
          %v1892 = vunpack.c.l.b16 %v1757
          %v1893 = vunpack.c.l.b16 %v1758
          %v1894 = vunpack.c.l.b16 %v1759
          %v1895 = vunpack.c.l.b16 %v1760
          %v1896 = vunpack.c.l.b16 %v1761
          %v1897 = vunpack.c.l.b16 %v1762
          %v1898 = vunpack.c.l.b16 %v1763
          %v1899 = vunpack.c.l.b16 %v1764
          %v1900 = vunpack.c.l.b16 %v1765
          %v1901 = vunpack.c.l.b16 %v1766
          %v1902 = vunpack.c.l.b16 %v1767
          %v1903 = vunpack.c.l.b16 %v1768
          %v1904 = vunpack.c.l.b16 %v1769
          %v1905 = vunpack.c.l.b16 %v1770
          %v1906 = vunpack.c.l.b16 %v1771
          %v1907 = vunpack.c.l.b16 %v1772
          %v1908 = vunpack.c.l.b16 %v1773
          %v1909 = vunpack.c.l.b16 %v1774
          %v1910 = vunpack.c.l.b16 %v1775
          %v1911 = vunpack.c.l.b16 %v1776
          %v1912 = vunpack.c.l.b16 %v1777
          %v1913 = vpack.c.b16 %v1850, %v1849
          %v1914 = vpack.c.b16 %v1852, %v1851
          %v1915 = vpack.c.b16 %v1854, %v1853
          %v1916 = vpack.c.b16 %v1856, %v1855
          %v1917 = vpack.c.b16 %v1858, %v1857
          %v1918 = vpack.c.b16 %v1860, %v1859
          %v1919 = vpack.c.b16 %v1862, %v1861
          %v1920 = vpack.c.b16 %v1864, %v1863
          %v1921 = vpack.c.b16 %v1866, %v1865
          %v1922 = vpack.c.b16 %v1868, %v1867
          %v1923 = vpack.c.b16 %v1870, %v1869
          %v1924 = vpack.c.b16 %v1872, %v1871
          %v1925 = vpack.c.b16 %v1874, %v1873
          %v1926 = vpack.c.b16 %v1876, %v1875
          %v1927 = vpack.c.b16 %v1878, %v1877
          %v1928 = vpack.c.b16 %v1880, %v1879
          %v1929 = vpack.c.b16 %v1882, %v1881
          %v1930 = vpack.c.b16 %v1884, %v1883
          %v1931 = vpack.c.b16 %v1886, %v1885
          %v1932 = vpack.c.b16 %v1888, %v1887
          %v1933 = vpack.c.b16 %v1890, %v1889
          %v1934 = vpack.c.b16 %v1892, %v1891
          %v1935 = vpack.c.b16 %v1894, %v1893
          %v1936 = vpack.c.b16 %v1896, %v1895
          %v1937 = vpack.c.b16 %v1898, %v1897
          %v1938 = vpack.c.b16 %v1900, %v1899
          %v1939 = vpack.c.b16 %v1902, %v1901
          %v1940 = vpack.c.b16 %v1904, %v1903
          %v1941 = vpack.c.b16 %v1906, %v1905
          %v1942 = vpack.c.b16 %v1908, %v1907
          %v1943 = vpack.c.b16 %v1910, %v1909
          %v1944 = vpack.c.b16 %v1912, %v1911
          %1977 = vmatprep.subr.bf16.mxu0 0
          %1978 = vmatpush1.bf16.msra.mxu0 %v1913
          %1979 = vmatprep.subr.bf16.mxu0 0
          %1980 = vmatpush1.bf16.msra.mxu0 %v1914
          %1981 = vmatprep.subr.bf16.mxu0 0
          %1982 = vmatpush1.bf16.msra.mxu0 %v1915
          %1983 = vmatprep.subr.bf16.mxu0 0
          %1984 = vmatpush1.bf16.msra.mxu0 %v1916
          %1985 = vmatprep.subr.bf16.mxu0 0
          %1986 = vmatpush1.bf16.msra.mxu0 %v1917
          %1987 = vmatprep.subr.bf16.mxu0 0
          %1988 = vmatpush1.bf16.msra.mxu0 %v1918
          %1989 = vmatprep.subr.bf16.mxu0 0
          %1990 = vmatpush1.bf16.msra.mxu0 %v1919
          %1991 = vmatprep.subr.bf16.mxu0 0
          %1992 = vmatpush1.bf16.msra.mxu0 %v1920
          %1993 = vmatprep.subr.bf16.mxu0 0
          %1994 = vmatpush1.bf16.msra.mxu0 %v1921
          %1995 = vmatprep.subr.bf16.mxu0 0
          %1996 = vmatpush1.bf16.msra.mxu0 %v1922
          %1997 = vmatprep.subr.bf16.mxu0 0
          %1998 = vmatpush1.bf16.msra.mxu0 %v1923
          %1999 = vmatprep.subr.bf16.mxu0 0
          %2000 = vmatpush1.bf16.msra.mxu0 %v1924
          %2001 = vmatprep.subr.bf16.mxu0 0
          %2002 = vmatpush1.bf16.msra.mxu0 %v1925
          %2003 = vmatprep.subr.bf16.mxu0 0
          %2004 = vmatpush1.bf16.msra.mxu0 %v1926
          %2005 = vmatprep.subr.bf16.mxu0 0
          %2006 = vmatpush1.bf16.msra.mxu0 %v1927
          %2007 = vmatprep.subr.bf16.mxu0 0
          %2008 = vmatpush1.bf16.msra.mxu0 %v1928
          %2009 = vmatprep.mubr.bf16.mxu0 %v1711
          %2010 = vmatmul.mubr.bf16.gmra.mrb[0].mxu0 %v1710
          %v2011 = vpop.f32.mrb[0].mxu0
          %v2012 = vadd.f32 %v1783, %v2011
          %v2013 = vpop.f32.mrb[0].mxu0
          %v2014 = vpop.f32.mrb[0].mxu0
          %v2015 = vadd.f32 %v1783, %v2014
          %v2016 = vpop.f32.mrb[0].mxu0
          %2017 = vdwg.mxu0
          %2018 = vmatprep.subr.bf16.mxu0 0
          %2019 = vmatpush1.bf16.msra.mxu0 %v1929
          %2020 = vmatprep.subr.bf16.mxu0 0
          %2021 = vmatpush1.bf16.msra.mxu0 %v1930
          %2022 = vmatprep.subr.bf16.mxu0 0
          %2023 = vmatpush1.bf16.msra.mxu0 %v1931
          %2024 = vmatprep.subr.bf16.mxu0 0
          %2025 = vmatpush1.bf16.msra.mxu0 %v1932
          %2026 = vmatprep.subr.bf16.mxu0 0
          %2027 = vmatpush1.bf16.msra.mxu0 %v1933
          %2028 = vmatprep.subr.bf16.mxu0 0
          %2029 = vmatpush1.bf16.msra.mxu0 %v1934
          %2030 = vmatprep.subr.bf16.mxu0 0
          %2031 = vmatpush1.bf16.msra.mxu0 %v1935
          %2032 = vmatprep.subr.bf16.mxu0 0
          %2033 = vmatpush1.bf16.msra.mxu0 %v1936
          %2034 = vmatprep.subr.bf16.mxu0 0
          %2035 = vmatpush1.bf16.msra.mxu0 %v1937
          %2036 = vmatprep.subr.bf16.mxu0 0
          %2037 = vmatpush1.bf16.msra.mxu0 %v1938
          %2038 = vmatprep.subr.bf16.mxu0 0
          %2039 = vmatpush1.bf16.msra.mxu0 %v1939
          %2040 = vmatprep.subr.bf16.mxu0 0
          %2041 = vmatpush1.bf16.msra.mxu0 %v1940
          %2042 = vmatprep.subr.bf16.mxu0 0
          %2043 = vmatpush1.bf16.msra.mxu0 %v1941
          %2044 = vmatprep.subr.bf16.mxu0 0
          %2045 = vmatpush1.bf16.msra.mxu0 %v1942
          %2046 = vmatprep.subr.bf16.mxu0 0
          %2047 = vmatpush1.bf16.msra.mxu0 %v1943
          %2048 = vmatprep.subr.bf16.mxu0 0
          %2049 = vmatpush1.bf16.msra.mxu0 %v1944
          %2050 = vmatprep.mubr.bf16.mxu0 %v1713
          %2051 = vmatmul.mubr.bf16.gmra.mrb[0].mxu0 %v1712
          %v2052 = vpop.f32.mrb[0].mxu0
          %v2053 = vadd.f32 %v2012, %v2052
          %v2054 = vpop.f32.mrb[0].mxu0
          %v2055 = vpop.f32.mrb[0].mxu0
          %v2056 = vadd.f32 %v2015, %v2055
          %v2057 = vpop.f32.mrb[0].mxu0
          %2058 = vdwg.mxu0
          %v2059 = vmax.f32 %v2053, 0.0
          %v2060 = vmax.f32 %v2056, 0.0
          %s2061 = scalar_lea.vmem [#allocation2], 16
          %2062 = vst [vmem:[%s2061] sm:$0xff] %v2059
          %2063 = vst [vmem:[%s2061 + $0x8] sm:$0xff] %v2060
        $region80: #{loss_header_forward.1} parent=51 // pred_fallthru
          _
        %s2064 = smul.u32 %s25, 8
        %s2065 = scalar_lea.vmem [#allocation2], %s2064
        %v2066 = vld [vmem:[%s2065] sm:$0xff]
        %v2067 = vld [vmem:[%s2065 + $0x10] sm:$0xff]
        %v2068 = vcombine.high %v2066, 0.0
        %v2070 = vunpack.c.l.s4 1983009808
        %v2071 = vunpack.c.0.s8 %v2070
        %v2072 = vlaneseq
        %v2073 = vshrl.u32 %v2072, 7
        %v2074 = vsub.s32 %v2071, %v2073
        %v2075 = vrot.slane %v2066, %v2074
        %v2077 = vunpack.c.l.s4 1983009808
        %v2078 = vunpack.c.0.s8 %v2077
        %v2079 = vlaneseq
        %v2080 = vshrl.u32 %v2079, 7
        %v2081 = vsub.s32 %v2078, %v2080
        %v2082 = vrot.slane %v2068, %v2081
        %v2083 = vcombine.high %v2067, 0.0
        %v2085 = vunpack.c.l.s4 1983009808
        %v2086 = vunpack.c.0.s8 %v2085
        %v2087 = vlaneseq
        %v2088 = vshrl.u32 %v2087, 7
        %v2089 = vsub.s32 %v2086, %v2088
        %v2090 = vrot.slane %v2067, %v2089
        %v2092 = vunpack.c.l.s4 1983009808
        %v2093 = vunpack.c.0.s8 %v2092
        %v2094 = vlaneseq
        %v2095 = vshrl.u32 %v2094, 7
        %v2096 = vsub.s32 %v2093, %v2095
        %v2097 = vrot.slane %v2083, %v2096
        %v2098 = vcombine.low %v2075, %v2090
        %v2099 = vcombine.high %v2075, %v2090
        %v2101 = vunpack.c.l.s4 1934713408
        %v2102 = vunpack.c.0.s8 %v2101
        %v2103 = vlaneseq
        %v2104 = vshrl.u32 %v2103, 7
        %v2105 = vsub.s32 %v2102, %v2104
        %v2106 = vrot.slane %v2098, %v2105
        %v2108 = vunpack.c.l.s4 1934713408
        %v2109 = vunpack.c.0.s8 %v2108
        %v2110 = vlaneseq
        %v2111 = vshrl.u32 %v2110, 7
        %v2112 = vsub.s32 %v2109, %v2111
        %v2113 = vrot.slane %v2099, %v2112
        %v2114 = vcombine.low %v2082, %v2097
        %v2115 = vcombine.high %v2082, %v2097
        %v2117 = vunpack.c.l.s4 1934713408
        %v2118 = vunpack.c.0.s8 %v2117
        %v2119 = vlaneseq
        %v2120 = vshrl.u32 %v2119, 7
        %v2121 = vsub.s32 %v2118, %v2120
        %v2122 = vrot.slane %v2114, %v2121
        %v2124 = vunpack.c.l.s4 1934713408
        %v2125 = vunpack.c.0.s8 %v2124
        %v2126 = vlaneseq
        %v2127 = vshrl.u32 %v2126, 7
        %v2128 = vsub.s32 %v2125, %v2127
        %v2129 = vrot.slane %v2115, %v2128
        %v2130 = vcombine.high %v2106, 0.0
        %v2131 = vcombine.high %v2113, 0.0
        %v2132 = vcombine.high %v2122, 0.0
        %v2133 = vcombine.high %v2129, 0.0
        %v2134 = vld [vmem:[#allocation3] sm:$0xff]
        %v2135 = vld [vmem:[#allocation3 + $0x8] sm:$0xff]
        %v2136 = vpack.c.bf16 %v2106, %v2106
        %v2137 = vpack.c.bf16 %v2130, %v2130
        %v2138 = vpack.c.bf16 %v2113, %v2113
        %v2139 = vpack.c.bf16 %v2131, %v2131
        %v2140 = vpack.c.bf16 %v2122, %v2122
        %v2141 = vpack.c.bf16 %v2132, %v2132
        %v2142 = vpack.c.bf16 %v2129, %v2129
        %v2143 = vpack.c.bf16 %v2133, %v2133
        %v2144 = vld [vmem:[%s343] sm:$0xff]
        %v2145 = vld [vmem:[%s343 + $0x8] sm:$0xff]
        %v2146 = vld [vmem:[%s343 + $0x10] sm:$0xff]
        %v2147 = vld [vmem:[%s343 + $0x18] sm:$0xff]
        %v2148 = vld [vmem:[%s343 + $0x20] sm:$0xff]
        %v2149 = vld [vmem:[%s343 + $0x28] sm:$0xff]
        %v2150 = vld [vmem:[%s343 + $0x30] sm:$0xff]
        %v2151 = vld [vmem:[%s343 + $0x38] sm:$0xff]
        %v2152 = vld [vmem:[%s343 + $0x40] sm:$0xff]
        %v2153 = vld [vmem:[%s343 + $0x48] sm:$0xff]
        %v2154 = vld [vmem:[%s343 + $0x50] sm:$0xff]
        %v2155 = vld [vmem:[%s343 + $0x58] sm:$0xff]
        %v2156 = vld [vmem:[%s343 + $0x60] sm:$0xff]
        %v2157 = vld [vmem:[%s343 + $0x68] sm:$0xff]
        %v2158 = vld [vmem:[%s343 + $0x70] sm:$0xff]
        %v2159 = vld [vmem:[%s343 + $0x78] sm:$0xff]
        %v2160 = vld [vmem:[%s343 + $0x80] sm:$0xff]
        %v2161 = vld [vmem:[%s343 + $0x88] sm:$0xff]
        %v2162 = vld [vmem:[%s343 + $0x90] sm:$0xff]
        %v2163 = vld [vmem:[%s343 + $0x98] sm:$0xff]
        %v2164 = vld [vmem:[%s343 + $0xa0] sm:$0xff]
        %v2165 = vld [vmem:[%s343 + $0xa8] sm:$0xff]
        %v2166 = vld [vmem:[%s343 + $0xb0] sm:$0xff]
        %v2167 = vld [vmem:[%s343 + $0xb8] sm:$0xff]
        %v2168 = vld [vmem:[%s343 + $0xc0] sm:$0xff]
        %v2169 = vld [vmem:[%s343 + $0xc8] sm:$0xff]
        %v2170 = vld [vmem:[%s343 + $0xd0] sm:$0xff]
        %v2171 = vld [vmem:[%s343 + $0xd8] sm:$0xff]
        %v2172 = vld [vmem:[%s343 + $0xe0] sm:$0xff]
        %v2173 = vld [vmem:[%s343 + $0xe8] sm:$0xff]
        %v2174 = vld [vmem:[%s343 + $0xf0] sm:$0xff]
        %v2175 = vld [vmem:[%s343 + $0xf8] sm:$0xff]
        %v2176 = vld [vmem:[%s343 + $0x100] sm:$0xff]
        %v2177 = vld [vmem:[%s343 + $0x108] sm:$0xff]
        %v2178 = vld [vmem:[%s343 + $0x110] sm:$0xff]
        %v2179 = vld [vmem:[%s343 + $0x118] sm:$0xff]
        %v2180 = vld [vmem:[%s343 + $0x120] sm:$0xff]
        %v2181 = vld [vmem:[%s343 + $0x128] sm:$0xff]
        %v2182 = vld [vmem:[%s343 + $0x130] sm:$0xff]
        %v2183 = vld [vmem:[%s343 + $0x138] sm:$0xff]
        %v2184 = vld [vmem:[%s343 + $0x140] sm:$0xff]
        %v2185 = vld [vmem:[%s343 + $0x148] sm:$0xff]
        %v2186 = vld [vmem:[%s343 + $0x150] sm:$0xff]
        %v2187 = vld [vmem:[%s343 + $0x158] sm:$0xff]
        %v2188 = vld [vmem:[%s343 + $0x160] sm:$0xff]
        %v2189 = vld [vmem:[%s343 + $0x168] sm:$0xff]
        %v2190 = vld [vmem:[%s343 + $0x170] sm:$0xff]
        %v2191 = vld [vmem:[%s343 + $0x178] sm:$0xff]
        %v2192 = vld [vmem:[%s343 + $0x180] sm:$0xff]
        %v2193 = vld [vmem:[%s343 + $0x188] sm:$0xff]
        %v2194 = vld [vmem:[%s343 + $0x190] sm:$0xff]
        %v2195 = vld [vmem:[%s343 + $0x198] sm:$0xff]
        %v2196 = vld [vmem:[%s343 + $0x1a0] sm:$0xff]
        %v2197 = vld [vmem:[%s343 + $0x1a8] sm:$0xff]
        %v2198 = vld [vmem:[%s343 + $0x1b0] sm:$0xff]
        %v2199 = vld [vmem:[%s343 + $0x1b8] sm:$0xff]
        %v2200 = vld [vmem:[%s343 + $0x1c0] sm:$0xff]
        %v2201 = vld [vmem:[%s343 + $0x1c8] sm:$0xff]
        %v2202 = vld [vmem:[%s343 + $0x1d0] sm:$0xff]
        %v2203 = vld [vmem:[%s343 + $0x1d8] sm:$0xff]
        %v2204 = vld [vmem:[%s343 + $0x1e0] sm:$0xff]
        %v2205 = vld [vmem:[%s343 + $0x1e8] sm:$0xff]
        %v2206 = vld [vmem:[%s343 + $0x1f0] sm:$0xff]
        %v2207 = vld [vmem:[%s343 + $0x1f8] sm:$0xff]
        %v2208 = vld [vmem:[%s343 + $0x200] sm:$0xff]
        %v2209 = vld [vmem:[%s343 + $0x208] sm:$0xff]
        %v2210 = vld [vmem:[%s343 + $0x210] sm:$0xff]
        %v2211 = vld [vmem:[%s343 + $0x218] sm:$0xff]
        %v2212 = vld [vmem:[%s343 + $0x220] sm:$0xff]
        %v2213 = vld [vmem:[%s343 + $0x228] sm:$0xff]
        %v2214 = vld [vmem:[%s343 + $0x230] sm:$0xff]
        %v2215 = vld [vmem:[%s343 + $0x238] sm:$0xff]
        %v2216 = vld [vmem:[%s343 + $0x240] sm:$0xff]
        %v2217 = vld [vmem:[%s343 + $0x248] sm:$0xff]
        %v2218 = vld [vmem:[%s343 + $0x250] sm:$0xff]
        %v2219 = vld [vmem:[%s343 + $0x258] sm:$0xff]
        %v2220 = vld [vmem:[%s343 + $0x260] sm:$0xff]
        %v2221 = vld [vmem:[%s343 + $0x268] sm:$0xff]
        %v2222 = vld [vmem:[%s343 + $0x270] sm:$0xff]
        %v2223 = vld [vmem:[%s343 + $0x278] sm:$0xff]
        %v2224 = vld [vmem:[%s343 + $0x280] sm:$0xff]
        %v2225 = vld [vmem:[%s343 + $0x288] sm:$0xff]
        %v2226 = vld [vmem:[%s343 + $0x290] sm:$0xff]
        %v2227 = vld [vmem:[%s343 + $0x298] sm:$0xff]
        %v2228 = vld [vmem:[%s343 + $0x2a0] sm:$0xff]
        %v2229 = vld [vmem:[%s343 + $0x2a8] sm:$0xff]
        %v2230 = vld [vmem:[%s343 + $0x2b0] sm:$0xff]
        %v2231 = vld [vmem:[%s343 + $0x2b8] sm:$0xff]
        %v2232 = vld [vmem:[%s343 + $0x2c0] sm:$0xff]
        %v2233 = vld [vmem:[%s343 + $0x2c8] sm:$0xff]
        %v2234 = vld [vmem:[%s343 + $0x2d0] sm:$0xff]
        %v2235 = vld [vmem:[%s343 + $0x2d8] sm:$0xff]
        %v2236 = vld [vmem:[%s343 + $0x2e0] sm:$0xff]
        %v2237 = vld [vmem:[%s343 + $0x2e8] sm:$0xff]
        %v2238 = vld [vmem:[%s343 + $0x2f0] sm:$0xff]
        %v2239 = vld [vmem:[%s343 + $0x2f8] sm:$0xff]
        %v2240 = vld [vmem:[%s343 + $0x300] sm:$0xff]
        %v2241 = vld [vmem:[%s343 + $0x308] sm:$0xff]
        %v2242 = vld [vmem:[%s343 + $0x310] sm:$0xff]
        %v2243 = vld [vmem:[%s343 + $0x318] sm:$0xff]
        %v2244 = vld [vmem:[%s343 + $0x320] sm:$0xff]
        %v2245 = vld [vmem:[%s343 + $0x328] sm:$0xff]
        %v2246 = vld [vmem:[%s343 + $0x330] sm:$0xff]
        %v2247 = vld [vmem:[%s343 + $0x338] sm:$0xff]
        %v2248 = vld [vmem:[%s343 + $0x340] sm:$0xff]
        %v2249 = vld [vmem:[%s343 + $0x348] sm:$0xff]
        %v2250 = vld [vmem:[%s343 + $0x350] sm:$0xff]
        %v2251 = vld [vmem:[%s343 + $0x358] sm:$0xff]
        %v2252 = vld [vmem:[%s343 + $0x360] sm:$0xff]
        %v2253 = vld [vmem:[%s343 + $0x368] sm:$0xff]
        %v2254 = vld [vmem:[%s343 + $0x370] sm:$0xff]
        %v2255 = vld [vmem:[%s343 + $0x378] sm:$0xff]
        %v2256 = vld [vmem:[%s343 + $0x380] sm:$0xff]
        %v2257 = vld [vmem:[%s343 + $0x388] sm:$0xff]
        %v2258 = vld [vmem:[%s343 + $0x390] sm:$0xff]
        %v2259 = vld [vmem:[%s343 + $0x398] sm:$0xff]
        %v2260 = vld [vmem:[%s343 + $0x3a0] sm:$0xff]
        %v2261 = vld [vmem:[%s343 + $0x3a8] sm:$0xff]
        %v2262 = vld [vmem:[%s343 + $0x3b0] sm:$0xff]
        %v2263 = vld [vmem:[%s343 + $0x3b8] sm:$0xff]
        %v2264 = vld [vmem:[%s343 + $0x3c0] sm:$0xff]
        %v2265 = vld [vmem:[%s343 + $0x3c8] sm:$0xff]
        %v2266 = vld [vmem:[%s343 + $0x3d0] sm:$0xff]
        %v2267 = vld [vmem:[%s343 + $0x3d8] sm:$0xff]
        %v2268 = vld [vmem:[%s343 + $0x3e0] sm:$0xff]
        %v2269 = vld [vmem:[%s343 + $0x3e8] sm:$0xff]
        %v2270 = vld [vmem:[%s343 + $0x3f0] sm:$0xff]
        %v2271 = vld [vmem:[%s343 + $0x3f8] sm:$0xff]
        %v2272 = vld [vmem:[%s343 + $0x400] sm:$0xff]
        %v2273 = vld [vmem:[%s343 + $0x408] sm:$0xff]
        %v2274 = vld [vmem:[%s343 + $0x410] sm:$0xff]
        %v2275 = vld [vmem:[%s343 + $0x418] sm:$0xff]
        %v2276 = vld [vmem:[%s343 + $0x420] sm:$0xff]
        %v2277 = vld [vmem:[%s343 + $0x428] sm:$0xff]
        %v2278 = vld [vmem:[%s343 + $0x430] sm:$0xff]
        %v2279 = vld [vmem:[%s343 + $0x438] sm:$0xff]
        %v2280 = vld [vmem:[%s343 + $0x440] sm:$0xff]
        %v2281 = vld [vmem:[%s343 + $0x448] sm:$0xff]
        %v2282 = vld [vmem:[%s343 + $0x450] sm:$0xff]
        %v2283 = vld [vmem:[%s343 + $0x458] sm:$0xff]
        %v2284 = vld [vmem:[%s343 + $0x460] sm:$0xff]
        %v2285 = vld [vmem:[%s343 + $0x468] sm:$0xff]
        %v2286 = vld [vmem:[%s343 + $0x470] sm:$0xff]
        %v2287 = vld [vmem:[%s343 + $0x478] sm:$0xff]
        %v2288 = vld [vmem:[%s343 + $0x480] sm:$0xff]
        %v2289 = vld [vmem:[%s343 + $0x488] sm:$0xff]
        %v2290 = vld [vmem:[%s343 + $0x490] sm:$0xff]
        %v2291 = vld [vmem:[%s343 + $0x498] sm:$0xff]
        %v2292 = vld [vmem:[%s343 + $0x4a0] sm:$0xff]
        %v2293 = vld [vmem:[%s343 + $0x4a8] sm:$0xff]
        %v2294 = vld [vmem:[%s343 + $0x4b0] sm:$0xff]
        %v2295 = vld [vmem:[%s343 + $0x4b8] sm:$0xff]
        %v2296 = vld [vmem:[%s343 + $0x4c0] sm:$0xff]
        %v2297 = vld [vmem:[%s343 + $0x4c8] sm:$0xff]
        %v2298 = vld [vmem:[%s343 + $0x4d0] sm:$0xff]
        %v2299 = vld [vmem:[%s343 + $0x4d8] sm:$0xff]
        %v2300 = vld [vmem:[%s343 + $0x4e0] sm:$0xff]
        %v2301 = vld [vmem:[%s343 + $0x4e8] sm:$0xff]
        %v2302 = vld [vmem:[%s343 + $0x4f0] sm:$0xff]
        %v2303 = vld [vmem:[%s343 + $0x4f8] sm:$0xff]
        %v2304 = vld [vmem:[%s343 + $0x500] sm:$0xff]
        %v2305 = vld [vmem:[%s343 + $0x508] sm:$0xff]
        %v2306 = vld [vmem:[%s343 + $0x510] sm:$0xff]
        %v2307 = vld [vmem:[%s343 + $0x518] sm:$0xff]
        %v2308 = vld [vmem:[%s343 + $0x520] sm:$0xff]
        %v2309 = vld [vmem:[%s343 + $0x528] sm:$0xff]
        %v2310 = vld [vmem:[%s343 + $0x530] sm:$0xff]
        %v2311 = vld [vmem:[%s343 + $0x538] sm:$0xff]
        %v2312 = vld [vmem:[%s343 + $0x540] sm:$0xff]
        %v2313 = vld [vmem:[%s343 + $0x548] sm:$0xff]
        %v2314 = vld [vmem:[%s343 + $0x550] sm:$0xff]
        %v2315 = vld [vmem:[%s343 + $0x558] sm:$0xff]
        %v2316 = vld [vmem:[%s343 + $0x560] sm:$0xff]
        %v2317 = vld [vmem:[%s343 + $0x568] sm:$0xff]
        %v2318 = vld [vmem:[%s343 + $0x570] sm:$0xff]
        %v2319 = vld [vmem:[%s343 + $0x578] sm:$0xff]
        %v2320 = vld [vmem:[%s343 + $0x580] sm:$0xff]
        %v2321 = vld [vmem:[%s343 + $0x588] sm:$0xff]
        %v2322 = vld [vmem:[%s343 + $0x590] sm:$0xff]
        %v2323 = vld [vmem:[%s343 + $0x598] sm:$0xff]
        %v2324 = vld [vmem:[%s343 + $0x5a0] sm:$0xff]
        %v2325 = vld [vmem:[%s343 + $0x5a8] sm:$0xff]
        %v2326 = vld [vmem:[%s343 + $0x5b0] sm:$0xff]
        %v2327 = vld [vmem:[%s343 + $0x5b8] sm:$0xff]
        %v2328 = vld [vmem:[%s343 + $0x5c0] sm:$0xff]
        %v2329 = vld [vmem:[%s343 + $0x5c8] sm:$0xff]
        %v2330 = vld [vmem:[%s343 + $0x5d0] sm:$0xff]
        %v2331 = vld [vmem:[%s343 + $0x5d8] sm:$0xff]
        %v2332 = vld [vmem:[%s343 + $0x5e0] sm:$0xff]
        %v2333 = vld [vmem:[%s343 + $0x5e8] sm:$0xff]
        %v2334 = vld [vmem:[%s343 + $0x5f0] sm:$0xff]
        %v2335 = vld [vmem:[%s343 + $0x5f8] sm:$0xff]
        %v2336 = vld [vmem:[%s343 + $0x600] sm:$0xff]
        %v2337 = vld [vmem:[%s343 + $0x608] sm:$0xff]
        %v2338 = vld [vmem:[%s343 + $0x610] sm:$0xff]
        %v2339 = vld [vmem:[%s343 + $0x618] sm:$0xff]
        %v2340 = vld [vmem:[%s343 + $0x620] sm:$0xff]
        %v2341 = vld [vmem:[%s343 + $0x628] sm:$0xff]
        %v2342 = vld [vmem:[%s343 + $0x630] sm:$0xff]
        %v2343 = vld [vmem:[%s343 + $0x638] sm:$0xff]
        %v2344 = vld [vmem:[%s343 + $0x640] sm:$0xff]
        %v2345 = vld [vmem:[%s343 + $0x648] sm:$0xff]
        %v2346 = vld [vmem:[%s343 + $0x650] sm:$0xff]
        %v2347 = vld [vmem:[%s343 + $0x658] sm:$0xff]
        %v2348 = vld [vmem:[%s343 + $0x660] sm:$0xff]
        %v2349 = vld [vmem:[%s343 + $0x668] sm:$0xff]
        %v2350 = vld [vmem:[%s343 + $0x670] sm:$0xff]
        %v2351 = vld [vmem:[%s343 + $0x678] sm:$0xff]
        %v2352 = vld [vmem:[%s343 + $0x680] sm:$0xff]
        %v2353 = vld [vmem:[%s343 + $0x688] sm:$0xff]
        %v2354 = vld [vmem:[%s343 + $0x690] sm:$0xff]
        %v2355 = vld [vmem:[%s343 + $0x698] sm:$0xff]
        %v2356 = vld [vmem:[%s343 + $0x6a0] sm:$0xff]
        %v2357 = vld [vmem:[%s343 + $0x6a8] sm:$0xff]
        %v2358 = vld [vmem:[%s343 + $0x6b0] sm:$0xff]
        %v2359 = vld [vmem:[%s343 + $0x6b8] sm:$0xff]
        %v2360 = vld [vmem:[%s343 + $0x6c0] sm:$0xff]
        %v2361 = vld [vmem:[%s343 + $0x6c8] sm:$0xff]
        %v2362 = vld [vmem:[%s343 + $0x6d0] sm:$0xff]
        %v2363 = vld [vmem:[%s343 + $0x6d8] sm:$0xff]
        %v2364 = vld [vmem:[%s343 + $0x6e0] sm:$0xff]
        %v2365 = vld [vmem:[%s343 + $0x6e8] sm:$0xff]
        %v2366 = vld [vmem:[%s343 + $0x6f0] sm:$0xff]
        %v2367 = vld [vmem:[%s343 + $0x6f8] sm:$0xff]
        %v2368 = vld [vmem:[%s343 + $0x700] sm:$0xff]
        %v2369 = vld [vmem:[%s343 + $0x708] sm:$0xff]
        %v2370 = vld [vmem:[%s343 + $0x710] sm:$0xff]
        %v2371 = vld [vmem:[%s343 + $0x718] sm:$0xff]
        %v2372 = vld [vmem:[%s343 + $0x720] sm:$0xff]
        %v2373 = vld [vmem:[%s343 + $0x728] sm:$0xff]
        %v2374 = vld [vmem:[%s343 + $0x730] sm:$0xff]
        %v2375 = vld [vmem:[%s343 + $0x738] sm:$0xff]
        %v2376 = vld [vmem:[%s343 + $0x740] sm:$0xff]
        %v2377 = vld [vmem:[%s343 + $0x748] sm:$0xff]
        %v2378 = vld [vmem:[%s343 + $0x750] sm:$0xff]
        %v2379 = vld [vmem:[%s343 + $0x758] sm:$0xff]
        %v2380 = vld [vmem:[%s343 + $0x760] sm:$0xff]
        %v2381 = vld [vmem:[%s343 + $0x768] sm:$0xff]
        %v2382 = vld [vmem:[%s343 + $0x770] sm:$0xff]
        %v2383 = vld [vmem:[%s343 + $0x778] sm:$0xff]
        %v2384 = vld [vmem:[%s343 + $0x780] sm:$0xff]
        %v2385 = vld [vmem:[%s343 + $0x788] sm:$0xff]
        %v2386 = vld [vmem:[%s343 + $0x790] sm:$0xff]
        %v2387 = vld [vmem:[%s343 + $0x798] sm:$0xff]
        %v2388 = vld [vmem:[%s343 + $0x7a0] sm:$0xff]
        %v2389 = vld [vmem:[%s343 + $0x7a8] sm:$0xff]
        %v2390 = vld [vmem:[%s343 + $0x7b0] sm:$0xff]
        %v2391 = vld [vmem:[%s343 + $0x7b8] sm:$0xff]
        %v2392 = vld [vmem:[%s343 + $0x7c0] sm:$0xff]
        %v2393 = vld [vmem:[%s343 + $0x7c8] sm:$0xff]
        %v2394 = vld [vmem:[%s343 + $0x7d0] sm:$0xff]
        %v2395 = vld [vmem:[%s343 + $0x7d8] sm:$0xff]
        %v2396 = vld [vmem:[%s343 + $0x7e0] sm:$0xff]
        %v2397 = vld [vmem:[%s343 + $0x7e8] sm:$0xff]
        %v2398 = vld [vmem:[%s343 + $0x7f0] sm:$0xff]
        %v2399 = vld [vmem:[%s343 + $0x7f8] sm:$0xff]
        %v2400 = vld [vmem:[%s343 + $0x800] sm:$0xff]
        %v2401 = vld [vmem:[%s343 + $0x808] sm:$0xff]
        %v2402 = vld [vmem:[%s343 + $0x810] sm:$0xff]
        %v2403 = vld [vmem:[%s343 + $0x818] sm:$0xff]
        %v2404 = vld [vmem:[%s343 + $0x820] sm:$0xff]
        %v2405 = vld [vmem:[%s343 + $0x828] sm:$0xff]
        %v2406 = vld [vmem:[%s343 + $0x830] sm:$0xff]
        %v2407 = vld [vmem:[%s343 + $0x838] sm:$0xff]
        %v2408 = vld [vmem:[%s343 + $0x840] sm:$0xff]
        %v2409 = vld [vmem:[%s343 + $0x848] sm:$0xff]
        %v2410 = vld [vmem:[%s343 + $0x850] sm:$0xff]
        %v2411 = vld [vmem:[%s343 + $0x858] sm:$0xff]
        %v2412 = vld [vmem:[%s343 + $0x860] sm:$0xff]
        %v2413 = vld [vmem:[%s343 + $0x868] sm:$0xff]
        %v2414 = vld [vmem:[%s343 + $0x870] sm:$0xff]
        %v2415 = vld [vmem:[%s343 + $0x878] sm:$0xff]
        %v2416 = vld [vmem:[%s343 + $0x880] sm:$0xff]
        %v2417 = vld [vmem:[%s343 + $0x888] sm:$0xff]
        %v2418 = vld [vmem:[%s343 + $0x890] sm:$0xff]
        %v2419 = vld [vmem:[%s343 + $0x898] sm:$0xff]
        %v2420 = vld [vmem:[%s343 + $0x8a0] sm:$0xff]
        %v2421 = vld [vmem:[%s343 + $0x8a8] sm:$0xff]
        %v2422 = vld [vmem:[%s343 + $0x8b0] sm:$0xff]
        %v2423 = vld [vmem:[%s343 + $0x8b8] sm:$0xff]
        %v2424 = vld [vmem:[%s343 + $0x8c0] sm:$0xff]
        %v2425 = vld [vmem:[%s343 + $0x8c8] sm:$0xff]
        %v2426 = vld [vmem:[%s343 + $0x8d0] sm:$0xff]
        %v2427 = vld [vmem:[%s343 + $0x8d8] sm:$0xff]
        %v2428 = vld [vmem:[%s343 + $0x8e0] sm:$0xff]
        %v2429 = vld [vmem:[%s343 + $0x8e8] sm:$0xff]
        %v2430 = vld [vmem:[%s343 + $0x8f0] sm:$0xff]
        %v2431 = vld [vmem:[%s343 + $0x8f8] sm:$0xff]
        %v2432 = vld [vmem:[%s343 + $0x900] sm:$0xff]
        %v2433 = vld [vmem:[%s343 + $0x908] sm:$0xff]
        %v2434 = vld [vmem:[%s343 + $0x910] sm:$0xff]
        %v2435 = vld [vmem:[%s343 + $0x918] sm:$0xff]
        %v2436 = vld [vmem:[%s343 + $0x920] sm:$0xff]
        %v2437 = vld [vmem:[%s343 + $0x928] sm:$0xff]
        %v2438 = vld [vmem:[%s343 + $0x930] sm:$0xff]
        %v2439 = vld [vmem:[%s343 + $0x938] sm:$0xff]
        %v2440 = vld [vmem:[%s343 + $0x940] sm:$0xff]
        %v2441 = vld [vmem:[%s343 + $0x948] sm:$0xff]
        %v2442 = vld [vmem:[%s343 + $0x950] sm:$0xff]
        %v2443 = vld [vmem:[%s343 + $0x958] sm:$0xff]
        %v2444 = vld [vmem:[%s343 + $0x960] sm:$0xff]
        %v2445 = vld [vmem:[%s343 + $0x968] sm:$0xff]
        %v2446 = vld [vmem:[%s343 + $0x970] sm:$0xff]
        %v2447 = vld [vmem:[%s343 + $0x978] sm:$0xff]
        %v2448 = vld [vmem:[%s343 + $0x980] sm:$0xff]
        %v2449 = vld [vmem:[%s343 + $0x988] sm:$0xff]
        %v2450 = vld [vmem:[%s343 + $0x990] sm:$0xff]
        %v2451 = vld [vmem:[%s343 + $0x998] sm:$0xff]
        %v2452 = vld [vmem:[%s343 + $0x9a0] sm:$0xff]
        %v2453 = vld [vmem:[%s343 + $0x9a8] sm:$0xff]
        %v2454 = vld [vmem:[%s343 + $0x9b0] sm:$0xff]
        %v2455 = vld [vmem:[%s343 + $0x9b8] sm:$0xff]
        %v2456 = vld [vmem:[%s343 + $0x9c0] sm:$0xff]
        %v2457 = vld [vmem:[%s343 + $0x9c8] sm:$0xff]
        %v2458 = vld [vmem:[%s343 + $0x9d0] sm:$0xff]
        %v2459 = vld [vmem:[%s343 + $0x9d8] sm:$0xff]
        %v2460 = vld [vmem:[%s343 + $0x9e0] sm:$0xff]
        %v2461 = vld [vmem:[%s343 + $0x9e8] sm:$0xff]
        %v2462 = vld [vmem:[%s343 + $0x9f0] sm:$0xff]
        %v2463 = vld [vmem:[%s343 + $0x9f8] sm:$0xff]
        %v2464 = vld [vmem:[%s343 + $0xa00] sm:$0xff]
        %v2465 = vld [vmem:[%s343 + $0xa08] sm:$0xff]
        %v2466 = vld [vmem:[%s343 + $0xa10] sm:$0xff]
        %v2467 = vld [vmem:[%s343 + $0xa18] sm:$0xff]
        %v2468 = vld [vmem:[%s343 + $0xa20] sm:$0xff]
        %v2469 = vld [vmem:[%s343 + $0xa28] sm:$0xff]
        %v2470 = vld [vmem:[%s343 + $0xa30] sm:$0xff]
        %v2471 = vld [vmem:[%s343 + $0xa38] sm:$0xff]
        %v2472 = vld [vmem:[%s343 + $0xa40] sm:$0xff]
        %v2473 = vld [vmem:[%s343 + $0xa48] sm:$0xff]
        %v2474 = vld [vmem:[%s343 + $0xa50] sm:$0xff]
        %v2475 = vld [vmem:[%s343 + $0xa58] sm:$0xff]
        %v2476 = vld [vmem:[%s343 + $0xa60] sm:$0xff]
        %v2477 = vld [vmem:[%s343 + $0xa68] sm:$0xff]
        %v2478 = vld [vmem:[%s343 + $0xa70] sm:$0xff]
        %v2479 = vld [vmem:[%s343 + $0xa78] sm:$0xff]
        %v2480 = vld [vmem:[%s343 + $0xa80] sm:$0xff]
        %v2481 = vld [vmem:[%s343 + $0xa88] sm:$0xff]
        %v2482 = vld [vmem:[%s343 + $0xa90] sm:$0xff]
        %v2483 = vld [vmem:[%s343 + $0xa98] sm:$0xff]
        %v2484 = vld [vmem:[%s343 + $0xaa0] sm:$0xff]
        %v2485 = vld [vmem:[%s343 + $0xaa8] sm:$0xff]
        %v2486 = vld [vmem:[%s343 + $0xab0] sm:$0xff]
        %v2487 = vld [vmem:[%s343 + $0xab8] sm:$0xff]
        %v2488 = vld [vmem:[%s343 + $0xac0] sm:$0xff]
        %v2489 = vld [vmem:[%s343 + $0xac8] sm:$0xff]
        %v2490 = vld [vmem:[%s343 + $0xad0] sm:$0xff]
        %v2491 = vld [vmem:[%s343 + $0xad8] sm:$0xff]
        %v2492 = vld [vmem:[%s343 + $0xae0] sm:$0xff]
        %v2493 = vld [vmem:[%s343 + $0xae8] sm:$0xff]
        %v2494 = vld [vmem:[%s343 + $0xaf0] sm:$0xff]
        %v2495 = vld [vmem:[%s343 + $0xaf8] sm:$0xff]
        %v2496 = vld [vmem:[%s343 + $0xb00] sm:$0xff]
        %v2497 = vld [vmem:[%s343 + $0xb08] sm:$0xff]
        %v2498 = vld [vmem:[%s343 + $0xb10] sm:$0xff]
        %v2499 = vld [vmem:[%s343 + $0xb18] sm:$0xff]
        %v2500 = vld [vmem:[%s343 + $0xb20] sm:$0xff]
        %v2501 = vld [vmem:[%s343 + $0xb28] sm:$0xff]
        %v2502 = vld [vmem:[%s343 + $0xb30] sm:$0xff]
        %v2503 = vld [vmem:[%s343 + $0xb38] sm:$0xff]
        %v2504 = vld [vmem:[%s343 + $0xb40] sm:$0xff]
        %v2505 = vld [vmem:[%s343 + $0xb48] sm:$0xff]
        %v2506 = vld [vmem:[%s343 + $0xb50] sm:$0xff]
        %v2507 = vld [vmem:[%s343 + $0xb58] sm:$0xff]
        %v2508 = vld [vmem:[%s343 + $0xb60] sm:$0xff]
        %v2509 = vld [vmem:[%s343 + $0xb68] sm:$0xff]
        %v2510 = vld [vmem:[%s343 + $0xb70] sm:$0xff]
        %v2511 = vld [vmem:[%s343 + $0xb78] sm:$0xff]
        %v2512 = vld [vmem:[%s343 + $0xb80] sm:$0xff]
        %v2513 = vld [vmem:[%s343 + $0xb88] sm:$0xff]
        %v2514 = vld [vmem:[%s343 + $0xb90] sm:$0xff]
        %v2515 = vld [vmem:[%s343 + $0xb98] sm:$0xff]
        %v2516 = vld [vmem:[%s343 + $0xba0] sm:$0xff]
        %v2517 = vld [vmem:[%s343 + $0xba8] sm:$0xff]
        %v2518 = vld [vmem:[%s343 + $0xbb0] sm:$0xff]
        %v2519 = vld [vmem:[%s343 + $0xbb8] sm:$0xff]
        %v2520 = vld [vmem:[%s343 + $0xbc0] sm:$0xff]
        %v2521 = vld [vmem:[%s343 + $0xbc8] sm:$0xff]
        %v2522 = vld [vmem:[%s343 + $0xbd0] sm:$0xff]
        %v2523 = vld [vmem:[%s343 + $0xbd8] sm:$0xff]
        %v2524 = vld [vmem:[%s343 + $0xbe0] sm:$0xff]
        %v2525 = vld [vmem:[%s343 + $0xbe8] sm:$0xff]
        %v2526 = vld [vmem:[%s343 + $0xbf0] sm:$0xff]
        %v2527 = vld [vmem:[%s343 + $0xbf8] sm:$0xff]
        %v2528 = vld [vmem:[%s343 + $0xc00] sm:$0xff]
        %v2529 = vld [vmem:[%s343 + $0xc08] sm:$0xff]
        %v2530 = vld [vmem:[%s343 + $0xc10] sm:$0xff]
        %v2531 = vld [vmem:[%s343 + $0xc18] sm:$0xff]
        %v2532 = vld [vmem:[%s343 + $0xc20] sm:$0xff]
        %v2533 = vld [vmem:[%s343 + $0xc28] sm:$0xff]
        %v2534 = vld [vmem:[%s343 + $0xc30] sm:$0xff]
        %v2535 = vld [vmem:[%s343 + $0xc38] sm:$0xff]
        %v2536 = vld [vmem:[%s343 + $0xc40] sm:$0xff]
        %v2537 = vld [vmem:[%s343 + $0xc48] sm:$0xff]
        %v2538 = vld [vmem:[%s343 + $0xc50] sm:$0xff]
        %v2539 = vld [vmem:[%s343 + $0xc58] sm:$0xff]
        %v2540 = vld [vmem:[%s343 + $0xc60] sm:$0xff]
        %v2541 = vld [vmem:[%s343 + $0xc68] sm:$0xff]
        %v2542 = vld [vmem:[%s343 + $0xc70] sm:$0xff]
        %v2543 = vld [vmem:[%s343 + $0xc78] sm:$0xff]
        %v2544 = vld [vmem:[%s343 + $0xc80] sm:$0xff]
        %v2545 = vld [vmem:[%s343 + $0xc88] sm:$0xff]
        %v2546 = vld [vmem:[%s343 + $0xc90] sm:$0xff]
        %v2547 = vld [vmem:[%s343 + $0xc98] sm:$0xff]
        %v2548 = vld [vmem:[%s343 + $0xca0] sm:$0xff]
        %v2549 = vld [vmem:[%s343 + $0xca8] sm:$0xff]
        %v2550 = vld [vmem:[%s343 + $0xcb0] sm:$0xff]
        %v2551 = vld [vmem:[%s343 + $0xcb8] sm:$0xff]
        %v2552 = vld [vmem:[%s343 + $0xcc0] sm:$0xff]
        %v2553 = vld [vmem:[%s343 + $0xcc8] sm:$0xff]
        %v2554 = vld [vmem:[%s343 + $0xcd0] sm:$0xff]
        %v2555 = vld [vmem:[%s343 + $0xcd8] sm:$0xff]
        %v2556 = vld [vmem:[%s343 + $0xce0] sm:$0xff]
        %v2557 = vld [vmem:[%s343 + $0xce8] sm:$0xff]
        %v2558 = vld [vmem:[%s343 + $0xcf0] sm:$0xff]
        %v2559 = vld [vmem:[%s343 + $0xcf8] sm:$0xff]
        %v2560 = vld [vmem:[%s343 + $0xd00] sm:$0xff]
        %v2561 = vld [vmem:[%s343 + $0xd08] sm:$0xff]
        %v2562 = vld [vmem:[%s343 + $0xd10] sm:$0xff]
        %v2563 = vld [vmem:[%s343 + $0xd18] sm:$0xff]
        %v2564 = vld [vmem:[%s343 + $0xd20] sm:$0xff]
        %v2565 = vld [vmem:[%s343 + $0xd28] sm:$0xff]
        %v2566 = vld [vmem:[%s343 + $0xd30] sm:$0xff]
        %v2567 = vld [vmem:[%s343 + $0xd38] sm:$0xff]
        %v2568 = vld [vmem:[%s343 + $0xd40] sm:$0xff]
        %v2569 = vld [vmem:[%s343 + $0xd48] sm:$0xff]
        %v2570 = vld [vmem:[%s343 + $0xd50] sm:$0xff]
        %v2571 = vld [vmem:[%s343 + $0xd58] sm:$0xff]
        %v2572 = vld [vmem:[%s343 + $0xd60] sm:$0xff]
        %v2573 = vld [vmem:[%s343 + $0xd68] sm:$0xff]
        %v2574 = vld [vmem:[%s343 + $0xd70] sm:$0xff]
        %v2575 = vld [vmem:[%s343 + $0xd78] sm:$0xff]
        %v2576 = vld [vmem:[%s343 + $0xd80] sm:$0xff]
        %v2577 = vld [vmem:[%s343 + $0xd88] sm:$0xff]
        %v2578 = vld [vmem:[%s343 + $0xd90] sm:$0xff]
        %v2579 = vld [vmem:[%s343 + $0xd98] sm:$0xff]
        %v2580 = vld [vmem:[%s343 + $0xda0] sm:$0xff]
        %v2581 = vld [vmem:[%s343 + $0xda8] sm:$0xff]
        %v2582 = vld [vmem:[%s343 + $0xdb0] sm:$0xff]
        %v2583 = vld [vmem:[%s343 + $0xdb8] sm:$0xff]
        %v2584 = vld [vmem:[%s343 + $0xdc0] sm:$0xff]
        %v2585 = vld [vmem:[%s343 + $0xdc8] sm:$0xff]
        %v2586 = vld [vmem:[%s343 + $0xdd0] sm:$0xff]
        %v2587 = vld [vmem:[%s343 + $0xdd8] sm:$0xff]
        %v2588 = vld [vmem:[%s343 + $0xde0] sm:$0xff]
        %v2589 = vld [vmem:[%s343 + $0xde8] sm:$0xff]
        %v2590 = vld [vmem:[%s343 + $0xdf0] sm:$0xff]
        %v2591 = vld [vmem:[%s343 + $0xdf8] sm:$0xff]
        %v2592 = vld [vmem:[%s343 + $0xe00] sm:$0xff]
        %v2593 = vld [vmem:[%s343 + $0xe08] sm:$0xff]
        %v2594 = vld [vmem:[%s343 + $0xe10] sm:$0xff]
        %v2595 = vld [vmem:[%s343 + $0xe18] sm:$0xff]
        %v2596 = vld [vmem:[%s343 + $0xe20] sm:$0xff]
        %v2597 = vld [vmem:[%s343 + $0xe28] sm:$0xff]
        %v2598 = vld [vmem:[%s343 + $0xe30] sm:$0xff]
        %v2599 = vld [vmem:[%s343 + $0xe38] sm:$0xff]
        %v2600 = vld [vmem:[%s343 + $0xe40] sm:$0xff]
        %v2601 = vld [vmem:[%s343 + $0xe48] sm:$0xff]
        %v2602 = vld [vmem:[%s343 + $0xe50] sm:$0xff]
        %v2603 = vld [vmem:[%s343 + $0xe58] sm:$0xff]
        %v2604 = vld [vmem:[%s343 + $0xe60] sm:$0xff]
        %v2605 = vld [vmem:[%s343 + $0xe68] sm:$0xff]
        %v2606 = vld [vmem:[%s343 + $0xe70] sm:$0xff]
        %v2607 = vld [vmem:[%s343 + $0xe78] sm:$0xff]
        %v2608 = vld [vmem:[%s343 + $0xe80] sm:$0xff]
        %v2609 = vld [vmem:[%s343 + $0xe88] sm:$0xff]
        %v2610 = vld [vmem:[%s343 + $0xe90] sm:$0xff]
        %v2611 = vld [vmem:[%s343 + $0xe98] sm:$0xff]
        %v2612 = vld [vmem:[%s343 + $0xea0] sm:$0xff]
        %v2613 = vld [vmem:[%s343 + $0xea8] sm:$0xff]
        %v2614 = vld [vmem:[%s343 + $0xeb0] sm:$0xff]
        %v2615 = vld [vmem:[%s343 + $0xeb8] sm:$0xff]
        %v2616 = vld [vmem:[%s343 + $0xec0] sm:$0xff]
        %v2617 = vld [vmem:[%s343 + $0xec8] sm:$0xff]
        %v2618 = vld [vmem:[%s343 + $0xed0] sm:$0xff]
        %v2619 = vld [vmem:[%s343 + $0xed8] sm:$0xff]
        %v2620 = vld [vmem:[%s343 + $0xee0] sm:$0xff]
        %v2621 = vld [vmem:[%s343 + $0xee8] sm:$0xff]
        %v2622 = vld [vmem:[%s343 + $0xef0] sm:$0xff]
        %v2623 = vld [vmem:[%s343 + $0xef8] sm:$0xff]
        %v2624 = vld [vmem:[%s343 + $0xf00] sm:$0xff]
        %v2625 = vld [vmem:[%s343 + $0xf08] sm:$0xff]
        %v2626 = vld [vmem:[%s343 + $0xf10] sm:$0xff]
        %v2627 = vld [vmem:[%s343 + $0xf18] sm:$0xff]
        %v2628 = vld [vmem:[%s343 + $0xf20] sm:$0xff]
        %v2629 = vld [vmem:[%s343 + $0xf28] sm:$0xff]
        %v2630 = vld [vmem:[%s343 + $0xf30] sm:$0xff]
        %v2631 = vld [vmem:[%s343 + $0xf38] sm:$0xff]
        %v2632 = vld [vmem:[%s343 + $0xf40] sm:$0xff]
        %v2633 = vld [vmem:[%s343 + $0xf48] sm:$0xff]
        %v2634 = vld [vmem:[%s343 + $0xf50] sm:$0xff]
        %v2635 = vld [vmem:[%s343 + $0xf58] sm:$0xff]
        %v2636 = vld [vmem:[%s343 + $0xf60] sm:$0xff]
        %v2637 = vld [vmem:[%s343 + $0xf68] sm:$0xff]
        %v2638 = vld [vmem:[%s343 + $0xf70] sm:$0xff]
        %v2639 = vld [vmem:[%s343 + $0xf78] sm:$0xff]
        %v2640 = vld [vmem:[%s343 + $0xf80] sm:$0xff]
        %v2641 = vld [vmem:[%s343 + $0xf88] sm:$0xff]
        %v2642 = vld [vmem:[%s343 + $0xf90] sm:$0xff]
        %v2643 = vld [vmem:[%s343 + $0xf98] sm:$0xff]
        %v2644 = vld [vmem:[%s343 + $0xfa0] sm:$0xff]
        %v2645 = vld [vmem:[%s343 + $0xfa8] sm:$0xff]
        %v2646 = vld [vmem:[%s343 + $0xfb0] sm:$0xff]
        %v2647 = vld [vmem:[%s343 + $0xfb8] sm:$0xff]
        %v2648 = vld [vmem:[%s343 + $0xfc0] sm:$0xff]
        %v2649 = vld [vmem:[%s343 + $0xfc8] sm:$0xff]
        %v2650 = vld [vmem:[%s343 + $0xfd0] sm:$0xff]
        %v2651 = vld [vmem:[%s343 + $0xfd8] sm:$0xff]
        %v2652 = vld [vmem:[%s343 + $0xfe0] sm:$0xff]
        %v2653 = vld [vmem:[%s343 + $0xfe8] sm:$0xff]
        %v2654 = vld [vmem:[%s343 + $0xff0] sm:$0xff]
        %v2655 = vld [vmem:[%s343 + $0xff8] sm:$0xff]
        %v3168 = vunpack.c.l.b16 %v2144
        %v3169 = vunpack.c.h.b16 %v2144
        %v3170 = vunpack.c.l.b16 %v2145
        %v3171 = vunpack.c.h.b16 %v2145
        %v3172 = vunpack.c.l.b16 %v2146
        %v3173 = vunpack.c.h.b16 %v2146
        %v3174 = vunpack.c.l.b16 %v2147
        %v3175 = vunpack.c.h.b16 %v2147
        %v3176 = vunpack.c.l.b16 %v2148
        %v3177 = vunpack.c.h.b16 %v2148
        %v3178 = vunpack.c.l.b16 %v2149
        %v3179 = vunpack.c.h.b16 %v2149
        %v3180 = vunpack.c.l.b16 %v2150
        %v3181 = vunpack.c.h.b16 %v2150
        %v3182 = vunpack.c.l.b16 %v2151
        %v3183 = vunpack.c.h.b16 %v2151
        %v3184 = vunpack.c.l.b16 %v2152
        %v3185 = vunpack.c.h.b16 %v2152
        %v3186 = vunpack.c.l.b16 %v2153
        %v3187 = vunpack.c.h.b16 %v2153
        %v3188 = vunpack.c.l.b16 %v2154
        %v3189 = vunpack.c.h.b16 %v2154
        %v3190 = vunpack.c.l.b16 %v2155
        %v3191 = vunpack.c.h.b16 %v2155
        %v3192 = vunpack.c.l.b16 %v2156
        %v3193 = vunpack.c.h.b16 %v2156
        %v3194 = vunpack.c.l.b16 %v2157
        %v3195 = vunpack.c.h.b16 %v2157
        %v3196 = vunpack.c.l.b16 %v2158
        %v3197 = vunpack.c.h.b16 %v2158
        %v3198 = vunpack.c.l.b16 %v2159
        %v3199 = vunpack.c.h.b16 %v2159
        %v3200 = vunpack.c.l.b16 %v2160
        %v3201 = vunpack.c.h.b16 %v2160
        %v3202 = vunpack.c.l.b16 %v2161
        %v3203 = vunpack.c.h.b16 %v2161
        %v3204 = vunpack.c.l.b16 %v2162
        %v3205 = vunpack.c.h.b16 %v2162
        %v3206 = vunpack.c.l.b16 %v2163
        %v3207 = vunpack.c.h.b16 %v2163
        %v3208 = vunpack.c.l.b16 %v2164
        %v3209 = vunpack.c.h.b16 %v2164
        %v3210 = vunpack.c.l.b16 %v2165
        %v3211 = vunpack.c.h.b16 %v2165
        %v3212 = vunpack.c.l.b16 %v2166
        %v3213 = vunpack.c.h.b16 %v2166
        %v3214 = vunpack.c.l.b16 %v2167
        %v3215 = vunpack.c.h.b16 %v2167
        %v3216 = vunpack.c.l.b16 %v2168
        %v3217 = vunpack.c.h.b16 %v2168
        %v3218 = vunpack.c.l.b16 %v2169
        %v3219 = vunpack.c.h.b16 %v2169
        %v3220 = vunpack.c.l.b16 %v2170
        %v3221 = vunpack.c.h.b16 %v2170
        %v3222 = vunpack.c.l.b16 %v2171
        %v3223 = vunpack.c.h.b16 %v2171
        %v3224 = vunpack.c.l.b16 %v2172
        %v3225 = vunpack.c.h.b16 %v2172
        %v3226 = vunpack.c.l.b16 %v2173
        %v3227 = vunpack.c.h.b16 %v2173
        %v3228 = vunpack.c.l.b16 %v2174
        %v3229 = vunpack.c.h.b16 %v2174
        %v3230 = vunpack.c.l.b16 %v2175
        %v3231 = vunpack.c.h.b16 %v2175
        %v3232 = vunpack.c.l.b16 %v2176
        %v3233 = vunpack.c.h.b16 %v2176
        %v3234 = vunpack.c.l.b16 %v2177
        %v3235 = vunpack.c.h.b16 %v2177
        %v3236 = vunpack.c.l.b16 %v2178
        %v3237 = vunpack.c.h.b16 %v2178
        %v3238 = vunpack.c.l.b16 %v2179
        %v3239 = vunpack.c.h.b16 %v2179
        %v3240 = vunpack.c.l.b16 %v2180
        %v3241 = vunpack.c.h.b16 %v2180
        %v3242 = vunpack.c.l.b16 %v2181
        %v3243 = vunpack.c.h.b16 %v2181
        %v3244 = vunpack.c.l.b16 %v2182
        %v3245 = vunpack.c.h.b16 %v2182
        %v3246 = vunpack.c.l.b16 %v2183
        %v3247 = vunpack.c.h.b16 %v2183
        %v3248 = vunpack.c.l.b16 %v2184
        %v3249 = vunpack.c.h.b16 %v2184
        %v3250 = vunpack.c.l.b16 %v2185
        %v3251 = vunpack.c.h.b16 %v2185
        %v3252 = vunpack.c.l.b16 %v2186
        %v3253 = vunpack.c.h.b16 %v2186
        %v3254 = vunpack.c.l.b16 %v2187
        %v3255 = vunpack.c.h.b16 %v2187
        %v3256 = vunpack.c.l.b16 %v2188
        %v3257 = vunpack.c.h.b16 %v2188
        %v3258 = vunpack.c.l.b16 %v2189
        %v3259 = vunpack.c.h.b16 %v2189
        %v3260 = vunpack.c.l.b16 %v2190
        %v3261 = vunpack.c.h.b16 %v2190
        %v3262 = vunpack.c.l.b16 %v2191
        %v3263 = vunpack.c.h.b16 %v2191
        %v3264 = vunpack.c.l.b16 %v2192
        %v3265 = vunpack.c.h.b16 %v2192
        %v3266 = vunpack.c.l.b16 %v2193
        %v3267 = vunpack.c.h.b16 %v2193
        %v3268 = vunpack.c.l.b16 %v2194
        %v3269 = vunpack.c.h.b16 %v2194
        %v3270 = vunpack.c.l.b16 %v2195
        %v3271 = vunpack.c.h.b16 %v2195
        %v3272 = vunpack.c.l.b16 %v2196
        %v3273 = vunpack.c.h.b16 %v2196
        %v3274 = vunpack.c.l.b16 %v2197
        %v3275 = vunpack.c.h.b16 %v2197
        %v3276 = vunpack.c.l.b16 %v2198
        %v3277 = vunpack.c.h.b16 %v2198
        %v3278 = vunpack.c.l.b16 %v2199
        %v3279 = vunpack.c.h.b16 %v2199
        %v3280 = vunpack.c.l.b16 %v2200
        %v3281 = vunpack.c.h.b16 %v2200
        %v3282 = vunpack.c.l.b16 %v2201
        %v3283 = vunpack.c.h.b16 %v2201
        %v3284 = vunpack.c.l.b16 %v2202
        %v3285 = vunpack.c.h.b16 %v2202
        %v3286 = vunpack.c.l.b16 %v2203
        %v3287 = vunpack.c.h.b16 %v2203
        %v3288 = vunpack.c.l.b16 %v2204
        %v3289 = vunpack.c.h.b16 %v2204
        %v3290 = vunpack.c.l.b16 %v2205
        %v3291 = vunpack.c.h.b16 %v2205
        %v3292 = vunpack.c.l.b16 %v2206
        %v3293 = vunpack.c.h.b16 %v2206
        %v3294 = vunpack.c.l.b16 %v2207
        %v3295 = vunpack.c.h.b16 %v2207
        %v3296 = vunpack.c.l.b16 %v2208
        %v3297 = vunpack.c.h.b16 %v2208
        %v3298 = vunpack.c.l.b16 %v2209
        %v3299 = vunpack.c.h.b16 %v2209
        %v3300 = vunpack.c.l.b16 %v2210
        %v3301 = vunpack.c.h.b16 %v2210
        %v3302 = vunpack.c.l.b16 %v2211
        %v3303 = vunpack.c.h.b16 %v2211
        %v3304 = vunpack.c.l.b16 %v2212
        %v3305 = vunpack.c.h.b16 %v2212
        %v3306 = vunpack.c.l.b16 %v2213
        %v3307 = vunpack.c.h.b16 %v2213
        %v3308 = vunpack.c.l.b16 %v2214
        %v3309 = vunpack.c.h.b16 %v2214
        %v3310 = vunpack.c.l.b16 %v2215
        %v3311 = vunpack.c.h.b16 %v2215
        %v3312 = vunpack.c.l.b16 %v2216
        %v3313 = vunpack.c.h.b16 %v2216
        %v3314 = vunpack.c.l.b16 %v2217
        %v3315 = vunpack.c.h.b16 %v2217
        %v3316 = vunpack.c.l.b16 %v2218
        %v3317 = vunpack.c.h.b16 %v2218
        %v3318 = vunpack.c.l.b16 %v2219
        %v3319 = vunpack.c.h.b16 %v2219
        %v3320 = vunpack.c.l.b16 %v2220
        %v3321 = vunpack.c.h.b16 %v2220
        %v3322 = vunpack.c.l.b16 %v2221
        %v3323 = vunpack.c.h.b16 %v2221
        %v3324 = vunpack.c.l.b16 %v2222
        %v3325 = vunpack.c.h.b16 %v2222
        %v3326 = vunpack.c.l.b16 %v2223
        %v3327 = vunpack.c.h.b16 %v2223
        %v3328 = vunpack.c.l.b16 %v2224
        %v3329 = vunpack.c.h.b16 %v2224
        %v3330 = vunpack.c.l.b16 %v2225
        %v3331 = vunpack.c.h.b16 %v2225
        %v3332 = vunpack.c.l.b16 %v2226
        %v3333 = vunpack.c.h.b16 %v2226
        %v3334 = vunpack.c.l.b16 %v2227
        %v3335 = vunpack.c.h.b16 %v2227
        %v3336 = vunpack.c.l.b16 %v2228
        %v3337 = vunpack.c.h.b16 %v2228
        %v3338 = vunpack.c.l.b16 %v2229
        %v3339 = vunpack.c.h.b16 %v2229
        %v3340 = vunpack.c.l.b16 %v2230
        %v3341 = vunpack.c.h.b16 %v2230
        %v3342 = vunpack.c.l.b16 %v2231
        %v3343 = vunpack.c.h.b16 %v2231
        %v3344 = vunpack.c.l.b16 %v2232
        %v3345 = vunpack.c.h.b16 %v2232
        %v3346 = vunpack.c.l.b16 %v2233
        %v3347 = vunpack.c.h.b16 %v2233
        %v3348 = vunpack.c.l.b16 %v2234
        %v3349 = vunpack.c.h.b16 %v2234
        %v3350 = vunpack.c.l.b16 %v2235
        %v3351 = vunpack.c.h.b16 %v2235
        %v3352 = vunpack.c.l.b16 %v2236
        %v3353 = vunpack.c.h.b16 %v2236
        %v3354 = vunpack.c.l.b16 %v2237
        %v3355 = vunpack.c.h.b16 %v2237
        %v3356 = vunpack.c.l.b16 %v2238
        %v3357 = vunpack.c.h.b16 %v2238
        %v3358 = vunpack.c.l.b16 %v2239
        %v3359 = vunpack.c.h.b16 %v2239
        %v3360 = vunpack.c.l.b16 %v2240
        %v3361 = vunpack.c.h.b16 %v2240
        %v3362 = vunpack.c.l.b16 %v2241
        %v3363 = vunpack.c.h.b16 %v2241
        %v3364 = vunpack.c.l.b16 %v2242
        %v3365 = vunpack.c.h.b16 %v2242
        %v3366 = vunpack.c.l.b16 %v2243
        %v3367 = vunpack.c.h.b16 %v2243
        %v3368 = vunpack.c.l.b16 %v2244
        %v3369 = vunpack.c.h.b16 %v2244
        %v3370 = vunpack.c.l.b16 %v2245
        %v3371 = vunpack.c.h.b16 %v2245
        %v3372 = vunpack.c.l.b16 %v2246
        %v3373 = vunpack.c.h.b16 %v2246
        %v3374 = vunpack.c.l.b16 %v2247
        %v3375 = vunpack.c.h.b16 %v2247
        %v3376 = vunpack.c.l.b16 %v2248
        %v3377 = vunpack.c.h.b16 %v2248
        %v3378 = vunpack.c.l.b16 %v2249
        %v3379 = vunpack.c.h.b16 %v2249
        %v3380 = vunpack.c.l.b16 %v2250
        %v3381 = vunpack.c.h.b16 %v2250
        %v3382 = vunpack.c.l.b16 %v2251
        %v3383 = vunpack.c.h.b16 %v2251
        %v3384 = vunpack.c.l.b16 %v2252
        %v3385 = vunpack.c.h.b16 %v2252
        %v3386 = vunpack.c.l.b16 %v2253
        %v3387 = vunpack.c.h.b16 %v2253
        %v3388 = vunpack.c.l.b16 %v2254
        %v3389 = vunpack.c.h.b16 %v2254
        %v3390 = vunpack.c.l.b16 %v2255
        %v3391 = vunpack.c.h.b16 %v2255
        %v3392 = vunpack.c.l.b16 %v2256
        %v3393 = vunpack.c.h.b16 %v2256
        %v3394 = vunpack.c.l.b16 %v2257
        %v3395 = vunpack.c.h.b16 %v2257
        %v3396 = vunpack.c.l.b16 %v2258
        %v3397 = vunpack.c.h.b16 %v2258
        %v3398 = vunpack.c.l.b16 %v2259
        %v3399 = vunpack.c.h.b16 %v2259
        %v3400 = vunpack.c.l.b16 %v2260
        %v3401 = vunpack.c.h.b16 %v2260
        %v3402 = vunpack.c.l.b16 %v2261
        %v3403 = vunpack.c.h.b16 %v2261
        %v3404 = vunpack.c.l.b16 %v2262
        %v3405 = vunpack.c.h.b16 %v2262
        %v3406 = vunpack.c.l.b16 %v2263
        %v3407 = vunpack.c.h.b16 %v2263
        %v3408 = vunpack.c.l.b16 %v2264
        %v3409 = vunpack.c.h.b16 %v2264
        %v3410 = vunpack.c.l.b16 %v2265
        %v3411 = vunpack.c.h.b16 %v2265
        %v3412 = vunpack.c.l.b16 %v2266
        %v3413 = vunpack.c.h.b16 %v2266
        %v3414 = vunpack.c.l.b16 %v2267
        %v3415 = vunpack.c.h.b16 %v2267
        %v3416 = vunpack.c.l.b16 %v2268
        %v3417 = vunpack.c.h.b16 %v2268
        %v3418 = vunpack.c.l.b16 %v2269
        %v3419 = vunpack.c.h.b16 %v2269
        %v3420 = vunpack.c.l.b16 %v2270
        %v3421 = vunpack.c.h.b16 %v2270
        %v3422 = vunpack.c.l.b16 %v2271
        %v3423 = vunpack.c.h.b16 %v2271
        %v3424 = vunpack.c.l.b16 %v2272
        %v3425 = vunpack.c.h.b16 %v2272
        %v3426 = vunpack.c.l.b16 %v2273
        %v3427 = vunpack.c.h.b16 %v2273
        %v3428 = vunpack.c.l.b16 %v2274
        %v3429 = vunpack.c.h.b16 %v2274
        %v3430 = vunpack.c.l.b16 %v2275
        %v3431 = vunpack.c.h.b16 %v2275
        %v3432 = vunpack.c.l.b16 %v2276
        %v3433 = vunpack.c.h.b16 %v2276
        %v3434 = vunpack.c.l.b16 %v2277
        %v3435 = vunpack.c.h.b16 %v2277
        %v3436 = vunpack.c.l.b16 %v2278
        %v3437 = vunpack.c.h.b16 %v2278
        %v3438 = vunpack.c.l.b16 %v2279
        %v3439 = vunpack.c.h.b16 %v2279
        %v3440 = vunpack.c.l.b16 %v2280
        %v3441 = vunpack.c.h.b16 %v2280
        %v3442 = vunpack.c.l.b16 %v2281
        %v3443 = vunpack.c.h.b16 %v2281
        %v3444 = vunpack.c.l.b16 %v2282
        %v3445 = vunpack.c.h.b16 %v2282
        %v3446 = vunpack.c.l.b16 %v2283
        %v3447 = vunpack.c.h.b16 %v2283
        %v3448 = vunpack.c.l.b16 %v2284
        %v3449 = vunpack.c.h.b16 %v2284
        %v3450 = vunpack.c.l.b16 %v2285
        %v3451 = vunpack.c.h.b16 %v2285
        %v3452 = vunpack.c.l.b16 %v2286
        %v3453 = vunpack.c.h.b16 %v2286
        %v3454 = vunpack.c.l.b16 %v2287
        %v3455 = vunpack.c.h.b16 %v2287
        %v3456 = vunpack.c.l.b16 %v2288
        %v3457 = vunpack.c.h.b16 %v2288
        %v3458 = vunpack.c.l.b16 %v2289
        %v3459 = vunpack.c.h.b16 %v2289
        %v3460 = vunpack.c.l.b16 %v2290
        %v3461 = vunpack.c.h.b16 %v2290
        %v3462 = vunpack.c.l.b16 %v2291
        %v3463 = vunpack.c.h.b16 %v2291
        %v3464 = vunpack.c.l.b16 %v2292
        %v3465 = vunpack.c.h.b16 %v2292
        %v3466 = vunpack.c.l.b16 %v2293
        %v3467 = vunpack.c.h.b16 %v2293
        %v3468 = vunpack.c.l.b16 %v2294
        %v3469 = vunpack.c.h.b16 %v2294
        %v3470 = vunpack.c.l.b16 %v2295
        %v3471 = vunpack.c.h.b16 %v2295
        %v3472 = vunpack.c.l.b16 %v2296
        %v3473 = vunpack.c.h.b16 %v2296
        %v3474 = vunpack.c.l.b16 %v2297
        %v3475 = vunpack.c.h.b16 %v2297
        %v3476 = vunpack.c.l.b16 %v2298
        %v3477 = vunpack.c.h.b16 %v2298
        %v3478 = vunpack.c.l.b16 %v2299
        %v3479 = vunpack.c.h.b16 %v2299
        %v3480 = vunpack.c.l.b16 %v2300
        %v3481 = vunpack.c.h.b16 %v2300
        %v3482 = vunpack.c.l.b16 %v2301
        %v3483 = vunpack.c.h.b16 %v2301
        %v3484 = vunpack.c.l.b16 %v2302
        %v3485 = vunpack.c.h.b16 %v2302
        %v3486 = vunpack.c.l.b16 %v2303
        %v3487 = vunpack.c.h.b16 %v2303
        %v3488 = vunpack.c.l.b16 %v2304
        %v3489 = vunpack.c.h.b16 %v2304
        %v3490 = vunpack.c.l.b16 %v2305
        %v3491 = vunpack.c.h.b16 %v2305
        %v3492 = vunpack.c.l.b16 %v2306
        %v3493 = vunpack.c.h.b16 %v2306
        %v3494 = vunpack.c.l.b16 %v2307
        %v3495 = vunpack.c.h.b16 %v2307
        %v3496 = vunpack.c.l.b16 %v2308
        %v3497 = vunpack.c.h.b16 %v2308
        %v3498 = vunpack.c.l.b16 %v2309
        %v3499 = vunpack.c.h.b16 %v2309
        %v3500 = vunpack.c.l.b16 %v2310
        %v3501 = vunpack.c.h.b16 %v2310
        %v3502 = vunpack.c.l.b16 %v2311
        %v3503 = vunpack.c.h.b16 %v2311
        %v3504 = vunpack.c.l.b16 %v2312
        %v3505 = vunpack.c.h.b16 %v2312
        %v3506 = vunpack.c.l.b16 %v2313
        %v3507 = vunpack.c.h.b16 %v2313
        %v3508 = vunpack.c.l.b16 %v2314
        %v3509 = vunpack.c.h.b16 %v2314
        %v3510 = vunpack.c.l.b16 %v2315
        %v3511 = vunpack.c.h.b16 %v2315
        %v3512 = vunpack.c.l.b16 %v2316
        %v3513 = vunpack.c.h.b16 %v2316
        %v3514 = vunpack.c.l.b16 %v2317
        %v3515 = vunpack.c.h.b16 %v2317
        %v3516 = vunpack.c.l.b16 %v2318
        %v3517 = vunpack.c.h.b16 %v2318
        %v3518 = vunpack.c.l.b16 %v2319
        %v3519 = vunpack.c.h.b16 %v2319
        %v3520 = vunpack.c.l.b16 %v2320
        %v3521 = vunpack.c.h.b16 %v2320
        %v3522 = vunpack.c.l.b16 %v2321
        %v3523 = vunpack.c.h.b16 %v2321
        %v3524 = vunpack.c.l.b16 %v2322
        %v3525 = vunpack.c.h.b16 %v2322
        %v3526 = vunpack.c.l.b16 %v2323
        %v3527 = vunpack.c.h.b16 %v2323
        %v3528 = vunpack.c.l.b16 %v2324
        %v3529 = vunpack.c.h.b16 %v2324
        %v3530 = vunpack.c.l.b16 %v2325
        %v3531 = vunpack.c.h.b16 %v2325
        %v3532 = vunpack.c.l.b16 %v2326
        %v3533 = vunpack.c.h.b16 %v2326
        %v3534 = vunpack.c.l.b16 %v2327
        %v3535 = vunpack.c.h.b16 %v2327
        %v3536 = vunpack.c.l.b16 %v2328
        %v3537 = vunpack.c.h.b16 %v2328
        %v3538 = vunpack.c.l.b16 %v2329
        %v3539 = vunpack.c.h.b16 %v2329
        %v3540 = vunpack.c.l.b16 %v2330
        %v3541 = vunpack.c.h.b16 %v2330
        %v3542 = vunpack.c.l.b16 %v2331
        %v3543 = vunpack.c.h.b16 %v2331
        %v3544 = vunpack.c.l.b16 %v2332
        %v3545 = vunpack.c.h.b16 %v2332
        %v3546 = vunpack.c.l.b16 %v2333
        %v3547 = vunpack.c.h.b16 %v2333
        %v3548 = vunpack.c.l.b16 %v2334
        %v3549 = vunpack.c.h.b16 %v2334
        %v3550 = vunpack.c.l.b16 %v2335
        %v3551 = vunpack.c.h.b16 %v2335
        %v3552 = vunpack.c.l.b16 %v2336
        %v3553 = vunpack.c.h.b16 %v2336
        %v3554 = vunpack.c.l.b16 %v2337
        %v3555 = vunpack.c.h.b16 %v2337
        %v3556 = vunpack.c.l.b16 %v2338
        %v3557 = vunpack.c.h.b16 %v2338
        %v3558 = vunpack.c.l.b16 %v2339
        %v3559 = vunpack.c.h.b16 %v2339
        %v3560 = vunpack.c.l.b16 %v2340
        %v3561 = vunpack.c.h.b16 %v2340
        %v3562 = vunpack.c.l.b16 %v2341
        %v3563 = vunpack.c.h.b16 %v2341
        %v3564 = vunpack.c.l.b16 %v2342
        %v3565 = vunpack.c.h.b16 %v2342
        %v3566 = vunpack.c.l.b16 %v2343
        %v3567 = vunpack.c.h.b16 %v2343
        %v3568 = vunpack.c.l.b16 %v2344
        %v3569 = vunpack.c.h.b16 %v2344
        %v3570 = vunpack.c.l.b16 %v2345
        %v3571 = vunpack.c.h.b16 %v2345
        %v3572 = vunpack.c.l.b16 %v2346
        %v3573 = vunpack.c.h.b16 %v2346
        %v3574 = vunpack.c.l.b16 %v2347
        %v3575 = vunpack.c.h.b16 %v2347
        %v3576 = vunpack.c.l.b16 %v2348
        %v3577 = vunpack.c.h.b16 %v2348
        %v3578 = vunpack.c.l.b16 %v2349
        %v3579 = vunpack.c.h.b16 %v2349
        %v3580 = vunpack.c.l.b16 %v2350
        %v3581 = vunpack.c.h.b16 %v2350
        %v3582 = vunpack.c.l.b16 %v2351
        %v3583 = vunpack.c.h.b16 %v2351
        %v3584 = vunpack.c.l.b16 %v2352
        %v3585 = vunpack.c.h.b16 %v2352
        %v3586 = vunpack.c.l.b16 %v2353
        %v3587 = vunpack.c.h.b16 %v2353
        %v3588 = vunpack.c.l.b16 %v2354
        %v3589 = vunpack.c.h.b16 %v2354
        %v3590 = vunpack.c.l.b16 %v2355
        %v3591 = vunpack.c.h.b16 %v2355
        %v3592 = vunpack.c.l.b16 %v2356
        %v3593 = vunpack.c.h.b16 %v2356
        %v3594 = vunpack.c.l.b16 %v2357
        %v3595 = vunpack.c.h.b16 %v2357
        %v3596 = vunpack.c.l.b16 %v2358
        %v3597 = vunpack.c.h.b16 %v2358
        %v3598 = vunpack.c.l.b16 %v2359
        %v3599 = vunpack.c.h.b16 %v2359
        %v3600 = vunpack.c.l.b16 %v2360
        %v3601 = vunpack.c.h.b16 %v2360
        %v3602 = vunpack.c.l.b16 %v2361
        %v3603 = vunpack.c.h.b16 %v2361
        %v3604 = vunpack.c.l.b16 %v2362
        %v3605 = vunpack.c.h.b16 %v2362
        %v3606 = vunpack.c.l.b16 %v2363
        %v3607 = vunpack.c.h.b16 %v2363
        %v3608 = vunpack.c.l.b16 %v2364
        %v3609 = vunpack.c.h.b16 %v2364
        %v3610 = vunpack.c.l.b16 %v2365
        %v3611 = vunpack.c.h.b16 %v2365
        %v3612 = vunpack.c.l.b16 %v2366
        %v3613 = vunpack.c.h.b16 %v2366
        %v3614 = vunpack.c.l.b16 %v2367
        %v3615 = vunpack.c.h.b16 %v2367
        %v3616 = vunpack.c.l.b16 %v2368
        %v3617 = vunpack.c.h.b16 %v2368
        %v3618 = vunpack.c.l.b16 %v2369
        %v3619 = vunpack.c.h.b16 %v2369
        %v3620 = vunpack.c.l.b16 %v2370
        %v3621 = vunpack.c.h.b16 %v2370
        %v3622 = vunpack.c.l.b16 %v2371
        %v3623 = vunpack.c.h.b16 %v2371
        %v3624 = vunpack.c.l.b16 %v2372
        %v3625 = vunpack.c.h.b16 %v2372
        %v3626 = vunpack.c.l.b16 %v2373
        %v3627 = vunpack.c.h.b16 %v2373
        %v3628 = vunpack.c.l.b16 %v2374
        %v3629 = vunpack.c.h.b16 %v2374
        %v3630 = vunpack.c.l.b16 %v2375
        %v3631 = vunpack.c.h.b16 %v2375
        %v3632 = vunpack.c.l.b16 %v2376
        %v3633 = vunpack.c.h.b16 %v2376
        %v3634 = vunpack.c.l.b16 %v2377
        %v3635 = vunpack.c.h.b16 %v2377
        %v3636 = vunpack.c.l.b16 %v2378
        %v3637 = vunpack.c.h.b16 %v2378
        %v3638 = vunpack.c.l.b16 %v2379
        %v3639 = vunpack.c.h.b16 %v2379
        %v3640 = vunpack.c.l.b16 %v2380
        %v3641 = vunpack.c.h.b16 %v2380
        %v3642 = vunpack.c.l.b16 %v2381
        %v3643 = vunpack.c.h.b16 %v2381
        %v3644 = vunpack.c.l.b16 %v2382
        %v3645 = vunpack.c.h.b16 %v2382
        %v3646 = vunpack.c.l.b16 %v2383
        %v3647 = vunpack.c.h.b16 %v2383
        %v3648 = vunpack.c.l.b16 %v2384
        %v3649 = vunpack.c.h.b16 %v2384
        %v3650 = vunpack.c.l.b16 %v2385
        %v3651 = vunpack.c.h.b16 %v2385
        %v3652 = vunpack.c.l.b16 %v2386
        %v3653 = vunpack.c.h.b16 %v2386
        %v3654 = vunpack.c.l.b16 %v2387
        %v3655 = vunpack.c.h.b16 %v2387
        %v3656 = vunpack.c.l.b16 %v2388
        %v3657 = vunpack.c.h.b16 %v2388
        %v3658 = vunpack.c.l.b16 %v2389
        %v3659 = vunpack.c.h.b16 %v2389
        %v3660 = vunpack.c.l.b16 %v2390
        %v3661 = vunpack.c.h.b16 %v2390
        %v3662 = vunpack.c.l.b16 %v2391
        %v3663 = vunpack.c.h.b16 %v2391
        %v3664 = vunpack.c.l.b16 %v2392
        %v3665 = vunpack.c.h.b16 %v2392
        %v3666 = vunpack.c.l.b16 %v2393
        %v3667 = vunpack.c.h.b16 %v2393
        %v3668 = vunpack.c.l.b16 %v2394
        %v3669 = vunpack.c.h.b16 %v2394
        %v3670 = vunpack.c.l.b16 %v2395
        %v3671 = vunpack.c.h.b16 %v2395
        %v3672 = vunpack.c.l.b16 %v2396
        %v3673 = vunpack.c.h.b16 %v2396
        %v3674 = vunpack.c.l.b16 %v2397
        %v3675 = vunpack.c.h.b16 %v2397
        %v3676 = vunpack.c.l.b16 %v2398
        %v3677 = vunpack.c.h.b16 %v2398
        %v3678 = vunpack.c.l.b16 %v2399
        %v3679 = vunpack.c.h.b16 %v2399
        %v3680 = vunpack.c.l.b16 %v2400
        %v3681 = vunpack.c.h.b16 %v2400
        %v3682 = vunpack.c.l.b16 %v2401
        %v3683 = vunpack.c.h.b16 %v2401
        %v3684 = vunpack.c.l.b16 %v2402
        %v3685 = vunpack.c.h.b16 %v2402
        %v3686 = vunpack.c.l.b16 %v2403
        %v3687 = vunpack.c.h.b16 %v2403
        %v3688 = vunpack.c.l.b16 %v2404
        %v3689 = vunpack.c.h.b16 %v2404
        %v3690 = vunpack.c.l.b16 %v2405
        %v3691 = vunpack.c.h.b16 %v2405
        %v3692 = vunpack.c.l.b16 %v2406
        %v3693 = vunpack.c.h.b16 %v2406
        %v3694 = vunpack.c.l.b16 %v2407
        %v3695 = vunpack.c.h.b16 %v2407
        %v3696 = vunpack.c.l.b16 %v2408
        %v3697 = vunpack.c.h.b16 %v2408
        %v3698 = vunpack.c.l.b16 %v2409
        %v3699 = vunpack.c.h.b16 %v2409
        %v3700 = vunpack.c.l.b16 %v2410
        %v3701 = vunpack.c.h.b16 %v2410
        %v3702 = vunpack.c.l.b16 %v2411
        %v3703 = vunpack.c.h.b16 %v2411
        %v3704 = vunpack.c.l.b16 %v2412
        %v3705 = vunpack.c.h.b16 %v2412
        %v3706 = vunpack.c.l.b16 %v2413
        %v3707 = vunpack.c.h.b16 %v2413
        %v3708 = vunpack.c.l.b16 %v2414
        %v3709 = vunpack.c.h.b16 %v2414
        %v3710 = vunpack.c.l.b16 %v2415
        %v3711 = vunpack.c.h.b16 %v2415
        %v3712 = vunpack.c.l.b16 %v2416
        %v3713 = vunpack.c.h.b16 %v2416
        %v3714 = vunpack.c.l.b16 %v2417
        %v3715 = vunpack.c.h.b16 %v2417
        %v3716 = vunpack.c.l.b16 %v2418
        %v3717 = vunpack.c.h.b16 %v2418
        %v3718 = vunpack.c.l.b16 %v2419
        %v3719 = vunpack.c.h.b16 %v2419
        %v3720 = vunpack.c.l.b16 %v2420
        %v3721 = vunpack.c.h.b16 %v2420
        %v3722 = vunpack.c.l.b16 %v2421
        %v3723 = vunpack.c.h.b16 %v2421
        %v3724 = vunpack.c.l.b16 %v2422
        %v3725 = vunpack.c.h.b16 %v2422
        %v3726 = vunpack.c.l.b16 %v2423
        %v3727 = vunpack.c.h.b16 %v2423
        %v3728 = vunpack.c.l.b16 %v2424
        %v3729 = vunpack.c.h.b16 %v2424
        %v3730 = vunpack.c.l.b16 %v2425
        %v3731 = vunpack.c.h.b16 %v2425
        %v3732 = vunpack.c.l.b16 %v2426
        %v3733 = vunpack.c.h.b16 %v2426
        %v3734 = vunpack.c.l.b16 %v2427
        %v3735 = vunpack.c.h.b16 %v2427
        %v3736 = vunpack.c.l.b16 %v2428
        %v3737 = vunpack.c.h.b16 %v2428
        %v3738 = vunpack.c.l.b16 %v2429
        %v3739 = vunpack.c.h.b16 %v2429
        %v3740 = vunpack.c.l.b16 %v2430
        %v3741 = vunpack.c.h.b16 %v2430
        %v3742 = vunpack.c.l.b16 %v2431
        %v3743 = vunpack.c.h.b16 %v2431
        %v3744 = vunpack.c.l.b16 %v2432
        %v3745 = vunpack.c.h.b16 %v2432
        %v3746 = vunpack.c.l.b16 %v2433
        %v3747 = vunpack.c.h.b16 %v2433
        %v3748 = vunpack.c.l.b16 %v2434
        %v3749 = vunpack.c.h.b16 %v2434
        %v3750 = vunpack.c.l.b16 %v2435
        %v3751 = vunpack.c.h.b16 %v2435
        %v3752 = vunpack.c.l.b16 %v2436
        %v3753 = vunpack.c.h.b16 %v2436
        %v3754 = vunpack.c.l.b16 %v2437
        %v3755 = vunpack.c.h.b16 %v2437
        %v3756 = vunpack.c.l.b16 %v2438
        %v3757 = vunpack.c.h.b16 %v2438
        %v3758 = vunpack.c.l.b16 %v2439
        %v3759 = vunpack.c.h.b16 %v2439
        %v3760 = vunpack.c.l.b16 %v2440
        %v3761 = vunpack.c.h.b16 %v2440
        %v3762 = vunpack.c.l.b16 %v2441
        %v3763 = vunpack.c.h.b16 %v2441
        %v3764 = vunpack.c.l.b16 %v2442
        %v3765 = vunpack.c.h.b16 %v2442
        %v3766 = vunpack.c.l.b16 %v2443
        %v3767 = vunpack.c.h.b16 %v2443
        %v3768 = vunpack.c.l.b16 %v2444
        %v3769 = vunpack.c.h.b16 %v2444
        %v3770 = vunpack.c.l.b16 %v2445
        %v3771 = vunpack.c.h.b16 %v2445
        %v3772 = vunpack.c.l.b16 %v2446
        %v3773 = vunpack.c.h.b16 %v2446
        %v3774 = vunpack.c.l.b16 %v2447
        %v3775 = vunpack.c.h.b16 %v2447
        %v3776 = vunpack.c.l.b16 %v2448
        %v3777 = vunpack.c.h.b16 %v2448
        %v3778 = vunpack.c.l.b16 %v2449
        %v3779 = vunpack.c.h.b16 %v2449
        %v3780 = vunpack.c.l.b16 %v2450
        %v3781 = vunpack.c.h.b16 %v2450
        %v3782 = vunpack.c.l.b16 %v2451
        %v3783 = vunpack.c.h.b16 %v2451
        %v3784 = vunpack.c.l.b16 %v2452
        %v3785 = vunpack.c.h.b16 %v2452
        %v3786 = vunpack.c.l.b16 %v2453
        %v3787 = vunpack.c.h.b16 %v2453
        %v3788 = vunpack.c.l.b16 %v2454
        %v3789 = vunpack.c.h.b16 %v2454
        %v3790 = vunpack.c.l.b16 %v2455
        %v3791 = vunpack.c.h.b16 %v2455
        %v3792 = vunpack.c.l.b16 %v2456
        %v3793 = vunpack.c.h.b16 %v2456
        %v3794 = vunpack.c.l.b16 %v2457
        %v3795 = vunpack.c.h.b16 %v2457
        %v3796 = vunpack.c.l.b16 %v2458
        %v3797 = vunpack.c.h.b16 %v2458
        %v3798 = vunpack.c.l.b16 %v2459
        %v3799 = vunpack.c.h.b16 %v2459
        %v3800 = vunpack.c.l.b16 %v2460
        %v3801 = vunpack.c.h.b16 %v2460
        %v3802 = vunpack.c.l.b16 %v2461
        %v3803 = vunpack.c.h.b16 %v2461
        %v3804 = vunpack.c.l.b16 %v2462
        %v3805 = vunpack.c.h.b16 %v2462
        %v3806 = vunpack.c.l.b16 %v2463
        %v3807 = vunpack.c.h.b16 %v2463
        %v3808 = vunpack.c.l.b16 %v2464
        %v3809 = vunpack.c.h.b16 %v2464
        %v3810 = vunpack.c.l.b16 %v2465
        %v3811 = vunpack.c.h.b16 %v2465
        %v3812 = vunpack.c.l.b16 %v2466
        %v3813 = vunpack.c.h.b16 %v2466
        %v3814 = vunpack.c.l.b16 %v2467
        %v3815 = vunpack.c.h.b16 %v2467
        %v3816 = vunpack.c.l.b16 %v2468
        %v3817 = vunpack.c.h.b16 %v2468
        %v3818 = vunpack.c.l.b16 %v2469
        %v3819 = vunpack.c.h.b16 %v2469
        %v3820 = vunpack.c.l.b16 %v2470
        %v3821 = vunpack.c.h.b16 %v2470
        %v3822 = vunpack.c.l.b16 %v2471
        %v3823 = vunpack.c.h.b16 %v2471
        %v3824 = vunpack.c.l.b16 %v2472
        %v3825 = vunpack.c.h.b16 %v2472
        %v3826 = vunpack.c.l.b16 %v2473
        %v3827 = vunpack.c.h.b16 %v2473
        %v3828 = vunpack.c.l.b16 %v2474
        %v3829 = vunpack.c.h.b16 %v2474
        %v3830 = vunpack.c.l.b16 %v2475
        %v3831 = vunpack.c.h.b16 %v2475
        %v3832 = vunpack.c.l.b16 %v2476
        %v3833 = vunpack.c.h.b16 %v2476
        %v3834 = vunpack.c.l.b16 %v2477
        %v3835 = vunpack.c.h.b16 %v2477
        %v3836 = vunpack.c.l.b16 %v2478
        %v3837 = vunpack.c.h.b16 %v2478
        %v3838 = vunpack.c.l.b16 %v2479
        %v3839 = vunpack.c.h.b16 %v2479
        %v3840 = vunpack.c.l.b16 %v2480
        %v3841 = vunpack.c.h.b16 %v2480
        %v3842 = vunpack.c.l.b16 %v2481
        %v3843 = vunpack.c.h.b16 %v2481
        %v3844 = vunpack.c.l.b16 %v2482
        %v3845 = vunpack.c.h.b16 %v2482
        %v3846 = vunpack.c.l.b16 %v2483
        %v3847 = vunpack.c.h.b16 %v2483
        %v3848 = vunpack.c.l.b16 %v2484
        %v3849 = vunpack.c.h.b16 %v2484
        %v3850 = vunpack.c.l.b16 %v2485
        %v3851 = vunpack.c.h.b16 %v2485
        %v3852 = vunpack.c.l.b16 %v2486
        %v3853 = vunpack.c.h.b16 %v2486
        %v3854 = vunpack.c.l.b16 %v2487
        %v3855 = vunpack.c.h.b16 %v2487
        %v3856 = vunpack.c.l.b16 %v2488
        %v3857 = vunpack.c.h.b16 %v2488
        %v3858 = vunpack.c.l.b16 %v2489
        %v3859 = vunpack.c.h.b16 %v2489
        %v3860 = vunpack.c.l.b16 %v2490
        %v3861 = vunpack.c.h.b16 %v2490
        %v3862 = vunpack.c.l.b16 %v2491
        %v3863 = vunpack.c.h.b16 %v2491
        %v3864 = vunpack.c.l.b16 %v2492
        %v3865 = vunpack.c.h.b16 %v2492
        %v3866 = vunpack.c.l.b16 %v2493
        %v3867 = vunpack.c.h.b16 %v2493
        %v3868 = vunpack.c.l.b16 %v2494
        %v3869 = vunpack.c.h.b16 %v2494
        %v3870 = vunpack.c.l.b16 %v2495
        %v3871 = vunpack.c.h.b16 %v2495
        %v3872 = vunpack.c.l.b16 %v2496
        %v3873 = vunpack.c.h.b16 %v2496
        %v3874 = vunpack.c.l.b16 %v2497
        %v3875 = vunpack.c.h.b16 %v2497
        %v3876 = vunpack.c.l.b16 %v2498
        %v3877 = vunpack.c.h.b16 %v2498
        %v3878 = vunpack.c.l.b16 %v2499
        %v3879 = vunpack.c.h.b16 %v2499
        %v3880 = vunpack.c.l.b16 %v2500
        %v3881 = vunpack.c.h.b16 %v2500
        %v3882 = vunpack.c.l.b16 %v2501
        %v3883 = vunpack.c.h.b16 %v2501
        %v3884 = vunpack.c.l.b16 %v2502
        %v3885 = vunpack.c.h.b16 %v2502
        %v3886 = vunpack.c.l.b16 %v2503
        %v3887 = vunpack.c.h.b16 %v2503
        %v3888 = vunpack.c.l.b16 %v2504
        %v3889 = vunpack.c.h.b16 %v2504
        %v3890 = vunpack.c.l.b16 %v2505
        %v3891 = vunpack.c.h.b16 %v2505
        %v3892 = vunpack.c.l.b16 %v2506
        %v3893 = vunpack.c.h.b16 %v2506
        %v3894 = vunpack.c.l.b16 %v2507
        %v3895 = vunpack.c.h.b16 %v2507
        %v3896 = vunpack.c.l.b16 %v2508
        %v3897 = vunpack.c.h.b16 %v2508
        %v3898 = vunpack.c.l.b16 %v2509
        %v3899 = vunpack.c.h.b16 %v2509
        %v3900 = vunpack.c.l.b16 %v2510
        %v3901 = vunpack.c.h.b16 %v2510
        %v3902 = vunpack.c.l.b16 %v2511
        %v3903 = vunpack.c.h.b16 %v2511
        %v3904 = vunpack.c.l.b16 %v2512
        %v3905 = vunpack.c.h.b16 %v2512
        %v3906 = vunpack.c.l.b16 %v2513
        %v3907 = vunpack.c.h.b16 %v2513
        %v3908 = vunpack.c.l.b16 %v2514
        %v3909 = vunpack.c.h.b16 %v2514
        %v3910 = vunpack.c.l.b16 %v2515
        %v3911 = vunpack.c.h.b16 %v2515
        %v3912 = vunpack.c.l.b16 %v2516
        %v3913 = vunpack.c.h.b16 %v2516
        %v3914 = vunpack.c.l.b16 %v2517
        %v3915 = vunpack.c.h.b16 %v2517
        %v3916 = vunpack.c.l.b16 %v2518
        %v3917 = vunpack.c.h.b16 %v2518
        %v3918 = vunpack.c.l.b16 %v2519
        %v3919 = vunpack.c.h.b16 %v2519
        %v3920 = vunpack.c.l.b16 %v2520
        %v3921 = vunpack.c.h.b16 %v2520
        %v3922 = vunpack.c.l.b16 %v2521
        %v3923 = vunpack.c.h.b16 %v2521
        %v3924 = vunpack.c.l.b16 %v2522
        %v3925 = vunpack.c.h.b16 %v2522
        %v3926 = vunpack.c.l.b16 %v2523
        %v3927 = vunpack.c.h.b16 %v2523
        %v3928 = vunpack.c.l.b16 %v2524
        %v3929 = vunpack.c.h.b16 %v2524
        %v3930 = vunpack.c.l.b16 %v2525
        %v3931 = vunpack.c.h.b16 %v2525
        %v3932 = vunpack.c.l.b16 %v2526
        %v3933 = vunpack.c.h.b16 %v2526
        %v3934 = vunpack.c.l.b16 %v2527
        %v3935 = vunpack.c.h.b16 %v2527
        %v3936 = vunpack.c.l.b16 %v2528
        %v3937 = vunpack.c.h.b16 %v2528
        %v3938 = vunpack.c.l.b16 %v2529
        %v3939 = vunpack.c.h.b16 %v2529
        %v3940 = vunpack.c.l.b16 %v2530
        %v3941 = vunpack.c.h.b16 %v2530
        %v3942 = vunpack.c.l.b16 %v2531
        %v3943 = vunpack.c.h.b16 %v2531
        %v3944 = vunpack.c.l.b16 %v2532
        %v3945 = vunpack.c.h.b16 %v2532
        %v3946 = vunpack.c.l.b16 %v2533
        %v3947 = vunpack.c.h.b16 %v2533
        %v3948 = vunpack.c.l.b16 %v2534
        %v3949 = vunpack.c.h.b16 %v2534
        %v3950 = vunpack.c.l.b16 %v2535
        %v3951 = vunpack.c.h.b16 %v2535
        %v3952 = vunpack.c.l.b16 %v2536
        %v3953 = vunpack.c.h.b16 %v2536
        %v3954 = vunpack.c.l.b16 %v2537
        %v3955 = vunpack.c.h.b16 %v2537
        %v3956 = vunpack.c.l.b16 %v2538
        %v3957 = vunpack.c.h.b16 %v2538
        %v3958 = vunpack.c.l.b16 %v2539
        %v3959 = vunpack.c.h.b16 %v2539
        %v3960 = vunpack.c.l.b16 %v2540
        %v3961 = vunpack.c.h.b16 %v2540
        %v3962 = vunpack.c.l.b16 %v2541
        %v3963 = vunpack.c.h.b16 %v2541
        %v3964 = vunpack.c.l.b16 %v2542
        %v3965 = vunpack.c.h.b16 %v2542
        %v3966 = vunpack.c.l.b16 %v2543
        %v3967 = vunpack.c.h.b16 %v2543
        %v3968 = vunpack.c.l.b16 %v2544
        %v3969 = vunpack.c.h.b16 %v2544
        %v3970 = vunpack.c.l.b16 %v2545
        %v3971 = vunpack.c.h.b16 %v2545
        %v3972 = vunpack.c.l.b16 %v2546
        %v3973 = vunpack.c.h.b16 %v2546
        %v3974 = vunpack.c.l.b16 %v2547
        %v3975 = vunpack.c.h.b16 %v2547
        %v3976 = vunpack.c.l.b16 %v2548
        %v3977 = vunpack.c.h.b16 %v2548
        %v3978 = vunpack.c.l.b16 %v2549
        %v3979 = vunpack.c.h.b16 %v2549
        %v3980 = vunpack.c.l.b16 %v2550
        %v3981 = vunpack.c.h.b16 %v2550
        %v3982 = vunpack.c.l.b16 %v2551
        %v3983 = vunpack.c.h.b16 %v2551
        %v3984 = vunpack.c.l.b16 %v2552
        %v3985 = vunpack.c.h.b16 %v2552
        %v3986 = vunpack.c.l.b16 %v2553
        %v3987 = vunpack.c.h.b16 %v2553
        %v3988 = vunpack.c.l.b16 %v2554
        %v3989 = vunpack.c.h.b16 %v2554
        %v3990 = vunpack.c.l.b16 %v2555
        %v3991 = vunpack.c.h.b16 %v2555
        %v3992 = vunpack.c.l.b16 %v2556
        %v3993 = vunpack.c.h.b16 %v2556
        %v3994 = vunpack.c.l.b16 %v2557
        %v3995 = vunpack.c.h.b16 %v2557
        %v3996 = vunpack.c.l.b16 %v2558
        %v3997 = vunpack.c.h.b16 %v2558
        %v3998 = vunpack.c.l.b16 %v2559
        %v3999 = vunpack.c.h.b16 %v2559
        %v4000 = vunpack.c.l.b16 %v2560
        %v4001 = vunpack.c.h.b16 %v2560
        %v4002 = vunpack.c.l.b16 %v2561
        %v4003 = vunpack.c.h.b16 %v2561
        %v4004 = vunpack.c.l.b16 %v2562
        %v4005 = vunpack.c.h.b16 %v2562
        %v4006 = vunpack.c.l.b16 %v2563
        %v4007 = vunpack.c.h.b16 %v2563
        %v4008 = vunpack.c.l.b16 %v2564
        %v4009 = vunpack.c.h.b16 %v2564
        %v4010 = vunpack.c.l.b16 %v2565
        %v4011 = vunpack.c.h.b16 %v2565
        %v4012 = vunpack.c.l.b16 %v2566
        %v4013 = vunpack.c.h.b16 %v2566
        %v4014 = vunpack.c.l.b16 %v2567
        %v4015 = vunpack.c.h.b16 %v2567
        %v4016 = vunpack.c.l.b16 %v2568
        %v4017 = vunpack.c.h.b16 %v2568
        %v4018 = vunpack.c.l.b16 %v2569
        %v4019 = vunpack.c.h.b16 %v2569
        %v4020 = vunpack.c.l.b16 %v2570
        %v4021 = vunpack.c.h.b16 %v2570
        %v4022 = vunpack.c.l.b16 %v2571
        %v4023 = vunpack.c.h.b16 %v2571
        %v4024 = vunpack.c.l.b16 %v2572
        %v4025 = vunpack.c.h.b16 %v2572
        %v4026 = vunpack.c.l.b16 %v2573
        %v4027 = vunpack.c.h.b16 %v2573
        %v4028 = vunpack.c.l.b16 %v2574
        %v4029 = vunpack.c.h.b16 %v2574
        %v4030 = vunpack.c.l.b16 %v2575
        %v4031 = vunpack.c.h.b16 %v2575
        %v4032 = vunpack.c.l.b16 %v2576
        %v4033 = vunpack.c.h.b16 %v2576
        %v4034 = vunpack.c.l.b16 %v2577
        %v4035 = vunpack.c.h.b16 %v2577
        %v4036 = vunpack.c.l.b16 %v2578
        %v4037 = vunpack.c.h.b16 %v2578
        %v4038 = vunpack.c.l.b16 %v2579
        %v4039 = vunpack.c.h.b16 %v2579
        %v4040 = vunpack.c.l.b16 %v2580
        %v4041 = vunpack.c.h.b16 %v2580
        %v4042 = vunpack.c.l.b16 %v2581
        %v4043 = vunpack.c.h.b16 %v2581
        %v4044 = vunpack.c.l.b16 %v2582
        %v4045 = vunpack.c.h.b16 %v2582
        %v4046 = vunpack.c.l.b16 %v2583
        %v4047 = vunpack.c.h.b16 %v2583
        %v4048 = vunpack.c.l.b16 %v2584
        %v4049 = vunpack.c.h.b16 %v2584
        %v4050 = vunpack.c.l.b16 %v2585
        %v4051 = vunpack.c.h.b16 %v2585
        %v4052 = vunpack.c.l.b16 %v2586
        %v4053 = vunpack.c.h.b16 %v2586
        %v4054 = vunpack.c.l.b16 %v2587
        %v4055 = vunpack.c.h.b16 %v2587
        %v4056 = vunpack.c.l.b16 %v2588
        %v4057 = vunpack.c.h.b16 %v2588
        %v4058 = vunpack.c.l.b16 %v2589
        %v4059 = vunpack.c.h.b16 %v2589
        %v4060 = vunpack.c.l.b16 %v2590
        %v4061 = vunpack.c.h.b16 %v2590
        %v4062 = vunpack.c.l.b16 %v2591
        %v4063 = vunpack.c.h.b16 %v2591
        %v4064 = vunpack.c.l.b16 %v2592
        %v4065 = vunpack.c.h.b16 %v2592
        %v4066 = vunpack.c.l.b16 %v2593
        %v4067 = vunpack.c.h.b16 %v2593
        %v4068 = vunpack.c.l.b16 %v2594
        %v4069 = vunpack.c.h.b16 %v2594
        %v4070 = vunpack.c.l.b16 %v2595
        %v4071 = vunpack.c.h.b16 %v2595
        %v4072 = vunpack.c.l.b16 %v2596
        %v4073 = vunpack.c.h.b16 %v2596
        %v4074 = vunpack.c.l.b16 %v2597
        %v4075 = vunpack.c.h.b16 %v2597
        %v4076 = vunpack.c.l.b16 %v2598
        %v4077 = vunpack.c.h.b16 %v2598
        %v4078 = vunpack.c.l.b16 %v2599
        %v4079 = vunpack.c.h.b16 %v2599
        %v4080 = vunpack.c.l.b16 %v2600
        %v4081 = vunpack.c.h.b16 %v2600
        %v4082 = vunpack.c.l.b16 %v2601
        %v4083 = vunpack.c.h.b16 %v2601
        %v4084 = vunpack.c.l.b16 %v2602
        %v4085 = vunpack.c.h.b16 %v2602
        %v4086 = vunpack.c.l.b16 %v2603
        %v4087 = vunpack.c.h.b16 %v2603
        %v4088 = vunpack.c.l.b16 %v2604
        %v4089 = vunpack.c.h.b16 %v2604
        %v4090 = vunpack.c.l.b16 %v2605
        %v4091 = vunpack.c.h.b16 %v2605
        %v4092 = vunpack.c.l.b16 %v2606
        %v4093 = vunpack.c.h.b16 %v2606
        %v4094 = vunpack.c.l.b16 %v2607
        %v4095 = vunpack.c.h.b16 %v2607
        %v4096 = vunpack.c.l.b16 %v2608
        %v4097 = vunpack.c.h.b16 %v2608
        %v4098 = vunpack.c.l.b16 %v2609
        %v4099 = vunpack.c.h.b16 %v2609
        %v4100 = vunpack.c.l.b16 %v2610
        %v4101 = vunpack.c.h.b16 %v2610
        %v4102 = vunpack.c.l.b16 %v2611
        %v4103 = vunpack.c.h.b16 %v2611
        %v4104 = vunpack.c.l.b16 %v2612
        %v4105 = vunpack.c.h.b16 %v2612
        %v4106 = vunpack.c.l.b16 %v2613
        %v4107 = vunpack.c.h.b16 %v2613
        %v4108 = vunpack.c.l.b16 %v2614
        %v4109 = vunpack.c.h.b16 %v2614
        %v4110 = vunpack.c.l.b16 %v2615
        %v4111 = vunpack.c.h.b16 %v2615
        %v4112 = vunpack.c.l.b16 %v2616
        %v4113 = vunpack.c.h.b16 %v2616
        %v4114 = vunpack.c.l.b16 %v2617
        %v4115 = vunpack.c.h.b16 %v2617
        %v4116 = vunpack.c.l.b16 %v2618
        %v4117 = vunpack.c.h.b16 %v2618
        %v4118 = vunpack.c.l.b16 %v2619
        %v4119 = vunpack.c.h.b16 %v2619
        %v4120 = vunpack.c.l.b16 %v2620
        %v4121 = vunpack.c.h.b16 %v2620
        %v4122 = vunpack.c.l.b16 %v2621
        %v4123 = vunpack.c.h.b16 %v2621
        %v4124 = vunpack.c.l.b16 %v2622
        %v4125 = vunpack.c.h.b16 %v2622
        %v4126 = vunpack.c.l.b16 %v2623
        %v4127 = vunpack.c.h.b16 %v2623
        %v4128 = vunpack.c.l.b16 %v2624
        %v4129 = vunpack.c.h.b16 %v2624
        %v4130 = vunpack.c.l.b16 %v2625
        %v4131 = vunpack.c.h.b16 %v2625
        %v4132 = vunpack.c.l.b16 %v2626
        %v4133 = vunpack.c.h.b16 %v2626
        %v4134 = vunpack.c.l.b16 %v2627
        %v4135 = vunpack.c.h.b16 %v2627
        %v4136 = vunpack.c.l.b16 %v2628
        %v4137 = vunpack.c.h.b16 %v2628
        %v4138 = vunpack.c.l.b16 %v2629
        %v4139 = vunpack.c.h.b16 %v2629
        %v4140 = vunpack.c.l.b16 %v2630
        %v4141 = vunpack.c.h.b16 %v2630
        %v4142 = vunpack.c.l.b16 %v2631
        %v4143 = vunpack.c.h.b16 %v2631
        %v4144 = vunpack.c.l.b16 %v2632
        %v4145 = vunpack.c.h.b16 %v2632
        %v4146 = vunpack.c.l.b16 %v2633
        %v4147 = vunpack.c.h.b16 %v2633
        %v4148 = vunpack.c.l.b16 %v2634
        %v4149 = vunpack.c.h.b16 %v2634
        %v4150 = vunpack.c.l.b16 %v2635
        %v4151 = vunpack.c.h.b16 %v2635
        %v4152 = vunpack.c.l.b16 %v2636
        %v4153 = vunpack.c.h.b16 %v2636
        %v4154 = vunpack.c.l.b16 %v2637
        %v4155 = vunpack.c.h.b16 %v2637
        %v4156 = vunpack.c.l.b16 %v2638
        %v4157 = vunpack.c.h.b16 %v2638
        %v4158 = vunpack.c.l.b16 %v2639
        %v4159 = vunpack.c.h.b16 %v2639
        %v4160 = vunpack.c.l.b16 %v2640
        %v4161 = vunpack.c.h.b16 %v2640
        %v4162 = vunpack.c.l.b16 %v2641
        %v4163 = vunpack.c.h.b16 %v2641
        %v4164 = vunpack.c.l.b16 %v2642
        %v4165 = vunpack.c.h.b16 %v2642
        %v4166 = vunpack.c.l.b16 %v2643
        %v4167 = vunpack.c.h.b16 %v2643
        %v4168 = vunpack.c.l.b16 %v2644
        %v4169 = vunpack.c.h.b16 %v2644
        %v4170 = vunpack.c.l.b16 %v2645
        %v4171 = vunpack.c.h.b16 %v2645
        %v4172 = vunpack.c.l.b16 %v2646
        %v4173 = vunpack.c.h.b16 %v2646
        %v4174 = vunpack.c.l.b16 %v2647
        %v4175 = vunpack.c.h.b16 %v2647
        %v4176 = vunpack.c.l.b16 %v2648
        %v4177 = vunpack.c.h.b16 %v2648
        %v4178 = vunpack.c.l.b16 %v2649
        %v4179 = vunpack.c.h.b16 %v2649
        %v4180 = vunpack.c.l.b16 %v2650
        %v4181 = vunpack.c.h.b16 %v2650
        %v4182 = vunpack.c.l.b16 %v2651
        %v4183 = vunpack.c.h.b16 %v2651
        %v4184 = vunpack.c.l.b16 %v2652
        %v4185 = vunpack.c.h.b16 %v2652
        %v4186 = vunpack.c.l.b16 %v2653
        %v4187 = vunpack.c.h.b16 %v2653
        %v4188 = vunpack.c.l.b16 %v2654
        %v4189 = vunpack.c.h.b16 %v2654
        %v4190 = vunpack.c.l.b16 %v2655
        %v4191 = vunpack.c.h.b16 %v2655
        %v4192 = vpack.c.b16 %v3176, %v3168
        %v4193 = vpack.c.b16 %v3177, %v3169
        %v4194 = vpack.c.b16 %v3178, %v3170
        %v4195 = vpack.c.b16 %v3179, %v3171
        %v4196 = vpack.c.b16 %v3180, %v3172
        %v4197 = vpack.c.b16 %v3181, %v3173
        %v4198 = vpack.c.b16 %v3182, %v3174
        %v4199 = vpack.c.b16 %v3183, %v3175
        %v4200 = vpack.c.b16 %v3192, %v3184
        %v4201 = vpack.c.b16 %v3193, %v3185
        %v4202 = vpack.c.b16 %v3194, %v3186
        %v4203 = vpack.c.b16 %v3195, %v3187
        %v4204 = vpack.c.b16 %v3196, %v3188
        %v4205 = vpack.c.b16 %v3197, %v3189
        %v4206 = vpack.c.b16 %v3198, %v3190
        %v4207 = vpack.c.b16 %v3199, %v3191
        %v4208 = vpack.c.b16 %v3208, %v3200
        %v4209 = vpack.c.b16 %v3209, %v3201
        %v4210 = vpack.c.b16 %v3210, %v3202
        %v4211 = vpack.c.b16 %v3211, %v3203
        %v4212 = vpack.c.b16 %v3212, %v3204
        %v4213 = vpack.c.b16 %v3213, %v3205
        %v4214 = vpack.c.b16 %v3214, %v3206
        %v4215 = vpack.c.b16 %v3215, %v3207
        %v4216 = vpack.c.b16 %v3224, %v3216
        %v4217 = vpack.c.b16 %v3225, %v3217
        %v4218 = vpack.c.b16 %v3226, %v3218
        %v4219 = vpack.c.b16 %v3227, %v3219
        %v4220 = vpack.c.b16 %v3228, %v3220
        %v4221 = vpack.c.b16 %v3229, %v3221
        %v4222 = vpack.c.b16 %v3230, %v3222
        %v4223 = vpack.c.b16 %v3231, %v3223
        %v4224 = vpack.c.b16 %v3240, %v3232
        %v4225 = vpack.c.b16 %v3241, %v3233
        %v4226 = vpack.c.b16 %v3242, %v3234
        %v4227 = vpack.c.b16 %v3243, %v3235
        %v4228 = vpack.c.b16 %v3244, %v3236
        %v4229 = vpack.c.b16 %v3245, %v3237
        %v4230 = vpack.c.b16 %v3246, %v3238
        %v4231 = vpack.c.b16 %v3247, %v3239
        %v4232 = vpack.c.b16 %v3256, %v3248
        %v4233 = vpack.c.b16 %v3257, %v3249
        %v4234 = vpack.c.b16 %v3258, %v3250
        %v4235 = vpack.c.b16 %v3259, %v3251
        %v4236 = vpack.c.b16 %v3260, %v3252
        %v4237 = vpack.c.b16 %v3261, %v3253
        %v4238 = vpack.c.b16 %v3262, %v3254
        %v4239 = vpack.c.b16 %v3263, %v3255
        %v4240 = vpack.c.b16 %v3272, %v3264
        %v4241 = vpack.c.b16 %v3273, %v3265
        %v4242 = vpack.c.b16 %v3274, %v3266
        %v4243 = vpack.c.b16 %v3275, %v3267
        %v4244 = vpack.c.b16 %v3276, %v3268
        %v4245 = vpack.c.b16 %v3277, %v3269
        %v4246 = vpack.c.b16 %v3278, %v3270
        %v4247 = vpack.c.b16 %v3279, %v3271
        %v4248 = vpack.c.b16 %v3288, %v3280
        %v4249 = vpack.c.b16 %v3289, %v3281
        %v4250 = vpack.c.b16 %v3290, %v3282
        %v4251 = vpack.c.b16 %v3291, %v3283
        %v4252 = vpack.c.b16 %v3292, %v3284
        %v4253 = vpack.c.b16 %v3293, %v3285
        %v4254 = vpack.c.b16 %v3294, %v3286
        %v4255 = vpack.c.b16 %v3295, %v3287
        %v4256 = vpack.c.b16 %v3304, %v3296
        %v4257 = vpack.c.b16 %v3305, %v3297
        %v4258 = vpack.c.b16 %v3306, %v3298
        %v4259 = vpack.c.b16 %v3307, %v3299
        %v4260 = vpack.c.b16 %v3308, %v3300
        %v4261 = vpack.c.b16 %v3309, %v3301
        %v4262 = vpack.c.b16 %v3310, %v3302
        %v4263 = vpack.c.b16 %v3311, %v3303
        %v4264 = vpack.c.b16 %v3320, %v3312
        %v4265 = vpack.c.b16 %v3321, %v3313
        %v4266 = vpack.c.b16 %v3322, %v3314
        %v4267 = vpack.c.b16 %v3323, %v3315
        %v4268 = vpack.c.b16 %v3324, %v3316
        %v4269 = vpack.c.b16 %v3325, %v3317
        %v4270 = vpack.c.b16 %v3326, %v3318
        %v4271 = vpack.c.b16 %v3327, %v3319
        %v4272 = vpack.c.b16 %v3336, %v3328
        %v4273 = vpack.c.b16 %v3337, %v3329
        %v4274 = vpack.c.b16 %v3338, %v3330
        %v4275 = vpack.c.b16 %v3339, %v3331
        %v4276 = vpack.c.b16 %v3340, %v3332
        %v4277 = vpack.c.b16 %v3341, %v3333
        %v4278 = vpack.c.b16 %v3342, %v3334
        %v4279 = vpack.c.b16 %v3343, %v3335
        %v4280 = vpack.c.b16 %v3352, %v3344
        %v4281 = vpack.c.b16 %v3353, %v3345
        %v4282 = vpack.c.b16 %v3354, %v3346
        %v4283 = vpack.c.b16 %v3355, %v3347
        %v4284 = vpack.c.b16 %v3356, %v3348
        %v4285 = vpack.c.b16 %v3357, %v3349
        %v4286 = vpack.c.b16 %v3358, %v3350
        %v4287 = vpack.c.b16 %v3359, %v3351
        %v4288 = vpack.c.b16 %v3368, %v3360
        %v4289 = vpack.c.b16 %v3369, %v3361
        %v4290 = vpack.c.b16 %v3370, %v3362
        %v4291 = vpack.c.b16 %v3371, %v3363
        %v4292 = vpack.c.b16 %v3372, %v3364
        %v4293 = vpack.c.b16 %v3373, %v3365
        %v4294 = vpack.c.b16 %v3374, %v3366
        %v4295 = vpack.c.b16 %v3375, %v3367
        %v4296 = vpack.c.b16 %v3384, %v3376
        %v4297 = vpack.c.b16 %v3385, %v3377
        %v4298 = vpack.c.b16 %v3386, %v3378
        %v4299 = vpack.c.b16 %v3387, %v3379
        %v4300 = vpack.c.b16 %v3388, %v3380
        %v4301 = vpack.c.b16 %v3389, %v3381
        %v4302 = vpack.c.b16 %v3390, %v3382
        %v4303 = vpack.c.b16 %v3391, %v3383
        %v4304 = vpack.c.b16 %v3400, %v3392
        %v4305 = vpack.c.b16 %v3401, %v3393
        %v4306 = vpack.c.b16 %v3402, %v3394
        %v4307 = vpack.c.b16 %v3403, %v3395
        %v4308 = vpack.c.b16 %v3404, %v3396
        %v4309 = vpack.c.b16 %v3405, %v3397
        %v4310 = vpack.c.b16 %v3406, %v3398
        %v4311 = vpack.c.b16 %v3407, %v3399
        %v4312 = vpack.c.b16 %v3416, %v3408
        %v4313 = vpack.c.b16 %v3417, %v3409
        %v4314 = vpack.c.b16 %v3418, %v3410
        %v4315 = vpack.c.b16 %v3419, %v3411
        %v4316 = vpack.c.b16 %v3420, %v3412
        %v4317 = vpack.c.b16 %v3421, %v3413
        %v4318 = vpack.c.b16 %v3422, %v3414
        %v4319 = vpack.c.b16 %v3423, %v3415
        %v4320 = vpack.c.b16 %v3432, %v3424
        %v4321 = vpack.c.b16 %v3433, %v3425
        %v4322 = vpack.c.b16 %v3434, %v3426
        %v4323 = vpack.c.b16 %v3435, %v3427
        %v4324 = vpack.c.b16 %v3436, %v3428
        %v4325 = vpack.c.b16 %v3437, %v3429
        %v4326 = vpack.c.b16 %v3438, %v3430
        %v4327 = vpack.c.b16 %v3439, %v3431
        %v4328 = vpack.c.b16 %v3448, %v3440
        %v4329 = vpack.c.b16 %v3449, %v3441
        %v4330 = vpack.c.b16 %v3450, %v3442
        %v4331 = vpack.c.b16 %v3451, %v3443
        %v4332 = vpack.c.b16 %v3452, %v3444
        %v4333 = vpack.c.b16 %v3453, %v3445
        %v4334 = vpack.c.b16 %v3454, %v3446
        %v4335 = vpack.c.b16 %v3455, %v3447
        %v4336 = vpack.c.b16 %v3464, %v3456
        %v4337 = vpack.c.b16 %v3465, %v3457
        %v4338 = vpack.c.b16 %v3466, %v3458
        %v4339 = vpack.c.b16 %v3467, %v3459
        %v4340 = vpack.c.b16 %v3468, %v3460
        %v4341 = vpack.c.b16 %v3469, %v3461
        %v4342 = vpack.c.b16 %v3470, %v3462
        %v4343 = vpack.c.b16 %v3471, %v3463
        %v4344 = vpack.c.b16 %v3480, %v3472
        %v4345 = vpack.c.b16 %v3481, %v3473
        %v4346 = vpack.c.b16 %v3482, %v3474
        %v4347 = vpack.c.b16 %v3483, %v3475
        %v4348 = vpack.c.b16 %v3484, %v3476
        %v4349 = vpack.c.b16 %v3485, %v3477
        %v4350 = vpack.c.b16 %v3486, %v3478
        %v4351 = vpack.c.b16 %v3487, %v3479
        %v4352 = vpack.c.b16 %v3496, %v3488
        %v4353 = vpack.c.b16 %v3497, %v3489
        %v4354 = vpack.c.b16 %v3498, %v3490
        %v4355 = vpack.c.b16 %v3499, %v3491
        %v4356 = vpack.c.b16 %v3500, %v3492
        %v4357 = vpack.c.b16 %v3501, %v3493
        %v4358 = vpack.c.b16 %v3502, %v3494
        %v4359 = vpack.c.b16 %v3503, %v3495
        %v4360 = vpack.c.b16 %v3512, %v3504
        %v4361 = vpack.c.b16 %v3513, %v3505
        %v4362 = vpack.c.b16 %v3514, %v3506
        %v4363 = vpack.c.b16 %v3515, %v3507
        %v4364 = vpack.c.b16 %v3516, %v3508
        %v4365 = vpack.c.b16 %v3517, %v3509
        %v4366 = vpack.c.b16 %v3518, %v3510
        %v4367 = vpack.c.b16 %v3519, %v3511
        %v4368 = vpack.c.b16 %v3528, %v3520
        %v4369 = vpack.c.b16 %v3529, %v3521
        %v4370 = vpack.c.b16 %v3530, %v3522
        %v4371 = vpack.c.b16 %v3531, %v3523
        %v4372 = vpack.c.b16 %v3532, %v3524
        %v4373 = vpack.c.b16 %v3533, %v3525
        %v4374 = vpack.c.b16 %v3534, %v3526
        %v4375 = vpack.c.b16 %v3535, %v3527
        %v4376 = vpack.c.b16 %v3544, %v3536
        %v4377 = vpack.c.b16 %v3545, %v3537
        %v4378 = vpack.c.b16 %v3546, %v3538
        %v4379 = vpack.c.b16 %v3547, %v3539
        %v4380 = vpack.c.b16 %v3548, %v3540
        %v4381 = vpack.c.b16 %v3549, %v3541
        %v4382 = vpack.c.b16 %v3550, %v3542
        %v4383 = vpack.c.b16 %v3551, %v3543
        %v4384 = vpack.c.b16 %v3560, %v3552
        %v4385 = vpack.c.b16 %v3561, %v3553
        %v4386 = vpack.c.b16 %v3562, %v3554
        %v4387 = vpack.c.b16 %v3563, %v3555
        %v4388 = vpack.c.b16 %v3564, %v3556
        %v4389 = vpack.c.b16 %v3565, %v3557
        %v4390 = vpack.c.b16 %v3566, %v3558
        %v4391 = vpack.c.b16 %v3567, %v3559
        %v4392 = vpack.c.b16 %v3576, %v3568
        %v4393 = vpack.c.b16 %v3577, %v3569
        %v4394 = vpack.c.b16 %v3578, %v3570
        %v4395 = vpack.c.b16 %v3579, %v3571
        %v4396 = vpack.c.b16 %v3580, %v3572
        %v4397 = vpack.c.b16 %v3581, %v3573
        %v4398 = vpack.c.b16 %v3582, %v3574
        %v4399 = vpack.c.b16 %v3583, %v3575
        %v4400 = vpack.c.b16 %v3592, %v3584
        %v4401 = vpack.c.b16 %v3593, %v3585
        %v4402 = vpack.c.b16 %v3594, %v3586
        %v4403 = vpack.c.b16 %v3595, %v3587
        %v4404 = vpack.c.b16 %v3596, %v3588
        %v4405 = vpack.c.b16 %v3597, %v3589
        %v4406 = vpack.c.b16 %v3598, %v3590
        %v4407 = vpack.c.b16 %v3599, %v3591
        %v4408 = vpack.c.b16 %v3608, %v3600
        %v4409 = vpack.c.b16 %v3609, %v3601
        %v4410 = vpack.c.b16 %v3610, %v3602
        %v4411 = vpack.c.b16 %v3611, %v3603
        %v4412 = vpack.c.b16 %v3612, %v3604
        %v4413 = vpack.c.b16 %v3613, %v3605
        %v4414 = vpack.c.b16 %v3614, %v3606
        %v4415 = vpack.c.b16 %v3615, %v3607
        %v4416 = vpack.c.b16 %v3624, %v3616
        %v4417 = vpack.c.b16 %v3625, %v3617
        %v4418 = vpack.c.b16 %v3626, %v3618
        %v4419 = vpack.c.b16 %v3627, %v3619
        %v4420 = vpack.c.b16 %v3628, %v3620
        %v4421 = vpack.c.b16 %v3629, %v3621
        %v4422 = vpack.c.b16 %v3630, %v3622
        %v4423 = vpack.c.b16 %v3631, %v3623
        %v4424 = vpack.c.b16 %v3640, %v3632
        %v4425 = vpack.c.b16 %v3641, %v3633
        %v4426 = vpack.c.b16 %v3642, %v3634
        %v4427 = vpack.c.b16 %v3643, %v3635
        %v4428 = vpack.c.b16 %v3644, %v3636
        %v4429 = vpack.c.b16 %v3645, %v3637
        %v4430 = vpack.c.b16 %v3646, %v3638
        %v4431 = vpack.c.b16 %v3647, %v3639
        %v4432 = vpack.c.b16 %v3656, %v3648
        %v4433 = vpack.c.b16 %v3657, %v3649
        %v4434 = vpack.c.b16 %v3658, %v3650
        %v4435 = vpack.c.b16 %v3659, %v3651
        %v4436 = vpack.c.b16 %v3660, %v3652
        %v4437 = vpack.c.b16 %v3661, %v3653
        %v4438 = vpack.c.b16 %v3662, %v3654
        %v4439 = vpack.c.b16 %v3663, %v3655
        %v4440 = vpack.c.b16 %v3672, %v3664
        %v4441 = vpack.c.b16 %v3673, %v3665
        %v4442 = vpack.c.b16 %v3674, %v3666
        %v4443 = vpack.c.b16 %v3675, %v3667
        %v4444 = vpack.c.b16 %v3676, %v3668
        %v4445 = vpack.c.b16 %v3677, %v3669
        %v4446 = vpack.c.b16 %v3678, %v3670
        %v4447 = vpack.c.b16 %v3679, %v3671
        %v4448 = vpack.c.b16 %v3688, %v3680
        %v4449 = vpack.c.b16 %v3689, %v3681
        %v4450 = vpack.c.b16 %v3690, %v3682
        %v4451 = vpack.c.b16 %v3691, %v3683
        %v4452 = vpack.c.b16 %v3692, %v3684
        %v4453 = vpack.c.b16 %v3693, %v3685
        %v4454 = vpack.c.b16 %v3694, %v3686
        %v4455 = vpack.c.b16 %v3695, %v3687
        %v4456 = vpack.c.b16 %v3704, %v3696
        %v4457 = vpack.c.b16 %v3705, %v3697
        %v4458 = vpack.c.b16 %v3706, %v3698
        %v4459 = vpack.c.b16 %v3707, %v3699
        %v4460 = vpack.c.b16 %v3708, %v3700
        %v4461 = vpack.c.b16 %v3709, %v3701
        %v4462 = vpack.c.b16 %v3710, %v3702
        %v4463 = vpack.c.b16 %v3711, %v3703
        %v4464 = vpack.c.b16 %v3720, %v3712
        %v4465 = vpack.c.b16 %v3721, %v3713
        %v4466 = vpack.c.b16 %v3722, %v3714
        %v4467 = vpack.c.b16 %v3723, %v3715
        %v4468 = vpack.c.b16 %v3724, %v3716
        %v4469 = vpack.c.b16 %v3725, %v3717
        %v4470 = vpack.c.b16 %v3726, %v3718
        %v4471 = vpack.c.b16 %v3727, %v3719
        %v4472 = vpack.c.b16 %v3736, %v3728
        %v4473 = vpack.c.b16 %v3737, %v3729
        %v4474 = vpack.c.b16 %v3738, %v3730
        %v4475 = vpack.c.b16 %v3739, %v3731
        %v4476 = vpack.c.b16 %v3740, %v3732
        %v4477 = vpack.c.b16 %v3741, %v3733
        %v4478 = vpack.c.b16 %v3742, %v3734
        %v4479 = vpack.c.b16 %v3743, %v3735
        %v4480 = vpack.c.b16 %v3752, %v3744
        %v4481 = vpack.c.b16 %v3753, %v3745
        %v4482 = vpack.c.b16 %v3754, %v3746
        %v4483 = vpack.c.b16 %v3755, %v3747
        %v4484 = vpack.c.b16 %v3756, %v3748
        %v4485 = vpack.c.b16 %v3757, %v3749
        %v4486 = vpack.c.b16 %v3758, %v3750
        %v4487 = vpack.c.b16 %v3759, %v3751
        %v4488 = vpack.c.b16 %v3768, %v3760
        %v4489 = vpack.c.b16 %v3769, %v3761
        %v4490 = vpack.c.b16 %v3770, %v3762
        %v4491 = vpack.c.b16 %v3771, %v3763
        %v4492 = vpack.c.b16 %v3772, %v3764
        %v4493 = vpack.c.b16 %v3773, %v3765
        %v4494 = vpack.c.b16 %v3774, %v3766
        %v4495 = vpack.c.b16 %v3775, %v3767
        %v4496 = vpack.c.b16 %v3784, %v3776
        %v4497 = vpack.c.b16 %v3785, %v3777
        %v4498 = vpack.c.b16 %v3786, %v3778
        %v4499 = vpack.c.b16 %v3787, %v3779
        %v4500 = vpack.c.b16 %v3788, %v3780
        %v4501 = vpack.c.b16 %v3789, %v3781
        %v4502 = vpack.c.b16 %v3790, %v3782
        %v4503 = vpack.c.b16 %v3791, %v3783
        %v4504 = vpack.c.b16 %v3800, %v3792
        %v4505 = vpack.c.b16 %v3801, %v3793
        %v4506 = vpack.c.b16 %v3802, %v3794
        %v4507 = vpack.c.b16 %v3803, %v3795
        %v4508 = vpack.c.b16 %v3804, %v3796
        %v4509 = vpack.c.b16 %v3805, %v3797
        %v4510 = vpack.c.b16 %v3806, %v3798
        %v4511 = vpack.c.b16 %v3807, %v3799
        %v4512 = vpack.c.b16 %v3816, %v3808
        %v4513 = vpack.c.b16 %v3817, %v3809
        %v4514 = vpack.c.b16 %v3818, %v3810
        %v4515 = vpack.c.b16 %v3819, %v3811
        %v4516 = vpack.c.b16 %v3820, %v3812
        %v4517 = vpack.c.b16 %v3821, %v3813
        %v4518 = vpack.c.b16 %v3822, %v3814
        %v4519 = vpack.c.b16 %v3823, %v3815
        %v4520 = vpack.c.b16 %v3832, %v3824
        %v4521 = vpack.c.b16 %v3833, %v3825
        %v4522 = vpack.c.b16 %v3834, %v3826
        %v4523 = vpack.c.b16 %v3835, %v3827
        %v4524 = vpack.c.b16 %v3836, %v3828
        %v4525 = vpack.c.b16 %v3837, %v3829
        %v4526 = vpack.c.b16 %v3838, %v3830
        %v4527 = vpack.c.b16 %v3839, %v3831
        %v4528 = vpack.c.b16 %v3848, %v3840
        %v4529 = vpack.c.b16 %v3849, %v3841
        %v4530 = vpack.c.b16 %v3850, %v3842
        %v4531 = vpack.c.b16 %v3851, %v3843
        %v4532 = vpack.c.b16 %v3852, %v3844
        %v4533 = vpack.c.b16 %v3853, %v3845
        %v4534 = vpack.c.b16 %v3854, %v3846
        %v4535 = vpack.c.b16 %v3855, %v3847
        %v4536 = vpack.c.b16 %v3864, %v3856
        %v4537 = vpack.c.b16 %v3865, %v3857
        %v4538 = vpack.c.b16 %v3866, %v3858
        %v4539 = vpack.c.b16 %v3867, %v3859
        %v4540 = vpack.c.b16 %v3868, %v3860
        %v4541 = vpack.c.b16 %v3869, %v3861
        %v4542 = vpack.c.b16 %v3870, %v3862
        %v4543 = vpack.c.b16 %v3871, %v3863
        %v4544 = vpack.c.b16 %v3880, %v3872
        %v4545 = vpack.c.b16 %v3881, %v3873
        %v4546 = vpack.c.b16 %v3882, %v3874
        %v4547 = vpack.c.b16 %v3883, %v3875
        %v4548 = vpack.c.b16 %v3884, %v3876
        %v4549 = vpack.c.b16 %v3885, %v3877
        %v4550 = vpack.c.b16 %v3886, %v3878
        %v4551 = vpack.c.b16 %v3887, %v3879
        %v4552 = vpack.c.b16 %v3896, %v3888
        %v4553 = vpack.c.b16 %v3897, %v3889
        %v4554 = vpack.c.b16 %v3898, %v3890
        %v4555 = vpack.c.b16 %v3899, %v3891
        %v4556 = vpack.c.b16 %v3900, %v3892
        %v4557 = vpack.c.b16 %v3901, %v3893
        %v4558 = vpack.c.b16 %v3902, %v3894
        %v4559 = vpack.c.b16 %v3903, %v3895
        %v4560 = vpack.c.b16 %v3912, %v3904
        %v4561 = vpack.c.b16 %v3913, %v3905
        %v4562 = vpack.c.b16 %v3914, %v3906
        %v4563 = vpack.c.b16 %v3915, %v3907
        %v4564 = vpack.c.b16 %v3916, %v3908
        %v4565 = vpack.c.b16 %v3917, %v3909
        %v4566 = vpack.c.b16 %v3918, %v3910
        %v4567 = vpack.c.b16 %v3919, %v3911
        %v4568 = vpack.c.b16 %v3928, %v3920
        %v4569 = vpack.c.b16 %v3929, %v3921
        %v4570 = vpack.c.b16 %v3930, %v3922
        %v4571 = vpack.c.b16 %v3931, %v3923
        %v4572 = vpack.c.b16 %v3932, %v3924
        %v4573 = vpack.c.b16 %v3933, %v3925
        %v4574 = vpack.c.b16 %v3934, %v3926
        %v4575 = vpack.c.b16 %v3935, %v3927
        %v4576 = vpack.c.b16 %v3944, %v3936
        %v4577 = vpack.c.b16 %v3945, %v3937
        %v4578 = vpack.c.b16 %v3946, %v3938
        %v4579 = vpack.c.b16 %v3947, %v3939
        %v4580 = vpack.c.b16 %v3948, %v3940
        %v4581 = vpack.c.b16 %v3949, %v3941
        %v4582 = vpack.c.b16 %v3950, %v3942
        %v4583 = vpack.c.b16 %v3951, %v3943
        %v4584 = vpack.c.b16 %v3960, %v3952
        %v4585 = vpack.c.b16 %v3961, %v3953
        %v4586 = vpack.c.b16 %v3962, %v3954
        %v4587 = vpack.c.b16 %v3963, %v3955
        %v4588 = vpack.c.b16 %v3964, %v3956
        %v4589 = vpack.c.b16 %v3965, %v3957
        %v4590 = vpack.c.b16 %v3966, %v3958
        %v4591 = vpack.c.b16 %v3967, %v3959
        %v4592 = vpack.c.b16 %v3976, %v3968
        %v4593 = vpack.c.b16 %v3977, %v3969
        %v4594 = vpack.c.b16 %v3978, %v3970
        %v4595 = vpack.c.b16 %v3979, %v3971
        %v4596 = vpack.c.b16 %v3980, %v3972
        %v4597 = vpack.c.b16 %v3981, %v3973
        %v4598 = vpack.c.b16 %v3982, %v3974
        %v4599 = vpack.c.b16 %v3983, %v3975
        %v4600 = vpack.c.b16 %v3992, %v3984
        %v4601 = vpack.c.b16 %v3993, %v3985
        %v4602 = vpack.c.b16 %v3994, %v3986
        %v4603 = vpack.c.b16 %v3995, %v3987
        %v4604 = vpack.c.b16 %v3996, %v3988
        %v4605 = vpack.c.b16 %v3997, %v3989
        %v4606 = vpack.c.b16 %v3998, %v3990
        %v4607 = vpack.c.b16 %v3999, %v3991
        %v4608 = vpack.c.b16 %v4008, %v4000
        %v4609 = vpack.c.b16 %v4009, %v4001
        %v4610 = vpack.c.b16 %v4010, %v4002
        %v4611 = vpack.c.b16 %v4011, %v4003
        %v4612 = vpack.c.b16 %v4012, %v4004
        %v4613 = vpack.c.b16 %v4013, %v4005
        %v4614 = vpack.c.b16 %v4014, %v4006
        %v4615 = vpack.c.b16 %v4015, %v4007
        %v4616 = vpack.c.b16 %v4024, %v4016
        %v4617 = vpack.c.b16 %v4025, %v4017
        %v4618 = vpack.c.b16 %v4026, %v4018
        %v4619 = vpack.c.b16 %v4027, %v4019
        %v4620 = vpack.c.b16 %v4028, %v4020
        %v4621 = vpack.c.b16 %v4029, %v4021
        %v4622 = vpack.c.b16 %v4030, %v4022
        %v4623 = vpack.c.b16 %v4031, %v4023
        %v4624 = vpack.c.b16 %v4040, %v4032
        %v4625 = vpack.c.b16 %v4041, %v4033
        %v4626 = vpack.c.b16 %v4042, %v4034
        %v4627 = vpack.c.b16 %v4043, %v4035
        %v4628 = vpack.c.b16 %v4044, %v4036
        %v4629 = vpack.c.b16 %v4045, %v4037
        %v4630 = vpack.c.b16 %v4046, %v4038
        %v4631 = vpack.c.b16 %v4047, %v4039
        %v4632 = vpack.c.b16 %v4056, %v4048
        %v4633 = vpack.c.b16 %v4057, %v4049
        %v4634 = vpack.c.b16 %v4058, %v4050
        %v4635 = vpack.c.b16 %v4059, %v4051
        %v4636 = vpack.c.b16 %v4060, %v4052
        %v4637 = vpack.c.b16 %v4061, %v4053
        %v4638 = vpack.c.b16 %v4062, %v4054
        %v4639 = vpack.c.b16 %v4063, %v4055
        %v4640 = vpack.c.b16 %v4072, %v4064
        %v4641 = vpack.c.b16 %v4073, %v4065
        %v4642 = vpack.c.b16 %v4074, %v4066
        %v4643 = vpack.c.b16 %v4075, %v4067
        %v4644 = vpack.c.b16 %v4076, %v4068
        %v4645 = vpack.c.b16 %v4077, %v4069
        %v4646 = vpack.c.b16 %v4078, %v4070
        %v4647 = vpack.c.b16 %v4079, %v4071
        %v4648 = vpack.c.b16 %v4088, %v4080
        %v4649 = vpack.c.b16 %v4089, %v4081
        %v4650 = vpack.c.b16 %v4090, %v4082
        %v4651 = vpack.c.b16 %v4091, %v4083
        %v4652 = vpack.c.b16 %v4092, %v4084
        %v4653 = vpack.c.b16 %v4093, %v4085
        %v4654 = vpack.c.b16 %v4094, %v4086
        %v4655 = vpack.c.b16 %v4095, %v4087
        %v4656 = vpack.c.b16 %v4104, %v4096
        %v4657 = vpack.c.b16 %v4105, %v4097
        %v4658 = vpack.c.b16 %v4106, %v4098
        %v4659 = vpack.c.b16 %v4107, %v4099
        %v4660 = vpack.c.b16 %v4108, %v4100
        %v4661 = vpack.c.b16 %v4109, %v4101
        %v4662 = vpack.c.b16 %v4110, %v4102
        %v4663 = vpack.c.b16 %v4111, %v4103
        %v4664 = vpack.c.b16 %v4120, %v4112
        %v4665 = vpack.c.b16 %v4121, %v4113
        %v4666 = vpack.c.b16 %v4122, %v4114
        %v4667 = vpack.c.b16 %v4123, %v4115
        %v4668 = vpack.c.b16 %v4124, %v4116
        %v4669 = vpack.c.b16 %v4125, %v4117
        %v4670 = vpack.c.b16 %v4126, %v4118
        %v4671 = vpack.c.b16 %v4127, %v4119
        %v4672 = vpack.c.b16 %v4136, %v4128
        %v4673 = vpack.c.b16 %v4137, %v4129
        %v4674 = vpack.c.b16 %v4138, %v4130
        %v4675 = vpack.c.b16 %v4139, %v4131
        %v4676 = vpack.c.b16 %v4140, %v4132
        %v4677 = vpack.c.b16 %v4141, %v4133
        %v4678 = vpack.c.b16 %v4142, %v4134
        %v4679 = vpack.c.b16 %v4143, %v4135
        %v4680 = vpack.c.b16 %v4152, %v4144
        %v4681 = vpack.c.b16 %v4153, %v4145
        %v4682 = vpack.c.b16 %v4154, %v4146
        %v4683 = vpack.c.b16 %v4155, %v4147
        %v4684 = vpack.c.b16 %v4156, %v4148
        %v4685 = vpack.c.b16 %v4157, %v4149
        %v4686 = vpack.c.b16 %v4158, %v4150
        %v4687 = vpack.c.b16 %v4159, %v4151
        %v4688 = vpack.c.b16 %v4168, %v4160
        %v4689 = vpack.c.b16 %v4169, %v4161
        %v4690 = vpack.c.b16 %v4170, %v4162
        %v4691 = vpack.c.b16 %v4171, %v4163
        %v4692 = vpack.c.b16 %v4172, %v4164
        %v4693 = vpack.c.b16 %v4173, %v4165
        %v4694 = vpack.c.b16 %v4174, %v4166
        %v4695 = vpack.c.b16 %v4175, %v4167
        %v4696 = vpack.c.b16 %v4184, %v4176
        %v4697 = vpack.c.b16 %v4185, %v4177
        %v4698 = vpack.c.b16 %v4186, %v4178
        %v4699 = vpack.c.b16 %v4187, %v4179
        %v4700 = vpack.c.b16 %v4188, %v4180
        %v4701 = vpack.c.b16 %v4189, %v4181
        %v4702 = vpack.c.b16 %v4190, %v4182
        %v4703 = vpack.c.b16 %v4191, %v4183
        %5216 = vmatprep.subr.bf16.mxu0 %v4193
        %5217 = vmatpush1.bf16.msra.mxu0 %v4192
        %5218 = vmatprep.subr.bf16.mxu0 %v4201
        %5219 = vmatpush1.bf16.msra.mxu0 %v4200
        %5220 = vmatprep.subr.bf16.mxu0 %v4209
        %5221 = vmatpush1.bf16.msra.mxu0 %v4208
        %5222 = vmatprep.subr.bf16.mxu0 %v4217
        %5223 = vmatpush1.bf16.msra.mxu0 %v4216
        %5224 = vmatprep.subr.bf16.mxu0 %v4225
        %5225 = vmatpush1.bf16.msra.mxu0 %v4224
        %5226 = vmatprep.subr.bf16.mxu0 %v4233
        %5227 = vmatpush1.bf16.msra.mxu0 %v4232
        %5228 = vmatprep.subr.bf16.mxu0 %v4241
        %5229 = vmatpush1.bf16.msra.mxu0 %v4240
        %5230 = vmatprep.subr.bf16.mxu0 %v4249
        %5231 = vmatpush1.bf16.msra.mxu0 %v4248
        %5232 = vmatprep.subr.bf16.mxu0 %v4257
        %5233 = vmatpush1.bf16.msra.mxu0 %v4256
        %5234 = vmatprep.subr.bf16.mxu0 %v4265
        %5235 = vmatpush1.bf16.msra.mxu0 %v4264
        %5236 = vmatprep.subr.bf16.mxu0 %v4273
        %5237 = vmatpush1.bf16.msra.mxu0 %v4272
        %5238 = vmatprep.subr.bf16.mxu0 %v4281
        %5239 = vmatpush1.bf16.msra.mxu0 %v4280
        %5240 = vmatprep.subr.bf16.mxu0 %v4289
        %5241 = vmatpush1.bf16.msra.mxu0 %v4288
        %5242 = vmatprep.subr.bf16.mxu0 %v4297
        %5243 = vmatpush1.bf16.msra.mxu0 %v4296
        %5244 = vmatprep.subr.bf16.mxu0 %v4305
        %5245 = vmatpush1.bf16.msra.mxu0 %v4304
        %5246 = vmatprep.subr.bf16.mxu0 %v4313
        %5247 = vmatpush1.bf16.msra.mxu0 %v4312
        %5248 = vmatprep.mubr.bf16.mxu0 %v2137
        %5249 = vmatmul.mubr.bf16.gmra.mrb[0].mxu0 %v2136
        %v5250 = vpop.f32.mrb[0].mxu0
        %v5251 = vadd.f32 0.0, %v5250
        %v5252 = vpop.f32.mrb[0].mxu0
        %v5253 = vadd.f32 0.0, %v5252
        %v5254 = vpop.f32.mrb[0].mxu0
        %v5255 = vpop.f32.mrb[0].mxu0
        %5256 = vdwg.mxu0
        %5257 = vmatprep.subr.bf16.mxu0 %v4321
        %5258 = vmatpush1.bf16.msra.mxu0 %v4320
        %5259 = vmatprep.subr.bf16.mxu0 %v4329
        %5260 = vmatpush1.bf16.msra.mxu0 %v4328
        %5261 = vmatprep.subr.bf16.mxu0 %v4337
        %5262 = vmatpush1.bf16.msra.mxu0 %v4336
        %5263 = vmatprep.subr.bf16.mxu0 %v4345
        %5264 = vmatpush1.bf16.msra.mxu0 %v4344
        %5265 = vmatprep.subr.bf16.mxu0 %v4353
        %5266 = vmatpush1.bf16.msra.mxu0 %v4352
        %5267 = vmatprep.subr.bf16.mxu0 %v4361
        %5268 = vmatpush1.bf16.msra.mxu0 %v4360
        %5269 = vmatprep.subr.bf16.mxu0 %v4369
        %5270 = vmatpush1.bf16.msra.mxu0 %v4368
        %5271 = vmatprep.subr.bf16.mxu0 %v4377
        %5272 = vmatpush1.bf16.msra.mxu0 %v4376
        %5273 = vmatprep.subr.bf16.mxu0 %v4385
        %5274 = vmatpush1.bf16.msra.mxu0 %v4384
        %5275 = vmatprep.subr.bf16.mxu0 %v4393
        %5276 = vmatpush1.bf16.msra.mxu0 %v4392
        %5277 = vmatprep.subr.bf16.mxu0 %v4401
        %5278 = vmatpush1.bf16.msra.mxu0 %v4400
        %5279 = vmatprep.subr.bf16.mxu0 %v4409
        %5280 = vmatpush1.bf16.msra.mxu0 %v4408
        %5281 = vmatprep.subr.bf16.mxu0 %v4417
        %5282 = vmatpush1.bf16.msra.mxu0 %v4416
        %5283 = vmatprep.subr.bf16.mxu0 %v4425
        %5284 = vmatpush1.bf16.msra.mxu0 %v4424
        %5285 = vmatprep.subr.bf16.mxu0 %v4433
        %5286 = vmatpush1.bf16.msra.mxu0 %v4432
        %5287 = vmatprep.subr.bf16.mxu0 %v4441
        %5288 = vmatpush1.bf16.msra.mxu0 %v4440
        %5289 = vmatprep.mubr.bf16.mxu0 %v2139
        %5290 = vmatmul.mubr.bf16.gmra.mrb[0].mxu0 %v2138
        %v5291 = vpop.f32.mrb[0].mxu0
        %v5292 = vadd.f32 %v5251, %v5291
        %v5293 = vpop.f32.mrb[0].mxu0
        %v5294 = vadd.f32 %v5253, %v5293
        %v5295 = vpop.f32.mrb[0].mxu0
        %v5296 = vpop.f32.mrb[0].mxu0
        %5297 = vdwg.mxu0
        %5298 = vmatprep.subr.bf16.mxu0 %v4449
        %5299 = vmatpush1.bf16.msra.mxu0 %v4448
        %5300 = vmatprep.subr.bf16.mxu0 %v4457
        %5301 = vmatpush1.bf16.msra.mxu0 %v4456
        %5302 = vmatprep.subr.bf16.mxu0 %v4465
        %5303 = vmatpush1.bf16.msra.mxu0 %v4464
        %5304 = vmatprep.subr.bf16.mxu0 %v4473
        %5305 = vmatpush1.bf16.msra.mxu0 %v4472
        %5306 = vmatprep.subr.bf16.mxu0 %v4481
        %5307 = vmatpush1.bf16.msra.mxu0 %v4480
        %5308 = vmatprep.subr.bf16.mxu0 %v4489
        %5309 = vmatpush1.bf16.msra.mxu0 %v4488
        %5310 = vmatprep.subr.bf16.mxu0 %v4497
        %5311 = vmatpush1.bf16.msra.mxu0 %v4496
        %5312 = vmatprep.subr.bf16.mxu0 %v4505
        %5313 = vmatpush1.bf16.msra.mxu0 %v4504
        %5314 = vmatprep.subr.bf16.mxu0 %v4513
        %5315 = vmatpush1.bf16.msra.mxu0 %v4512
        %5316 = vmatprep.subr.bf16.mxu0 %v4521
        %5317 = vmatpush1.bf16.msra.mxu0 %v4520
        %5318 = vmatprep.subr.bf16.mxu0 %v4529
        %5319 = vmatpush1.bf16.msra.mxu0 %v4528
        %5320 = vmatprep.subr.bf16.mxu0 %v4537
        %5321 = vmatpush1.bf16.msra.mxu0 %v4536
        %5322 = vmatprep.subr.bf16.mxu0 %v4545
        %5323 = vmatpush1.bf16.msra.mxu0 %v4544
        %5324 = vmatprep.subr.bf16.mxu0 %v4553
        %5325 = vmatpush1.bf16.msra.mxu0 %v4552
        %5326 = vmatprep.subr.bf16.mxu0 %v4561
        %5327 = vmatpush1.bf16.msra.mxu0 %v4560
        %5328 = vmatprep.subr.bf16.mxu0 %v4569
        %5329 = vmatpush1.bf16.msra.mxu0 %v4568
        %5330 = vmatprep.mubr.bf16.mxu0 %v2141
        %5331 = vmatmul.mubr.bf16.gmra.mrb[0].mxu0 %v2140
        %v5332 = vpop.f32.mrb[0].mxu0
        %v5333 = vadd.f32 %v5292, %v5332
        %v5334 = vpop.f32.mrb[0].mxu0
        %v5335 = vadd.f32 %v5294, %v5334
        %v5336 = vpop.f32.mrb[0].mxu0
        %v5337 = vpop.f32.mrb[0].mxu0
        %5338 = vdwg.mxu0
        %5339 = vmatprep.subr.bf16.mxu0 %v4577
        %5340 = vmatpush1.bf16.msra.mxu0 %v4576
        %5341 = vmatprep.subr.bf16.mxu0 %v4585
        %5342 = vmatpush1.bf16.msra.mxu0 %v4584
        %5343 = vmatprep.subr.bf16.mxu0 %v4593
        %5344 = vmatpush1.bf16.msra.mxu0 %v4592
        %5345 = vmatprep.subr.bf16.mxu0 %v4601
        %5346 = vmatpush1.bf16.msra.mxu0 %v4600
        %5347 = vmatprep.subr.bf16.mxu0 %v4609
        %5348 = vmatpush1.bf16.msra.mxu0 %v4608
        %5349 = vmatprep.subr.bf16.mxu0 %v4617
        %5350 = vmatpush1.bf16.msra.mxu0 %v4616
        %5351 = vmatprep.subr.bf16.mxu0 %v4625
        %5352 = vmatpush1.bf16.msra.mxu0 %v4624
        %5353 = vmatprep.subr.bf16.mxu0 %v4633
        %5354 = vmatpush1.bf16.msra.mxu0 %v4632
        %5355 = vmatprep.subr.bf16.mxu0 %v4641
        %5356 = vmatpush1.bf16.msra.mxu0 %v4640
        %5357 = vmatprep.subr.bf16.mxu0 %v4649
        %5358 = vmatpush1.bf16.msra.mxu0 %v4648
        %5359 = vmatprep.subr.bf16.mxu0 %v4657
        %5360 = vmatpush1.bf16.msra.mxu0 %v4656
        %5361 = vmatprep.subr.bf16.mxu0 %v4665
        %5362 = vmatpush1.bf16.msra.mxu0 %v4664
        %5363 = vmatprep.subr.bf16.mxu0 %v4673
        %5364 = vmatpush1.bf16.msra.mxu0 %v4672
        %5365 = vmatprep.subr.bf16.mxu0 %v4681
        %5366 = vmatpush1.bf16.msra.mxu0 %v4680
        %5367 = vmatprep.subr.bf16.mxu0 %v4689
        %5368 = vmatpush1.bf16.msra.mxu0 %v4688
        %5369 = vmatprep.subr.bf16.mxu0 %v4697
        %5370 = vmatpush1.bf16.msra.mxu0 %v4696
        %5371 = vmatprep.mubr.bf16.mxu0 %v2143
        %5372 = vmatmul.mubr.bf16.gmra.mrb[0].mxu0 %v2142
        %v5373 = vpop.f32.mrb[0].mxu0
        %v5374 = vadd.f32 %v5333, %v5373
        %v5375 = vpop.f32.mrb[0].mxu0
        %v5376 = vadd.f32 %v5335, %v5375
        %v5377 = vpop.f32.mrb[0].mxu0
        %v5378 = vpop.f32.mrb[0].mxu0
        %5379 = vdwg.mxu0
        %5380 = vmatprep.subr.bf16.mxu0 %v4195
        %5381 = vmatpush1.bf16.msra.mxu0 %v4194
        %5382 = vmatprep.subr.bf16.mxu0 %v4203
        %5383 = vmatpush1.bf16.msra.mxu0 %v4202
        %5384 = vmatprep.subr.bf16.mxu0 %v4211
        %5385 = vmatpush1.bf16.msra.mxu0 %v4210
        %5386 = vmatprep.subr.bf16.mxu0 %v4219
        %5387 = vmatpush1.bf16.msra.mxu0 %v4218
        %5388 = vmatprep.subr.bf16.mxu0 %v4227
        %5389 = vmatpush1.bf16.msra.mxu0 %v4226
        %5390 = vmatprep.subr.bf16.mxu0 %v4235
        %5391 = vmatpush1.bf16.msra.mxu0 %v4234
        %5392 = vmatprep.subr.bf16.mxu0 %v4243
        %5393 = vmatpush1.bf16.msra.mxu0 %v4242
        %5394 = vmatprep.subr.bf16.mxu0 %v4251
        %5395 = vmatpush1.bf16.msra.mxu0 %v4250
        %5396 = vmatprep.subr.bf16.mxu0 %v4259
        %5397 = vmatpush1.bf16.msra.mxu0 %v4258
        %5398 = vmatprep.subr.bf16.mxu0 %v4267
        %5399 = vmatpush1.bf16.msra.mxu0 %v4266
        %5400 = vmatprep.subr.bf16.mxu0 %v4275
        %5401 = vmatpush1.bf16.msra.mxu0 %v4274
        %5402 = vmatprep.subr.bf16.mxu0 %v4283
        %5403 = vmatpush1.bf16.msra.mxu0 %v4282
        %5404 = vmatprep.subr.bf16.mxu0 %v4291
        %5405 = vmatpush1.bf16.msra.mxu0 %v4290
        %5406 = vmatprep.subr.bf16.mxu0 %v4299
        %5407 = vmatpush1.bf16.msra.mxu0 %v4298
        %5408 = vmatprep.subr.bf16.mxu0 %v4307
        %5409 = vmatpush1.bf16.msra.mxu0 %v4306
        %5410 = vmatprep.subr.bf16.mxu0 %v4315
        %5411 = vmatpush1.bf16.msra.mxu0 %v4314
        %5412 = vmatprep.mubr.bf16.mxu0 %v2137
        %5413 = vmatmul.mubr.bf16.gmra.mrb[0].mxu0 %v2136
        %v5414 = vpop.f32.mrb[0].mxu0
        %v5415 = vadd.f32 0.0, %v5414
        %v5416 = vpop.f32.mrb[0].mxu0
        %v5417 = vadd.f32 0.0, %v5416
        %v5418 = vpop.f32.mrb[0].mxu0
        %v5419 = vpop.f32.mrb[0].mxu0
        %5420 = vdwg.mxu0
        %5421 = vmatprep.subr.bf16.mxu0 %v4323
        %5422 = vmatpush1.bf16.msra.mxu0 %v4322
        %5423 = vmatprep.subr.bf16.mxu0 %v4331
        %5424 = vmatpush1.bf16.msra.mxu0 %v4330
        %5425 = vmatprep.subr.bf16.mxu0 %v4339
        %5426 = vmatpush1.bf16.msra.mxu0 %v4338
        %5427 = vmatprep.subr.bf16.mxu0 %v4347
        %5428 = vmatpush1.bf16.msra.mxu0 %v4346
        %5429 = vmatprep.subr.bf16.mxu0 %v4355
        %5430 = vmatpush1.bf16.msra.mxu0 %v4354
        %5431 = vmatprep.subr.bf16.mxu0 %v4363
        %5432 = vmatpush1.bf16.msra.mxu0 %v4362
        %5433 = vmatprep.subr.bf16.mxu0 %v4371
        %5434 = vmatpush1.bf16.msra.mxu0 %v4370
        %5435 = vmatprep.subr.bf16.mxu0 %v4379
        %5436 = vmatpush1.bf16.msra.mxu0 %v4378
        %5437 = vmatprep.subr.bf16.mxu0 %v4387
        %5438 = vmatpush1.bf16.msra.mxu0 %v4386
        %5439 = vmatprep.subr.bf16.mxu0 %v4395
        %5440 = vmatpush1.bf16.msra.mxu0 %v4394
        %5441 = vmatprep.subr.bf16.mxu0 %v4403
        %5442 = vmatpush1.bf16.msra.mxu0 %v4402
        %5443 = vmatprep.subr.bf16.mxu0 %v4411
        %5444 = vmatpush1.bf16.msra.mxu0 %v4410
        %5445 = vmatprep.subr.bf16.mxu0 %v4419
        %5446 = vmatpush1.bf16.msra.mxu0 %v4418
        %5447 = vmatprep.subr.bf16.mxu0 %v4427
        %5448 = vmatpush1.bf16.msra.mxu0 %v4426
        %5449 = vmatprep.subr.bf16.mxu0 %v4435
        %5450 = vmatpush1.bf16.msra.mxu0 %v4434
        %5451 = vmatprep.subr.bf16.mxu0 %v4443
        %5452 = vmatpush1.bf16.msra.mxu0 %v4442
        %5453 = vmatprep.mubr.bf16.mxu0 %v2139
        %5454 = vmatmul.mubr.bf16.gmra.mrb[0].mxu0 %v2138
        %v5455 = vpop.f32.mrb[0].mxu0
        %v5456 = vadd.f32 %v5415, %v5455
        %v5457 = vpop.f32.mrb[0].mxu0
        %v5458 = vadd.f32 %v5417, %v5457
        %v5459 = vpop.f32.mrb[0].mxu0
        %v5460 = vpop.f32.mrb[0].mxu0
        %5461 = vdwg.mxu0
        %5462 = vmatprep.subr.bf16.mxu0 %v4451
        %5463 = vmatpush1.bf16.msra.mxu0 %v4450
        %5464 = vmatprep.subr.bf16.mxu0 %v4459
        %5465 = vmatpush1.bf16.msra.mxu0 %v4458
        %5466 = vmatprep.subr.bf16.mxu0 %v4467
        %5467 = vmatpush1.bf16.msra.mxu0 %v4466
        %5468 = vmatprep.subr.bf16.mxu0 %v4475
        %5469 = vmatpush1.bf16.msra.mxu0 %v4474
        %5470 = vmatprep.subr.bf16.mxu0 %v4483
        %5471 = vmatpush1.bf16.msra.mxu0 %v4482
        %5472 = vmatprep.subr.bf16.mxu0 %v4491
        %5473 = vmatpush1.bf16.msra.mxu0 %v4490
        %5474 = vmatprep.subr.bf16.mxu0 %v4499
        %5475 = vmatpush1.bf16.msra.mxu0 %v4498
        %5476 = vmatprep.subr.bf16.mxu0 %v4507
        %5477 = vmatpush1.bf16.msra.mxu0 %v4506
        %5478 = vmatprep.subr.bf16.mxu0 %v4515
        %5479 = vmatpush1.bf16.msra.mxu0 %v4514
        %5480 = vmatprep.subr.bf16.mxu0 %v4523
        %5481 = vmatpush1.bf16.msra.mxu0 %v4522
        %5482 = vmatprep.subr.bf16.mxu0 %v4531
        %5483 = vmatpush1.bf16.msra.mxu0 %v4530
        %5484 = vmatprep.subr.bf16.mxu0 %v4539
        %5485 = vmatpush1.bf16.msra.mxu0 %v4538
        %5486 = vmatprep.subr.bf16.mxu0 %v4547
        %5487 = vmatpush1.bf16.msra.mxu0 %v4546
        %5488 = vmatprep.subr.bf16.mxu0 %v4555
        %5489 = vmatpush1.bf16.msra.mxu0 %v4554
        %5490 = vmatprep.subr.bf16.mxu0 %v4563
        %5491 = vmatpush1.bf16.msra.mxu0 %v4562
        %5492 = vmatprep.subr.bf16.mxu0 %v4571
        %5493 = vmatpush1.bf16.msra.mxu0 %v4570
        %5494 = vmatprep.mubr.bf16.mxu0 %v2141
        %5495 = vmatmul.mubr.bf16.gmra.mrb[0].mxu0 %v2140
        %v5496 = vpop.f32.mrb[0].mxu0
        %v5497 = vadd.f32 %v5456, %v5496
        %v5498 = vpop.f32.mrb[0].mxu0
        %v5499 = vadd.f32 %v5458, %v5498
        %v5500 = vpop.f32.mrb[0].mxu0
        %v5501 = vpop.f32.mrb[0].mxu0
        %5502 = vdwg.mxu0
        %5503 = vmatprep.subr.bf16.mxu0 %v4579
        %5504 = vmatpush1.bf16.msra.mxu0 %v4578
        %5505 = vmatprep.subr.bf16.mxu0 %v4587
        %5506 = vmatpush1.bf16.msra.mxu0 %v4586
        %5507 = vmatprep.subr.bf16.mxu0 %v4595
        %5508 = vmatpush1.bf16.msra.mxu0 %v4594
        %5509 = vmatprep.subr.bf16.mxu0 %v4603
        %5510 = vmatpush1.bf16.msra.mxu0 %v4602
        %5511 = vmatprep.subr.bf16.mxu0 %v4611
        %5512 = vmatpush1.bf16.msra.mxu0 %v4610
        %5513 = vmatprep.subr.bf16.mxu0 %v4619
        %5514 = vmatpush1.bf16.msra.mxu0 %v4618
        %5515 = vmatprep.subr.bf16.mxu0 %v4627
        %5516 = vmatpush1.bf16.msra.mxu0 %v4626
        %5517 = vmatprep.subr.bf16.mxu0 %v4635
        %5518 = vmatpush1.bf16.msra.mxu0 %v4634
        %5519 = vmatprep.subr.bf16.mxu0 %v4643
        %5520 = vmatpush1.bf16.msra.mxu0 %v4642
        %5521 = vmatprep.subr.bf16.mxu0 %v4651
        %5522 = vmatpush1.bf16.msra.mxu0 %v4650
        %5523 = vmatprep.subr.bf16.mxu0 %v4659
        %5524 = vmatpush1.bf16.msra.mxu0 %v4658
        %5525 = vmatprep.subr.bf16.mxu0 %v4667
        %5526 = vmatpush1.bf16.msra.mxu0 %v4666
        %5527 = vmatprep.subr.bf16.mxu0 %v4675
        %5528 = vmatpush1.bf16.msra.mxu0 %v4674
        %5529 = vmatprep.subr.bf16.mxu0 %v4683
        %5530 = vmatpush1.bf16.msra.mxu0 %v4682
        %5531 = vmatprep.subr.bf16.mxu0 %v4691
        %5532 = vmatpush1.bf16.msra.mxu0 %v4690
        %5533 = vmatprep.subr.bf16.mxu0 %v4699
        %5534 = vmatpush1.bf16.msra.mxu0 %v4698
        %5535 = vmatprep.mubr.bf16.mxu0 %v2143
        %5536 = vmatmul.mubr.bf16.gmra.mrb[0].mxu0 %v2142
        %v5537 = vpop.f32.mrb[0].mxu0
        %v5538 = vadd.f32 %v5497, %v5537
        %v5539 = vpop.f32.mrb[0].mxu0
        %v5540 = vadd.f32 %v5499, %v5539
        %v5541 = vpop.f32.mrb[0].mxu0
        %v5542 = vpop.f32.mrb[0].mxu0
        %5543 = vdwg.mxu0
        %5544 = vmatprep.subr.bf16.mxu0 %v4197
        %5545 = vmatpush1.bf16.msra.mxu0 %v4196
        %5546 = vmatprep.subr.bf16.mxu0 %v4205
        %5547 = vmatpush1.bf16.msra.mxu0 %v4204
        %5548 = vmatprep.subr.bf16.mxu0 %v4213
        %5549 = vmatpush1.bf16.msra.mxu0 %v4212
        %5550 = vmatprep.subr.bf16.mxu0 %v4221
        %5551 = vmatpush1.bf16.msra.mxu0 %v4220
        %5552 = vmatprep.subr.bf16.mxu0 %v4229
        %5553 = vmatpush1.bf16.msra.mxu0 %v4228
        %5554 = vmatprep.subr.bf16.mxu0 %v4237
        %5555 = vmatpush1.bf16.msra.mxu0 %v4236
        %5556 = vmatprep.subr.bf16.mxu0 %v4245
        %5557 = vmatpush1.bf16.msra.mxu0 %v4244
        %5558 = vmatprep.subr.bf16.mxu0 %v4253
        %5559 = vmatpush1.bf16.msra.mxu0 %v4252
        %5560 = vmatprep.subr.bf16.mxu0 %v4261
        %5561 = vmatpush1.bf16.msra.mxu0 %v4260
        %5562 = vmatprep.subr.bf16.mxu0 %v4269
        %5563 = vmatpush1.bf16.msra.mxu0 %v4268
        %5564 = vmatprep.subr.bf16.mxu0 %v4277
        %5565 = vmatpush1.bf16.msra.mxu0 %v4276
        %5566 = vmatprep.subr.bf16.mxu0 %v4285
        %5567 = vmatpush1.bf16.msra.mxu0 %v4284
        %5568 = vmatprep.subr.bf16.mxu0 %v4293
        %5569 = vmatpush1.bf16.msra.mxu0 %v4292
        %5570 = vmatprep.subr.bf16.mxu0 %v4301
        %5571 = vmatpush1.bf16.msra.mxu0 %v4300
        %5572 = vmatprep.subr.bf16.mxu0 %v4309
        %5573 = vmatpush1.bf16.msra.mxu0 %v4308
        %5574 = vmatprep.subr.bf16.mxu0 %v4317
        %5575 = vmatpush1.bf16.msra.mxu0 %v4316
        %5576 = vmatprep.mubr.bf16.mxu0 %v2137
        %5577 = vmatmul.mubr.bf16.gmra.mrb[0].mxu0 %v2136
        %v5578 = vpop.f32.mrb[0].mxu0
        %v5579 = vadd.f32 0.0, %v5578
        %v5580 = vpop.f32.mrb[0].mxu0
        %v5581 = vadd.f32 0.0, %v5580
        %v5582 = vpop.f32.mrb[0].mxu0
        %v5583 = vpop.f32.mrb[0].mxu0
        %5584 = vdwg.mxu0
        %5585 = vmatprep.subr.bf16.mxu0 %v4325
        %5586 = vmatpush1.bf16.msra.mxu0 %v4324
        %5587 = vmatprep.subr.bf16.mxu0 %v4333
        %5588 = vmatpush1.bf16.msra.mxu0 %v4332
        %5589 = vmatprep.subr.bf16.mxu0 %v4341
        %5590 = vmatpush1.bf16.msra.mxu0 %v4340
        %5591 = vmatprep.subr.bf16.mxu0 %v4349
        %5592 = vmatpush1.bf16.msra.mxu0 %v4348
        %5593 = vmatprep.subr.bf16.mxu0 %v4357
        %5594 = vmatpush1.bf16.msra.mxu0 %v4356
        %5595 = vmatprep.subr.bf16.mxu0 %v4365
        %5596 = vmatpush1.bf16.msra.mxu0 %v4364
        %5597 = vmatprep.subr.bf16.mxu0 %v4373
        %5598 = vmatpush1.bf16.msra.mxu0 %v4372
        %5599 = vmatprep.subr.bf16.mxu0 %v4381
        %5600 = vmatpush1.bf16.msra.mxu0 %v4380
        %5601 = vmatprep.subr.bf16.mxu0 %v4389
        %5602 = vmatpush1.bf16.msra.mxu0 %v4388
        %5603 = vmatprep.subr.bf16.mxu0 %v4397
        %5604 = vmatpush1.bf16.msra.mxu0 %v4396
        %5605 = vmatprep.subr.bf16.mxu0 %v4405
        %5606 = vmatpush1.bf16.msra.mxu0 %v4404
        %5607 = vmatprep.subr.bf16.mxu0 %v4413
        %5608 = vmatpush1.bf16.msra.mxu0 %v4412
        %5609 = vmatprep.subr.bf16.mxu0 %v4421
        %5610 = vmatpush1.bf16.msra.mxu0 %v4420
        %5611 = vmatprep.subr.bf16.mxu0 %v4429
        %5612 = vmatpush1.bf16.msra.mxu0 %v4428
        %5613 = vmatprep.subr.bf16.mxu0 %v4437
        %5614 = vmatpush1.bf16.msra.mxu0 %v4436
        %5615 = vmatprep.subr.bf16.mxu0 %v4445
        %5616 = vmatpush1.bf16.msra.mxu0 %v4444
        %5617 = vmatprep.mubr.bf16.mxu0 %v2139
        %5618 = vmatmul.mubr.bf16.gmra.mrb[0].mxu0 %v2138
        %v5619 = vpop.f32.mrb[0].mxu0
        %v5620 = vadd.f32 %v5579, %v5619
        %v5621 = vpop.f32.mrb[0].mxu0
        %v5622 = vadd.f32 %v5581, %v5621
        %v5623 = vpop.f32.mrb[0].mxu0
        %v5624 = vpop.f32.mrb[0].mxu0
        %5625 = vdwg.mxu0
        %5626 = vmatprep.subr.bf16.mxu0 %v4453
        %5627 = vmatpush1.bf16.msra.mxu0 %v4452
        %5628 = vmatprep.subr.bf16.mxu0 %v4461
        %5629 = vmatpush1.bf16.msra.mxu0 %v4460
        %5630 = vmatprep.subr.bf16.mxu0 %v4469
        %5631 = vmatpush1.bf16.msra.mxu0 %v4468
        %5632 = vmatprep.subr.bf16.mxu0 %v4477
        %5633 = vmatpush1.bf16.msra.mxu0 %v4476
        %5634 = vmatprep.subr.bf16.mxu0 %v4485
        %5635 = vmatpush1.bf16.msra.mxu0 %v4484
        %5636 = vmatprep.subr.bf16.mxu0 %v4493
        %5637 = vmatpush1.bf16.msra.mxu0 %v4492
        %5638 = vmatprep.subr.bf16.mxu0 %v4501
        %5639 = vmatpush1.bf16.msra.mxu0 %v4500
        %5640 = vmatprep.subr.bf16.mxu0 %v4509
        %5641 = vmatpush1.bf16.msra.mxu0 %v4508
        %5642 = vmatprep.subr.bf16.mxu0 %v4517
        %5643 = vmatpush1.bf16.msra.mxu0 %v4516
        %5644 = vmatprep.subr.bf16.mxu0 %v4525
        %5645 = vmatpush1.bf16.msra.mxu0 %v4524
        %5646 = vmatprep.subr.bf16.mxu0 %v4533
        %5647 = vmatpush1.bf16.msra.mxu0 %v4532
        %5648 = vmatprep.subr.bf16.mxu0 %v4541
        %5649 = vmatpush1.bf16.msra.mxu0 %v4540
        %5650 = vmatprep.subr.bf16.mxu0 %v4549
        %5651 = vmatpush1.bf16.msra.mxu0 %v4548
        %5652 = vmatprep.subr.bf16.mxu0 %v4557
        %5653 = vmatpush1.bf16.msra.mxu0 %v4556
        %5654 = vmatprep.subr.bf16.mxu0 %v4565
        %5655 = vmatpush1.bf16.msra.mxu0 %v4564
        %5656 = vmatprep.subr.bf16.mxu0 %v4573
        %5657 = vmatpush1.bf16.msra.mxu0 %v4572
        %5658 = vmatprep.mubr.bf16.mxu0 %v2141
        %5659 = vmatmul.mubr.bf16.gmra.mrb[0].mxu0 %v2140
        %v5660 = vpop.f32.mrb[0].mxu0
        %v5661 = vadd.f32 %v5620, %v5660
        %v5662 = vpop.f32.mrb[0].mxu0
        %v5663 = vadd.f32 %v5622, %v5662
        %v5664 = vpop.f32.mrb[0].mxu0
        %v5665 = vpop.f32.mrb[0].mxu0
        %5666 = vdwg.mxu0
        %5667 = vmatprep.subr.bf16.mxu0 %v4581
        %5668 = vmatpush1.bf16.msra.mxu0 %v4580
        %5669 = vmatprep.subr.bf16.mxu0 %v4589
        %5670 = vmatpush1.bf16.msra.mxu0 %v4588
        %5671 = vmatprep.subr.bf16.mxu0 %v4597
        %5672 = vmatpush1.bf16.msra.mxu0 %v4596
        %5673 = vmatprep.subr.bf16.mxu0 %v4605
        %5674 = vmatpush1.bf16.msra.mxu0 %v4604
        %5675 = vmatprep.subr.bf16.mxu0 %v4613
        %5676 = vmatpush1.bf16.msra.mxu0 %v4612
        %5677 = vmatprep.subr.bf16.mxu0 %v4621
        %5678 = vmatpush1.bf16.msra.mxu0 %v4620
        %5679 = vmatprep.subr.bf16.mxu0 %v4629
        %5680 = vmatpush1.bf16.msra.mxu0 %v4628
        %5681 = vmatprep.subr.bf16.mxu0 %v4637
        %5682 = vmatpush1.bf16.msra.mxu0 %v4636
        %5683 = vmatprep.subr.bf16.mxu0 %v4645
        %5684 = vmatpush1.bf16.msra.mxu0 %v4644
        %5685 = vmatprep.subr.bf16.mxu0 %v4653
        %5686 = vmatpush1.bf16.msra.mxu0 %v4652
        %5687 = vmatprep.subr.bf16.mxu0 %v4661
        %5688 = vmatpush1.bf16.msra.mxu0 %v4660
        %5689 = vmatprep.subr.bf16.mxu0 %v4669
        %5690 = vmatpush1.bf16.msra.mxu0 %v4668
        %5691 = vmatprep.subr.bf16.mxu0 %v4677
        %5692 = vmatpush1.bf16.msra.mxu0 %v4676
        %5693 = vmatprep.subr.bf16.mxu0 %v4685
        %5694 = vmatpush1.bf16.msra.mxu0 %v4684
        %5695 = vmatprep.subr.bf16.mxu0 %v4693
        %5696 = vmatpush1.bf16.msra.mxu0 %v4692
        %5697 = vmatprep.subr.bf16.mxu0 %v4701
        %5698 = vmatpush1.bf16.msra.mxu0 %v4700
        %5699 = vmatprep.mubr.bf16.mxu0 %v2143
        %5700 = vmatmul.mubr.bf16.gmra.mrb[0].mxu0 %v2142
        %v5701 = vpop.f32.mrb[0].mxu0
        %v5702 = vadd.f32 %v5661, %v5701
        %v5703 = vpop.f32.mrb[0].mxu0
        %v5704 = vadd.f32 %v5663, %v5703
        %v5705 = vpop.f32.mrb[0].mxu0
        %v5706 = vpop.f32.mrb[0].mxu0
        %5707 = vdwg.mxu0
        %5708 = vmatprep.subr.bf16.mxu0 %v4199
        %5709 = vmatpush1.bf16.msra.mxu0 %v4198
        %5710 = vmatprep.subr.bf16.mxu0 %v4207
        %5711 = vmatpush1.bf16.msra.mxu0 %v4206
        %5712 = vmatprep.subr.bf16.mxu0 %v4215
        %5713 = vmatpush1.bf16.msra.mxu0 %v4214
        %5714 = vmatprep.subr.bf16.mxu0 %v4223
        %5715 = vmatpush1.bf16.msra.mxu0 %v4222
        %5716 = vmatprep.subr.bf16.mxu0 %v4231
        %5717 = vmatpush1.bf16.msra.mxu0 %v4230
        %5718 = vmatprep.subr.bf16.mxu0 %v4239
        %5719 = vmatpush1.bf16.msra.mxu0 %v4238
        %5720 = vmatprep.subr.bf16.mxu0 %v4247
        %5721 = vmatpush1.bf16.msra.mxu0 %v4246
        %5722 = vmatprep.subr.bf16.mxu0 %v4255
        %5723 = vmatpush1.bf16.msra.mxu0 %v4254
        %5724 = vmatprep.subr.bf16.mxu0 %v4263
        %5725 = vmatpush1.bf16.msra.mxu0 %v4262
        %5726 = vmatprep.subr.bf16.mxu0 %v4271
        %5727 = vmatpush1.bf16.msra.mxu0 %v4270
        %5728 = vmatprep.subr.bf16.mxu0 %v4279
        %5729 = vmatpush1.bf16.msra.mxu0 %v4278
        %5730 = vmatprep.subr.bf16.mxu0 %v4287
        %5731 = vmatpush1.bf16.msra.mxu0 %v4286
        %5732 = vmatprep.subr.bf16.mxu0 %v4295
        %5733 = vmatpush1.bf16.msra.mxu0 %v4294
        %5734 = vmatprep.subr.bf16.mxu0 %v4303
        %5735 = vmatpush1.bf16.msra.mxu0 %v4302
        %5736 = vmatprep.subr.bf16.mxu0 %v4311
        %5737 = vmatpush1.bf16.msra.mxu0 %v4310
        %5738 = vmatprep.subr.bf16.mxu0 %v4319
        %5739 = vmatpush1.bf16.msra.mxu0 %v4318
        %5740 = vmatprep.mubr.bf16.mxu0 %v2137
        %5741 = vmatmul.mubr.bf16.gmra.mrb[0].mxu0 %v2136
        %v5742 = vpop.f32.mrb[0].mxu0
        %v5743 = vadd.f32 0.0, %v5742
        %v5744 = vpop.f32.mrb[0].mxu0
        %v5745 = vadd.f32 0.0, %v5744
        %v5746 = vpop.f32.mrb[0].mxu0
        %v5747 = vpop.f32.mrb[0].mxu0
        %5748 = vdwg.mxu0
        %5749 = vmatprep.subr.bf16.mxu0 %v4327
        %5750 = vmatpush1.bf16.msra.mxu0 %v4326
        %5751 = vmatprep.subr.bf16.mxu0 %v4335
        %5752 = vmatpush1.bf16.msra.mxu0 %v4334
        %5753 = vmatprep.subr.bf16.mxu0 %v4343
        %5754 = vmatpush1.bf16.msra.mxu0 %v4342
        %5755 = vmatprep.subr.bf16.mxu0 %v4351
        %5756 = vmatpush1.bf16.msra.mxu0 %v4350
        %5757 = vmatprep.subr.bf16.mxu0 %v4359
        %5758 = vmatpush1.bf16.msra.mxu0 %v4358
        %5759 = vmatprep.subr.bf16.mxu0 %v4367
        %5760 = vmatpush1.bf16.msra.mxu0 %v4366
        %5761 = vmatprep.subr.bf16.mxu0 %v4375
        %5762 = vmatpush1.bf16.msra.mxu0 %v4374
        %5763 = vmatprep.subr.bf16.mxu0 %v4383
        %5764 = vmatpush1.bf16.msra.mxu0 %v4382
        %5765 = vmatprep.subr.bf16.mxu0 %v4391
        %5766 = vmatpush1.bf16.msra.mxu0 %v4390
        %5767 = vmatprep.subr.bf16.mxu0 %v4399
        %5768 = vmatpush1.bf16.msra.mxu0 %v4398
        %5769 = vmatprep.subr.bf16.mxu0 %v4407
        %5770 = vmatpush1.bf16.msra.mxu0 %v4406
        %5771 = vmatprep.subr.bf16.mxu0 %v4415
        %5772 = vmatpush1.bf16.msra.mxu0 %v4414
        %5773 = vmatprep.subr.bf16.mxu0 %v4423
        %5774 = vmatpush1.bf16.msra.mxu0 %v4422
        %5775 = vmatprep.subr.bf16.mxu0 %v4431
        %5776 = vmatpush1.bf16.msra.mxu0 %v4430
        %5777 = vmatprep.subr.bf16.mxu0 %v4439
        %5778 = vmatpush1.bf16.msra.mxu0 %v4438
        %5779 = vmatprep.subr.bf16.mxu0 %v4447
        %5780 = vmatpush1.bf16.msra.mxu0 %v4446
        %5781 = vmatprep.mubr.bf16.mxu0 %v2139
        %5782 = vmatmul.mubr.bf16.gmra.mrb[0].mxu0 %v2138
        %v5783 = vpop.f32.mrb[0].mxu0
        %v5784 = vadd.f32 %v5743, %v5783
        %v5785 = vpop.f32.mrb[0].mxu0
        %v5786 = vadd.f32 %v5745, %v5785
        %v5787 = vpop.f32.mrb[0].mxu0
        %v5788 = vpop.f32.mrb[0].mxu0
        %5789 = vdwg.mxu0
        %5790 = vmatprep.subr.bf16.mxu0 %v4455
        %5791 = vmatpush1.bf16.msra.mxu0 %v4454
        %5792 = vmatprep.subr.bf16.mxu0 %v4463
        %5793 = vmatpush1.bf16.msra.mxu0 %v4462
        %5794 = vmatprep.subr.bf16.mxu0 %v4471
        %5795 = vmatpush1.bf16.msra.mxu0 %v4470
        %5796 = vmatprep.subr.bf16.mxu0 %v4479
        %5797 = vmatpush1.bf16.msra.mxu0 %v4478
        %5798 = vmatprep.subr.bf16.mxu0 %v4487
        %5799 = vmatpush1.bf16.msra.mxu0 %v4486
        %5800 = vmatprep.subr.bf16.mxu0 %v4495
        %5801 = vmatpush1.bf16.msra.mxu0 %v4494
        %5802 = vmatprep.subr.bf16.mxu0 %v4503
        %5803 = vmatpush1.bf16.msra.mxu0 %v4502
        %5804 = vmatprep.subr.bf16.mxu0 %v4511
        %5805 = vmatpush1.bf16.msra.mxu0 %v4510
        %5806 = vmatprep.subr.bf16.mxu0 %v4519
        %5807 = vmatpush1.bf16.msra.mxu0 %v4518
        %5808 = vmatprep.subr.bf16.mxu0 %v4527
        %5809 = vmatpush1.bf16.msra.mxu0 %v4526
        %5810 = vmatprep.subr.bf16.mxu0 %v4535
        %5811 = vmatpush1.bf16.msra.mxu0 %v4534
        %5812 = vmatprep.subr.bf16.mxu0 %v4543
        %5813 = vmatpush1.bf16.msra.mxu0 %v4542
        %5814 = vmatprep.subr.bf16.mxu0 %v4551
        %5815 = vmatpush1.bf16.msra.mxu0 %v4550
        %5816 = vmatprep.subr.bf16.mxu0 %v4559
        %5817 = vmatpush1.bf16.msra.mxu0 %v4558
        %5818 = vmatprep.subr.bf16.mxu0 %v4567
        %5819 = vmatpush1.bf16.msra.mxu0 %v4566
        %5820 = vmatprep.subr.bf16.mxu0 %v4575
        %5821 = vmatpush1.bf16.msra.mxu0 %v4574
        %5822 = vmatprep.mubr.bf16.mxu0 %v2141
        %5823 = vmatmul.mubr.bf16.gmra.mrb[0].mxu0 %v2140
        %v5824 = vpop.f32.mrb[0].mxu0
        %v5825 = vadd.f32 %v5784, %v5824
        %v5826 = vpop.f32.mrb[0].mxu0
        %v5827 = vadd.f32 %v5786, %v5826
        %v5828 = vpop.f32.mrb[0].mxu0
        %v5829 = vpop.f32.mrb[0].mxu0
        %5830 = vdwg.mxu0
        %5831 = vmatprep.subr.bf16.mxu0 %v4583
        %5832 = vmatpush1.bf16.msra.mxu0 %v4582
        %5833 = vmatprep.subr.bf16.mxu0 %v4591
        %5834 = vmatpush1.bf16.msra.mxu0 %v4590
        %5835 = vmatprep.subr.bf16.mxu0 %v4599
        %5836 = vmatpush1.bf16.msra.mxu0 %v4598
        %5837 = vmatprep.subr.bf16.mxu0 %v4607
        %5838 = vmatpush1.bf16.msra.mxu0 %v4606
        %5839 = vmatprep.subr.bf16.mxu0 %v4615
        %5840 = vmatpush1.bf16.msra.mxu0 %v4614
        %5841 = vmatprep.subr.bf16.mxu0 %v4623
        %5842 = vmatpush1.bf16.msra.mxu0 %v4622
        %5843 = vmatprep.subr.bf16.mxu0 %v4631
        %5844 = vmatpush1.bf16.msra.mxu0 %v4630
        %5845 = vmatprep.subr.bf16.mxu0 %v4639
        %5846 = vmatpush1.bf16.msra.mxu0 %v4638
        %5847 = vmatprep.subr.bf16.mxu0 %v4647
        %5848 = vmatpush1.bf16.msra.mxu0 %v4646
        %5849 = vmatprep.subr.bf16.mxu0 %v4655
        %5850 = vmatpush1.bf16.msra.mxu0 %v4654
        %5851 = vmatprep.subr.bf16.mxu0 %v4663
        %5852 = vmatpush1.bf16.msra.mxu0 %v4662
        %5853 = vmatprep.subr.bf16.mxu0 %v4671
        %5854 = vmatpush1.bf16.msra.mxu0 %v4670
        %5855 = vmatprep.subr.bf16.mxu0 %v4679
        %5856 = vmatpush1.bf16.msra.mxu0 %v4678
        %5857 = vmatprep.subr.bf16.mxu0 %v4687
        %5858 = vmatpush1.bf16.msra.mxu0 %v4686
        %5859 = vmatprep.subr.bf16.mxu0 %v4695
        %5860 = vmatpush1.bf16.msra.mxu0 %v4694
        %5861 = vmatprep.subr.bf16.mxu0 %v4703
        %5862 = vmatpush1.bf16.msra.mxu0 %v4702
        %5863 = vmatprep.mubr.bf16.mxu0 %v2143
        %5864 = vmatmul.mubr.bf16.gmra.mrb[0].mxu0 %v2142
        %v5865 = vpop.f32.mrb[0].mxu0
        %v5866 = vadd.f32 %v5825, %v5865
        %v5867 = vpop.f32.mrb[0].mxu0
        %v5868 = vadd.f32 %v5827, %v5867
        %v5869 = vpop.f32.mrb[0].mxu0
        %v5870 = vpop.f32.mrb[0].mxu0
        %5871 = vdwg.mxu0
        %v5880 = vcombine.low %v5374, %v5376
        %v5881 = vcombine.low %v5538, %v5540
        %v5883 = vunpack.c.l.s4 1983009808
        %v5884 = vunpack.c.0.s8 %v5883
        %v5885 = vlaneseq
        %v5886 = vshrl.u32 %v5885, 7
        %v5887 = vsub.s32 %v5884, %v5886
        %v5888 = vrot.slane %v5880, %v5887
        %v5890 = vunpack.c.l.s4 1983009808
        %v5891 = vunpack.c.0.s8 %v5890
        %v5892 = vlaneseq
        %v5893 = vshrl.u32 %v5892, 7
        %v5894 = vsub.s32 %v5891, %v5893
        %v5895 = vrot.slane %v5881, %v5894
        %v5896 = vcombine.low %v5888, %v5895
        %v5897 = vcombine.low %v5702, %v5704
        %v5898 = vcombine.low %v5866, %v5868
        %v5900 = vunpack.c.l.s4 1983009808
        %v5901 = vunpack.c.0.s8 %v5900
        %v5902 = vlaneseq
        %v5903 = vshrl.u32 %v5902, 7
        %v5904 = vsub.s32 %v5901, %v5903
        %v5905 = vrot.slane %v5897, %v5904
        %v5907 = vunpack.c.l.s4 1983009808
        %v5908 = vunpack.c.0.s8 %v5907
        %v5909 = vlaneseq
        %v5910 = vshrl.u32 %v5909, 7
        %v5911 = vsub.s32 %v5908, %v5910
        %v5912 = vrot.slane %v5898, %v5911
        %v5913 = vcombine.low %v5905, %v5912
        %v5916 = vadd.f32 %v2134, %v5896
        %v5917 = vadd.f32 %v2135, %v5913
        %5918 = vst [vmem:[#allocation3] sm:$0xff] %v5916
        %5919 = vst [vmem:[#allocation3 + $0x8] sm:$0xff] %v5917
        %p5920 = scmp.eq.s32.totalorder %s25, 1
        // Predicated region
        $region81: #{loss_header_forward.1} parent=51 // pred_check
          %p5921 = pneg %p5920
        $region82: #{loss_header_forward.1} parent=51 // pred_check_branch
          %5923 = sbr.rel (%p5921) target = $region84
        $region83: #{loss_header_forward.1} parent=51 // pred_region
          %v5924 = vld [vmem:[#allocation3] sm:$0xff]
          %v5925 = vld [vmem:[#allocation3 + $0x8] sm:$0xff]
          %v5926 = vld [vmem:[#allocation11] sm:$0xff]
          %v5928 = vlaneseq
          %v5929 = vshrl.u32 %v5928, 7
          %v5930 = vsub.s32 0, %v5929
          %v5931 = vrot.slane %v5926, %v5930
          %v5932 = vlaneseq
          %v5933 = vshrl.u32 %v5932, 7
          %v5934 = vsub.s32 1, %v5933
          %v5935 = vrot.slane %v5926, %v5934
          %v5936 = vlaneseq
          %v5937 = vshrl.u32 %v5936, 7
          %v5938 = vsub.s32 2, %v5937
          %v5939 = vrot.slane %v5926, %v5938
          %v5940 = vlaneseq
          %v5941 = vshrl.u32 %v5940, 7
          %v5942 = vsub.s32 3, %v5941
          %v5943 = vrot.slane %v5926, %v5942
          %v5944 = vlaneseq
          %v5945 = vshrl.u32 %v5944, 7
          %v5946 = vsub.s32 4, %v5945
          %v5947 = vrot.slane %v5926, %v5946
          %v5948 = vlaneseq
          %v5949 = vshrl.u32 %v5948, 7
          %v5950 = vsub.s32 5, %v5949
          %v5951 = vrot.slane %v5926, %v5950
          %v5952 = vlaneseq
          %v5953 = vshrl.u32 %v5952, 7
          %v5954 = vsub.s32 6, %v5953
          %v5955 = vrot.slane %v5926, %v5954
          %v5956 = vlaneseq
          %v5957 = vshrl.u32 %v5956, 7
          %v5958 = vsub.s32 7, %v5957
          %v5959 = vrot.slane %v5926, %v5958
          %v5960 = vcombine.low %v5931, %v5935
          %v5961 = vcombine.low %v5939, %v5943
          %v5963 = vunpack.c.l.s4 1983009808
          %v5964 = vunpack.c.0.s8 %v5963
          %v5965 = vlaneseq
          %v5966 = vshrl.u32 %v5965, 7
          %v5967 = vsub.s32 %v5964, %v5966
          %v5968 = vrot.slane %v5960, %v5967
          %v5970 = vunpack.c.l.s4 1983009808
          %v5971 = vunpack.c.0.s8 %v5970
          %v5972 = vlaneseq
          %v5973 = vshrl.u32 %v5972, 7
          %v5974 = vsub.s32 %v5971, %v5973
          %v5975 = vrot.slane %v5961, %v5974
          %v5976 = vcombine.low %v5968, %v5975
          %v5977 = vcombine.low %v5947, %v5951
          %v5978 = vcombine.low %v5955, %v5959
          %v5980 = vunpack.c.l.s4 1983009808
          %v5981 = vunpack.c.0.s8 %v5980
          %v5982 = vlaneseq
          %v5983 = vshrl.u32 %v5982, 7
          %v5984 = vsub.s32 %v5981, %v5983
          %v5985 = vrot.slane %v5977, %v5984
          %v5987 = vunpack.c.l.s4 1983009808
          %v5988 = vunpack.c.0.s8 %v5987
          %v5989 = vlaneseq
          %v5990 = vshrl.u32 %v5989, 7
          %v5991 = vsub.s32 %v5988, %v5990
          %v5992 = vrot.slane %v5978, %v5991
          %v5993 = vcombine.low %v5985, %v5992
          %v5996 = vadd.f32 %v5924, %v5976
          %v5997 = vadd.f32 %v5925, %v5993
          %v5998 = vmax.f32 %v5996, 0.0
          %v5999 = vmax.f32 %v5997, 0.0
          %v6002 = vcombine.high %v5998, %v5998
          %v6004 = vunpack.c.l.s4 1983009808
          %v6005 = vunpack.c.0.s8 %v6004
          %v6006 = vlaneseq
          %v6007 = vshrl.u32 %v6006, 7
          %v6008 = vsub.s32 %v6005, %v6007
          %v6009 = vrot.slane %v5998, %v6008
          %v6011 = vunpack.c.l.s4 1983009808
          %v6012 = vunpack.c.0.s8 %v6011
          %v6013 = vlaneseq
          %v6014 = vshrl.u32 %v6013, 7
          %v6015 = vsub.s32 %v6012, %v6014
          %v6016 = vrot.slane %v6002, %v6015
          %v6017 = vcombine.high %v6009, %v6009
          %v6018 = vcombine.high %v6016, %v6016
          %v6019 = vcombine.high %v5999, %v5999
          %v6021 = vunpack.c.l.s4 1983009808
          %v6022 = vunpack.c.0.s8 %v6021
          %v6023 = vlaneseq
          %v6024 = vshrl.u32 %v6023, 7
          %v6025 = vsub.s32 %v6022, %v6024
          %v6026 = vrot.slane %v5999, %v6025
          %v6028 = vunpack.c.l.s4 1983009808
          %v6029 = vunpack.c.0.s8 %v6028
          %v6030 = vlaneseq
          %v6031 = vshrl.u32 %v6030, 7
          %v6032 = vsub.s32 %v6029, %v6031
          %v6033 = vrot.slane %v6019, %v6032
          %v6034 = vcombine.high %v6026, %v6026
          %v6035 = vcombine.high %v6033, %v6033
          %v6044 = vpack.c.bf16 %v6009, %v6009
          %v6045 = vpack.c.bf16 %v6017, %v6017
          %v6046 = vpack.c.bf16 %v6016, %v6016
          %v6047 = vpack.c.bf16 %v6018, %v6018
          %v6048 = vpack.c.bf16 %v6026, %v6026
          %v6049 = vpack.c.bf16 %v6034, %v6034
          %v6050 = vpack.c.bf16 %v6033, %v6033
          %v6051 = vpack.c.bf16 %v6035, %v6035
          %v6052 = vld [vmem:[%s6] sm:$0xf]
          %v6053 = vld [vmem:[%s6 + $0x4] sm:$0xf]
          %v6054 = vld [vmem:[%s6 + $0x8] sm:$0xf]
          %v6055 = vld [vmem:[%s6 + $0xc] sm:$0xf]
          %v6056 = vld [vmem:[%s6 + $0x10] sm:$0xf]
          %v6057 = vld [vmem:[%s6 + $0x14] sm:$0xf]
          %v6058 = vld [vmem:[%s6 + $0x18] sm:$0xf]
          %v6059 = vld [vmem:[%s6 + $0x1c] sm:$0xf]
          %v6060 = vld [vmem:[%s6 + $0x20] sm:$0xf]
          %v6061 = vld [vmem:[%s6 + $0x24] sm:$0xf]
          %v6062 = vld [vmem:[%s6 + $0x28] sm:$0xf]
          %v6063 = vld [vmem:[%s6 + $0x2c] sm:$0xf]
          %v6064 = vld [vmem:[%s6 + $0x30] sm:$0xf]
          %v6065 = vld [vmem:[%s6 + $0x34] sm:$0xf]
          %v6066 = vld [vmem:[%s6 + $0x38] sm:$0xf]
          %v6067 = vld [vmem:[%s6 + $0x3c] sm:$0xf]
          %v6068 = vld [vmem:[%s6 + $0x40] sm:$0xf]
          %v6069 = vld [vmem:[%s6 + $0x44] sm:$0xf]
          %v6070 = vld [vmem:[%s6 + $0x48] sm:$0xf]
          %v6071 = vld [vmem:[%s6 + $0x4c] sm:$0xf]
          %v6072 = vld [vmem:[%s6 + $0x50] sm:$0xf]
          %v6073 = vld [vmem:[%s6 + $0x54] sm:$0xf]
          %v6074 = vld [vmem:[%s6 + $0x58] sm:$0xf]
          %v6075 = vld [vmem:[%s6 + $0x5c] sm:$0xf]
          %v6076 = vld [vmem:[%s6 + $0x60] sm:$0xf]
          %v6077 = vld [vmem:[%s6 + $0x64] sm:$0xf]
          %v6078 = vld [vmem:[%s6 + $0x68] sm:$0xf]
          %v6079 = vld [vmem:[%s6 + $0x6c] sm:$0xf]
          %v6080 = vld [vmem:[%s6 + $0x70] sm:$0xf]
          %v6081 = vld [vmem:[%s6 + $0x74] sm:$0xf]
          %v6082 = vld [vmem:[%s6 + $0x78] sm:$0xf]
          %v6083 = vld [vmem:[%s6 + $0x7c] sm:$0xf]
          %v6084 = vld [vmem:[%s6 + $0x80] sm:$0xf]
          %v6085 = vld [vmem:[%s6 + $0x84] sm:$0xf]
          %v6086 = vld [vmem:[%s6 + $0x88] sm:$0xf]
          %v6087 = vld [vmem:[%s6 + $0x8c] sm:$0xf]
          %v6088 = vld [vmem:[%s6 + $0x90] sm:$0xf]
          %v6089 = vld [vmem:[%s6 + $0x94] sm:$0xf]
          %v6090 = vld [vmem:[%s6 + $0x98] sm:$0xf]
          %v6091 = vld [vmem:[%s6 + $0x9c] sm:$0xf]
          %v6092 = vld [vmem:[%s6 + $0xa0] sm:$0xf]
          %v6093 = vld [vmem:[%s6 + $0xa4] sm:$0xf]
          %v6094 = vld [vmem:[%s6 + $0xa8] sm:$0xf]
          %v6095 = vld [vmem:[%s6 + $0xac] sm:$0xf]
          %v6096 = vld [vmem:[%s6 + $0xb0] sm:$0xf]
          %v6097 = vld [vmem:[%s6 + $0xb4] sm:$0xf]
          %v6098 = vld [vmem:[%s6 + $0xb8] sm:$0xf]
          %v6099 = vld [vmem:[%s6 + $0xbc] sm:$0xf]
          %v6100 = vld [vmem:[%s6 + $0xc0] sm:$0xf]
          %v6101 = vld [vmem:[%s6 + $0xc4] sm:$0xf]
          %v6102 = vld [vmem:[%s6 + $0xc8] sm:$0xf]
          %v6103 = vld [vmem:[%s6 + $0xcc] sm:$0xf]
          %v6104 = vld [vmem:[%s6 + $0xd0] sm:$0xf]
          %v6105 = vld [vmem:[%s6 + $0xd4] sm:$0xf]
          %v6106 = vld [vmem:[%s6 + $0xd8] sm:$0xf]
          %v6107 = vld [vmem:[%s6 + $0xdc] sm:$0xf]
          %v6108 = vld [vmem:[%s6 + $0xe0] sm:$0xf]
          %v6109 = vld [vmem:[%s6 + $0xe4] sm:$0xf]
          %v6110 = vld [vmem:[%s6 + $0xe8] sm:$0xf]
          %v6111 = vld [vmem:[%s6 + $0xec] sm:$0xf]
          %v6112 = vld [vmem:[%s6 + $0xf0] sm:$0xf]
          %v6113 = vld [vmem:[%s6 + $0xf4] sm:$0xf]
          %v6114 = vld [vmem:[%s6 + $0xf8] sm:$0xf]
          %v6115 = vld [vmem:[%s6 + $0xfc] sm:$0xf]
          %v6116 = vld [vmem:[%s6 + $0x100] sm:$0xf]
          %v6117 = vld [vmem:[%s6 + $0x104] sm:$0xf]
          %v6118 = vld [vmem:[%s6 + $0x108] sm:$0xf]
          %v6119 = vld [vmem:[%s6 + $0x10c] sm:$0xf]
          %v6120 = vld [vmem:[%s6 + $0x110] sm:$0xf]
          %v6121 = vld [vmem:[%s6 + $0x114] sm:$0xf]
          %v6122 = vld [vmem:[%s6 + $0x118] sm:$0xf]
          %v6123 = vld [vmem:[%s6 + $0x11c] sm:$0xf]
          %v6124 = vld [vmem:[%s6 + $0x120] sm:$0xf]
          %v6125 = vld [vmem:[%s6 + $0x124] sm:$0xf]
          %v6126 = vld [vmem:[%s6 + $0x128] sm:$0xf]
          %v6127 = vld [vmem:[%s6 + $0x12c] sm:$0xf]
          %v6128 = vld [vmem:[%s6 + $0x130] sm:$0xf]
          %v6129 = vld [vmem:[%s6 + $0x134] sm:$0xf]
          %v6130 = vld [vmem:[%s6 + $0x138] sm:$0xf]
          %v6131 = vld [vmem:[%s6 + $0x13c] sm:$0xf]
          %v6132 = vld [vmem:[%s6 + $0x140] sm:$0xf]
          %v6133 = vld [vmem:[%s6 + $0x144] sm:$0xf]
          %v6134 = vld [vmem:[%s6 + $0x148] sm:$0xf]
          %v6135 = vld [vmem:[%s6 + $0x14c] sm:$0xf]
          %v6136 = vld [vmem:[%s6 + $0x150] sm:$0xf]
          %v6137 = vld [vmem:[%s6 + $0x154] sm:$0xf]
          %v6138 = vld [vmem:[%s6 + $0x158] sm:$0xf]
          %v6139 = vld [vmem:[%s6 + $0x15c] sm:$0xf]
          %v6140 = vld [vmem:[%s6 + $0x160] sm:$0xf]
          %v6141 = vld [vmem:[%s6 + $0x164] sm:$0xf]
          %v6142 = vld [vmem:[%s6 + $0x168] sm:$0xf]
          %v6143 = vld [vmem:[%s6 + $0x16c] sm:$0xf]
          %v6144 = vld [vmem:[%s6 + $0x170] sm:$0xf]
          %v6145 = vld [vmem:[%s6 + $0x174] sm:$0xf]
          %v6146 = vld [vmem:[%s6 + $0x178] sm:$0xf]
          %v6147 = vld [vmem:[%s6 + $0x17c] sm:$0xf]
          %v6148 = vld [vmem:[%s6 + $0x180] sm:$0xf]
          %v6149 = vld [vmem:[%s6 + $0x184] sm:$0xf]
          %v6150 = vld [vmem:[%s6 + $0x188] sm:$0xf]
          %v6151 = vld [vmem:[%s6 + $0x18c] sm:$0xf]
          %v6152 = vld [vmem:[%s6 + $0x190] sm:$0xf]
          %v6153 = vld [vmem:[%s6 + $0x194] sm:$0xf]
          %v6154 = vld [vmem:[%s6 + $0x198] sm:$0xf]
          %v6155 = vld [vmem:[%s6 + $0x19c] sm:$0xf]
          %v6156 = vld [vmem:[%s6 + $0x1a0] sm:$0xf]
          %v6157 = vld [vmem:[%s6 + $0x1a4] sm:$0xf]
          %v6158 = vld [vmem:[%s6 + $0x1a8] sm:$0xf]
          %v6159 = vld [vmem:[%s6 + $0x1ac] sm:$0xf]
          %v6160 = vld [vmem:[%s6 + $0x1b0] sm:$0xf]
          %v6161 = vld [vmem:[%s6 + $0x1b4] sm:$0xf]
          %v6162 = vld [vmem:[%s6 + $0x1b8] sm:$0xf]
          %v6163 = vld [vmem:[%s6 + $0x1bc] sm:$0xf]
          %v6164 = vld [vmem:[%s6 + $0x1c0] sm:$0xf]
          %v6165 = vld [vmem:[%s6 + $0x1c4] sm:$0xf]
          %v6166 = vld [vmem:[%s6 + $0x1c8] sm:$0xf]
          %v6167 = vld [vmem:[%s6 + $0x1cc] sm:$0xf]
          %v6168 = vld [vmem:[%s6 + $0x1d0] sm:$0xf]
          %v6169 = vld [vmem:[%s6 + $0x1d4] sm:$0xf]
          %v6170 = vld [vmem:[%s6 + $0x1d8] sm:$0xf]
          %v6171 = vld [vmem:[%s6 + $0x1dc] sm:$0xf]
          %v6172 = vld [vmem:[%s6 + $0x1e0] sm:$0xf]
          %v6173 = vld [vmem:[%s6 + $0x1e4] sm:$0xf]
          %v6174 = vld [vmem:[%s6 + $0x1e8] sm:$0xf]
          %v6175 = vld [vmem:[%s6 + $0x1ec] sm:$0xf]
          %v6176 = vld [vmem:[%s6 + $0x1f0] sm:$0xf]
          %v6177 = vld [vmem:[%s6 + $0x1f4] sm:$0xf]
          %v6178 = vld [vmem:[%s6 + $0x1f8] sm:$0xf]
          %v6179 = vld [vmem:[%s6 + $0x1fc] sm:$0xf]
          %v6180 = vld [vmem:[#allocation12] sm:$0x1]
          %v6182 = vlaneseq
          %v6183 = vshrl.u32 %v6182, 7
          %v6184 = vsub.s32 0, %v6183
          %v6185 = vrot.slane %v6180, %v6184
          %v6315 = vunpack.c.l.b16 %v6052
          %v6316 = vunpack.c.l.b16 %v6053
          %v6317 = vunpack.c.l.b16 %v6054
          %v6318 = vunpack.c.l.b16 %v6055
          %v6319 = vunpack.c.l.b16 %v6056
          %v6320 = vunpack.c.l.b16 %v6057
          %v6321 = vunpack.c.l.b16 %v6058
          %v6322 = vunpack.c.l.b16 %v6059
          %v6323 = vunpack.c.l.b16 %v6060
          %v6324 = vunpack.c.l.b16 %v6061
          %v6325 = vunpack.c.l.b16 %v6062
          %v6326 = vunpack.c.l.b16 %v6063
          %v6327 = vunpack.c.l.b16 %v6064
          %v6328 = vunpack.c.l.b16 %v6065
          %v6329 = vunpack.c.l.b16 %v6066
          %v6330 = vunpack.c.l.b16 %v6067
          %v6331 = vunpack.c.l.b16 %v6068
          %v6332 = vunpack.c.l.b16 %v6069
          %v6333 = vunpack.c.l.b16 %v6070
          %v6334 = vunpack.c.l.b16 %v6071
          %v6335 = vunpack.c.l.b16 %v6072
          %v6336 = vunpack.c.l.b16 %v6073
          %v6337 = vunpack.c.l.b16 %v6074
          %v6338 = vunpack.c.l.b16 %v6075
          %v6339 = vunpack.c.l.b16 %v6076
          %v6340 = vunpack.c.l.b16 %v6077
          %v6341 = vunpack.c.l.b16 %v6078
          %v6342 = vunpack.c.l.b16 %v6079
          %v6343 = vunpack.c.l.b16 %v6080
          %v6344 = vunpack.c.l.b16 %v6081
          %v6345 = vunpack.c.l.b16 %v6082
          %v6346 = vunpack.c.l.b16 %v6083
          %v6347 = vunpack.c.l.b16 %v6084
          %v6348 = vunpack.c.l.b16 %v6085
          %v6349 = vunpack.c.l.b16 %v6086
          %v6350 = vunpack.c.l.b16 %v6087
          %v6351 = vunpack.c.l.b16 %v6088
          %v6352 = vunpack.c.l.b16 %v6089
          %v6353 = vunpack.c.l.b16 %v6090
          %v6354 = vunpack.c.l.b16 %v6091
          %v6355 = vunpack.c.l.b16 %v6092
          %v6356 = vunpack.c.l.b16 %v6093
          %v6357 = vunpack.c.l.b16 %v6094
          %v6358 = vunpack.c.l.b16 %v6095
          %v6359 = vunpack.c.l.b16 %v6096
          %v6360 = vunpack.c.l.b16 %v6097
          %v6361 = vunpack.c.l.b16 %v6098
          %v6362 = vunpack.c.l.b16 %v6099
          %v6363 = vunpack.c.l.b16 %v6100
          %v6364 = vunpack.c.l.b16 %v6101
          %v6365 = vunpack.c.l.b16 %v6102
          %v6366 = vunpack.c.l.b16 %v6103
          %v6367 = vunpack.c.l.b16 %v6104
          %v6368 = vunpack.c.l.b16 %v6105
          %v6369 = vunpack.c.l.b16 %v6106
          %v6370 = vunpack.c.l.b16 %v6107
          %v6371 = vunpack.c.l.b16 %v6108
          %v6372 = vunpack.c.l.b16 %v6109
          %v6373 = vunpack.c.l.b16 %v6110
          %v6374 = vunpack.c.l.b16 %v6111
          %v6375 = vunpack.c.l.b16 %v6112
          %v6376 = vunpack.c.l.b16 %v6113
          %v6377 = vunpack.c.l.b16 %v6114
          %v6378 = vunpack.c.l.b16 %v6115
          %v6379 = vunpack.c.l.b16 %v6116
          %v6380 = vunpack.c.l.b16 %v6117
          %v6381 = vunpack.c.l.b16 %v6118
          %v6382 = vunpack.c.l.b16 %v6119
          %v6383 = vunpack.c.l.b16 %v6120
          %v6384 = vunpack.c.l.b16 %v6121
          %v6385 = vunpack.c.l.b16 %v6122
          %v6386 = vunpack.c.l.b16 %v6123
          %v6387 = vunpack.c.l.b16 %v6124
          %v6388 = vunpack.c.l.b16 %v6125
          %v6389 = vunpack.c.l.b16 %v6126
          %v6390 = vunpack.c.l.b16 %v6127
          %v6391 = vunpack.c.l.b16 %v6128
          %v6392 = vunpack.c.l.b16 %v6129
          %v6393 = vunpack.c.l.b16 %v6130
          %v6394 = vunpack.c.l.b16 %v6131
          %v6395 = vunpack.c.l.b16 %v6132
          %v6396 = vunpack.c.l.b16 %v6133
          %v6397 = vunpack.c.l.b16 %v6134
          %v6398 = vunpack.c.l.b16 %v6135
          %v6399 = vunpack.c.l.b16 %v6136
          %v6400 = vunpack.c.l.b16 %v6137
          %v6401 = vunpack.c.l.b16 %v6138
          %v6402 = vunpack.c.l.b16 %v6139
          %v6403 = vunpack.c.l.b16 %v6140
          %v6404 = vunpack.c.l.b16 %v6141
          %v6405 = vunpack.c.l.b16 %v6142
          %v6406 = vunpack.c.l.b16 %v6143
          %v6407 = vunpack.c.l.b16 %v6144
          %v6408 = vunpack.c.l.b16 %v6145
          %v6409 = vunpack.c.l.b16 %v6146
          %v6410 = vunpack.c.l.b16 %v6147
          %v6411 = vunpack.c.l.b16 %v6148
          %v6412 = vunpack.c.l.b16 %v6149
          %v6413 = vunpack.c.l.b16 %v6150
          %v6414 = vunpack.c.l.b16 %v6151
          %v6415 = vunpack.c.l.b16 %v6152
          %v6416 = vunpack.c.l.b16 %v6153
          %v6417 = vunpack.c.l.b16 %v6154
          %v6418 = vunpack.c.l.b16 %v6155
          %v6419 = vunpack.c.l.b16 %v6156
          %v6420 = vunpack.c.l.b16 %v6157
          %v6421 = vunpack.c.l.b16 %v6158
          %v6422 = vunpack.c.l.b16 %v6159
          %v6423 = vunpack.c.l.b16 %v6160
          %v6424 = vunpack.c.l.b16 %v6161
          %v6425 = vunpack.c.l.b16 %v6162
          %v6426 = vunpack.c.l.b16 %v6163
          %v6427 = vunpack.c.l.b16 %v6164
          %v6428 = vunpack.c.l.b16 %v6165
          %v6429 = vunpack.c.l.b16 %v6166
          %v6430 = vunpack.c.l.b16 %v6167
          %v6431 = vunpack.c.l.b16 %v6168
          %v6432 = vunpack.c.l.b16 %v6169
          %v6433 = vunpack.c.l.b16 %v6170
          %v6434 = vunpack.c.l.b16 %v6171
          %v6435 = vunpack.c.l.b16 %v6172
          %v6436 = vunpack.c.l.b16 %v6173
          %v6437 = vunpack.c.l.b16 %v6174
          %v6438 = vunpack.c.l.b16 %v6175
          %v6439 = vunpack.c.l.b16 %v6176
          %v6440 = vunpack.c.l.b16 %v6177
          %v6441 = vunpack.c.l.b16 %v6178
          %v6442 = vunpack.c.l.b16 %v6179
          %v6443 = vpack.c.b16 %v6316, %v6315
          %v6444 = vpack.c.b16 %v6318, %v6317
          %v6445 = vpack.c.b16 %v6320, %v6319
          %v6446 = vpack.c.b16 %v6322, %v6321
          %v6447 = vpack.c.b16 %v6324, %v6323
          %v6448 = vpack.c.b16 %v6326, %v6325
          %v6449 = vpack.c.b16 %v6328, %v6327
          %v6450 = vpack.c.b16 %v6330, %v6329
          %v6451 = vpack.c.b16 %v6332, %v6331
          %v6452 = vpack.c.b16 %v6334, %v6333
          %v6453 = vpack.c.b16 %v6336, %v6335
          %v6454 = vpack.c.b16 %v6338, %v6337
          %v6455 = vpack.c.b16 %v6340, %v6339
          %v6456 = vpack.c.b16 %v6342, %v6341
          %v6457 = vpack.c.b16 %v6344, %v6343
          %v6458 = vpack.c.b16 %v6346, %v6345
          %v6459 = vpack.c.b16 %v6348, %v6347
          %v6460 = vpack.c.b16 %v6350, %v6349
          %v6461 = vpack.c.b16 %v6352, %v6351
          %v6462 = vpack.c.b16 %v6354, %v6353
          %v6463 = vpack.c.b16 %v6356, %v6355
          %v6464 = vpack.c.b16 %v6358, %v6357
          %v6465 = vpack.c.b16 %v6360, %v6359
          %v6466 = vpack.c.b16 %v6362, %v6361
          %v6467 = vpack.c.b16 %v6364, %v6363
          %v6468 = vpack.c.b16 %v6366, %v6365
          %v6469 = vpack.c.b16 %v6368, %v6367
          %v6470 = vpack.c.b16 %v6370, %v6369
          %v6471 = vpack.c.b16 %v6372, %v6371
          %v6472 = vpack.c.b16 %v6374, %v6373
          %v6473 = vpack.c.b16 %v6376, %v6375
          %v6474 = vpack.c.b16 %v6378, %v6377
          %v6475 = vpack.c.b16 %v6380, %v6379
          %v6476 = vpack.c.b16 %v6382, %v6381
          %v6477 = vpack.c.b16 %v6384, %v6383
          %v6478 = vpack.c.b16 %v6386, %v6385
          %v6479 = vpack.c.b16 %v6388, %v6387
          %v6480 = vpack.c.b16 %v6390, %v6389
          %v6481 = vpack.c.b16 %v6392, %v6391
          %v6482 = vpack.c.b16 %v6394, %v6393
          %v6483 = vpack.c.b16 %v6396, %v6395
          %v6484 = vpack.c.b16 %v6398, %v6397
          %v6485 = vpack.c.b16 %v6400, %v6399
          %v6486 = vpack.c.b16 %v6402, %v6401
          %v6487 = vpack.c.b16 %v6404, %v6403
          %v6488 = vpack.c.b16 %v6406, %v6405
          %v6489 = vpack.c.b16 %v6408, %v6407
          %v6490 = vpack.c.b16 %v6410, %v6409
          %v6491 = vpack.c.b16 %v6412, %v6411
          %v6492 = vpack.c.b16 %v6414, %v6413
          %v6493 = vpack.c.b16 %v6416, %v6415
          %v6494 = vpack.c.b16 %v6418, %v6417
          %v6495 = vpack.c.b16 %v6420, %v6419
          %v6496 = vpack.c.b16 %v6422, %v6421
          %v6497 = vpack.c.b16 %v6424, %v6423
          %v6498 = vpack.c.b16 %v6426, %v6425
          %v6499 = vpack.c.b16 %v6428, %v6427
          %v6500 = vpack.c.b16 %v6430, %v6429
          %v6501 = vpack.c.b16 %v6432, %v6431
          %v6502 = vpack.c.b16 %v6434, %v6433
          %v6503 = vpack.c.b16 %v6436, %v6435
          %v6504 = vpack.c.b16 %v6438, %v6437
          %v6505 = vpack.c.b16 %v6440, %v6439
          %v6506 = vpack.c.b16 %v6442, %v6441
          %6571 = vmatprep.subr.bf16.mxu0 0
          %6572 = vmatpush1.bf16.msra.mxu0 %v6443
          %6573 = vmatprep.subr.bf16.mxu0 0
          %6574 = vmatpush1.bf16.msra.mxu0 %v6444
          %6575 = vmatprep.subr.bf16.mxu0 0
          %6576 = vmatpush1.bf16.msra.mxu0 %v6445
          %6577 = vmatprep.subr.bf16.mxu0 0
          %6578 = vmatpush1.bf16.msra.mxu0 %v6446
          %6579 = vmatprep.subr.bf16.mxu0 0
          %6580 = vmatpush1.bf16.msra.mxu0 %v6447
          %6581 = vmatprep.subr.bf16.mxu0 0
          %6582 = vmatpush1.bf16.msra.mxu0 %v6448
          %6583 = vmatprep.subr.bf16.mxu0 0
          %6584 = vmatpush1.bf16.msra.mxu0 %v6449
          %6585 = vmatprep.subr.bf16.mxu0 0
          %6586 = vmatpush1.bf16.msra.mxu0 %v6450
          %6587 = vmatprep.subr.bf16.mxu0 0
          %6588 = vmatpush1.bf16.msra.mxu0 %v6451
          %6589 = vmatprep.subr.bf16.mxu0 0
          %6590 = vmatpush1.bf16.msra.mxu0 %v6452
          %6591 = vmatprep.subr.bf16.mxu0 0
          %6592 = vmatpush1.bf16.msra.mxu0 %v6453
          %6593 = vmatprep.subr.bf16.mxu0 0
          %6594 = vmatpush1.bf16.msra.mxu0 %v6454
          %6595 = vmatprep.subr.bf16.mxu0 0
          %6596 = vmatpush1.bf16.msra.mxu0 %v6455
          %6597 = vmatprep.subr.bf16.mxu0 0
          %6598 = vmatpush1.bf16.msra.mxu0 %v6456
          %6599 = vmatprep.subr.bf16.mxu0 0
          %6600 = vmatpush1.bf16.msra.mxu0 %v6457
          %6601 = vmatprep.subr.bf16.mxu0 0
          %6602 = vmatpush1.bf16.msra.mxu0 %v6458
          %6603 = vmatprep.mubr.bf16.mxu0 %v6045
          %6604 = vmatmul.mubr.bf16.gmra.mrb[0].mxu0 %v6044
          %v6605 = vpop.f32.mrb[0].mxu0
          %v6606 = vadd.f32 %v6185, %v6605
          %v6607 = vpop.f32.mrb[0].mxu0
          %v6608 = vpop.f32.mrb[0].mxu0
          %v6609 = vpop.f32.mrb[0].mxu0
          %6610 = vdwg.mxu0
          %6611 = vmatprep.subr.bf16.mxu0 0
          %6612 = vmatpush1.bf16.msra.mxu0 %v6459
          %6613 = vmatprep.subr.bf16.mxu0 0
          %6614 = vmatpush1.bf16.msra.mxu0 %v6460
          %6615 = vmatprep.subr.bf16.mxu0 0
          %6616 = vmatpush1.bf16.msra.mxu0 %v6461
          %6617 = vmatprep.subr.bf16.mxu0 0
          %6618 = vmatpush1.bf16.msra.mxu0 %v6462
          %6619 = vmatprep.subr.bf16.mxu0 0
          %6620 = vmatpush1.bf16.msra.mxu0 %v6463
          %6621 = vmatprep.subr.bf16.mxu0 0
          %6622 = vmatpush1.bf16.msra.mxu0 %v6464
          %6623 = vmatprep.subr.bf16.mxu0 0
          %6624 = vmatpush1.bf16.msra.mxu0 %v6465
          %6625 = vmatprep.subr.bf16.mxu0 0
          %6626 = vmatpush1.bf16.msra.mxu0 %v6466
          %6627 = vmatprep.subr.bf16.mxu0 0
          %6628 = vmatpush1.bf16.msra.mxu0 %v6467
          %6629 = vmatprep.subr.bf16.mxu0 0
          %6630 = vmatpush1.bf16.msra.mxu0 %v6468
          %6631 = vmatprep.subr.bf16.mxu0 0
          %6632 = vmatpush1.bf16.msra.mxu0 %v6469
          %6633 = vmatprep.subr.bf16.mxu0 0
          %6634 = vmatpush1.bf16.msra.mxu0 %v6470
          %6635 = vmatprep.subr.bf16.mxu0 0
          %6636 = vmatpush1.bf16.msra.mxu0 %v6471
          %6637 = vmatprep.subr.bf16.mxu0 0
          %6638 = vmatpush1.bf16.msra.mxu0 %v6472
          %6639 = vmatprep.subr.bf16.mxu0 0
          %6640 = vmatpush1.bf16.msra.mxu0 %v6473
          %6641 = vmatprep.subr.bf16.mxu0 0
          %6642 = vmatpush1.bf16.msra.mxu0 %v6474
          %6643 = vmatprep.mubr.bf16.mxu0 %v6047
          %6644 = vmatmul.mubr.bf16.gmra.mrb[0].mxu0 %v6046
          %v6645 = vpop.f32.mrb[0].mxu0
          %v6646 = vadd.f32 %v6606, %v6645
          %v6647 = vpop.f32.mrb[0].mxu0
          %v6648 = vpop.f32.mrb[0].mxu0
          %v6649 = vpop.f32.mrb[0].mxu0
          %6650 = vdwg.mxu0
          %6651 = vmatprep.subr.bf16.mxu0 0
          %6652 = vmatpush1.bf16.msra.mxu0 %v6475
          %6653 = vmatprep.subr.bf16.mxu0 0
          %6654 = vmatpush1.bf16.msra.mxu0 %v6476
          %6655 = vmatprep.subr.bf16.mxu0 0
          %6656 = vmatpush1.bf16.msra.mxu0 %v6477
          %6657 = vmatprep.subr.bf16.mxu0 0
          %6658 = vmatpush1.bf16.msra.mxu0 %v6478
          %6659 = vmatprep.subr.bf16.mxu0 0
          %6660 = vmatpush1.bf16.msra.mxu0 %v6479
          %6661 = vmatprep.subr.bf16.mxu0 0
          %6662 = vmatpush1.bf16.msra.mxu0 %v6480
          %6663 = vmatprep.subr.bf16.mxu0 0
          %6664 = vmatpush1.bf16.msra.mxu0 %v6481
          %6665 = vmatprep.subr.bf16.mxu0 0
          %6666 = vmatpush1.bf16.msra.mxu0 %v6482
          %6667 = vmatprep.subr.bf16.mxu0 0
          %6668 = vmatpush1.bf16.msra.mxu0 %v6483
          %6669 = vmatprep.subr.bf16.mxu0 0
          %6670 = vmatpush1.bf16.msra.mxu0 %v6484
          %6671 = vmatprep.subr.bf16.mxu0 0
          %6672 = vmatpush1.bf16.msra.mxu0 %v6485
          %6673 = vmatprep.subr.bf16.mxu0 0
          %6674 = vmatpush1.bf16.msra.mxu0 %v6486
          %6675 = vmatprep.subr.bf16.mxu0 0
          %6676 = vmatpush1.bf16.msra.mxu0 %v6487
          %6677 = vmatprep.subr.bf16.mxu0 0
          %6678 = vmatpush1.bf16.msra.mxu0 %v6488
          %6679 = vmatprep.subr.bf16.mxu0 0
          %6680 = vmatpush1.bf16.msra.mxu0 %v6489
          %6681 = vmatprep.subr.bf16.mxu0 0
          %6682 = vmatpush1.bf16.msra.mxu0 %v6490
          %6683 = vmatprep.mubr.bf16.mxu0 %v6049
          %6684 = vmatmul.mubr.bf16.gmra.mrb[0].mxu0 %v6048
          %v6685 = vpop.f32.mrb[0].mxu0
          %v6686 = vadd.f32 %v6646, %v6685
          %v6687 = vpop.f32.mrb[0].mxu0
          %v6688 = vpop.f32.mrb[0].mxu0
          %v6689 = vpop.f32.mrb[0].mxu0
          %6690 = vdwg.mxu0
          %6691 = vmatprep.subr.bf16.mxu0 0
          %6692 = vmatpush1.bf16.msra.mxu0 %v6491
          %6693 = vmatprep.subr.bf16.mxu0 0
          %6694 = vmatpush1.bf16.msra.mxu0 %v6492
          %6695 = vmatprep.subr.bf16.mxu0 0
          %6696 = vmatpush1.bf16.msra.mxu0 %v6493
          %6697 = vmatprep.subr.bf16.mxu0 0
          %6698 = vmatpush1.bf16.msra.mxu0 %v6494
          %6699 = vmatprep.subr.bf16.mxu0 0
          %6700 = vmatpush1.bf16.msra.mxu0 %v6495
          %6701 = vmatprep.subr.bf16.mxu0 0
          %6702 = vmatpush1.bf16.msra.mxu0 %v6496
          %6703 = vmatprep.subr.bf16.mxu0 0
          %6704 = vmatpush1.bf16.msra.mxu0 %v6497
          %6705 = vmatprep.subr.bf16.mxu0 0
          %6706 = vmatpush1.bf16.msra.mxu0 %v6498
          %6707 = vmatprep.subr.bf16.mxu0 0
          %6708 = vmatpush1.bf16.msra.mxu0 %v6499
          %6709 = vmatprep.subr.bf16.mxu0 0
          %6710 = vmatpush1.bf16.msra.mxu0 %v6500
          %6711 = vmatprep.subr.bf16.mxu0 0
          %6712 = vmatpush1.bf16.msra.mxu0 %v6501
          %6713 = vmatprep.subr.bf16.mxu0 0
          %6714 = vmatpush1.bf16.msra.mxu0 %v6502
          %6715 = vmatprep.subr.bf16.mxu0 0
          %6716 = vmatpush1.bf16.msra.mxu0 %v6503
          %6717 = vmatprep.subr.bf16.mxu0 0
          %6718 = vmatpush1.bf16.msra.mxu0 %v6504
          %6719 = vmatprep.subr.bf16.mxu0 0
          %6720 = vmatpush1.bf16.msra.mxu0 %v6505
          %6721 = vmatprep.subr.bf16.mxu0 0
          %6722 = vmatpush1.bf16.msra.mxu0 %v6506
          %6723 = vmatprep.mubr.bf16.mxu0 %v6051
          %6724 = vmatmul.mubr.bf16.gmra.mrb[0].mxu0 %v6050
          %v6725 = vpop.f32.mrb[0].mxu0
          %v6726 = vadd.f32 %v6686, %v6725
          %v6727 = vpop.f32.mrb[0].mxu0
          %v6728 = vpop.f32.mrb[0].mxu0
          %v6729 = vpop.f32.mrb[0].mxu0
          %6730 = vdwg.mxu0
          %vm6731 = vcmask 58368
          %6732 = vst.msk [vmem:[%s8] sm:$0x3] %vm6731, %v6726
        $region84: #{loss_header_forward.1} parent=51 // pred_fallthru
          _
        // Predicated region
        $region85: #{loss_header_forward.1} parent=51 // pred_check
          %p6733 = pneg %p211
        $region86: #{loss_header_forward.1} parent=51 // pred_check_branch
          %6735 = sbr.rel (%p6733) target = $region88
        $region87: #{loss_header_forward.1} parent=51 // pred_region
          _
        $region88: #{loss_header_forward.1} parent=51 // pred_fallthru
          _
        // Predicated region
        $region89: #{loss_header_forward.1} parent=51 // pred_check
          %p6736 = pneg %p211
        $region90: #{loss_header_forward.1} parent=51 // pred_check_branch
          %6738 = sbr.rel (%p6736) target = $region92
        $region91: #{loss_header_forward.1} parent=51 // pred_region
          _
        $region92: #{loss_header_forward.1} parent=51 // pred_fallthru
          _
      $region52: #{loss_header_forward.1} parent=5 // pred_fallthru
        _
      %p6739 = scmp.le.s32.totalorder 2, %s20
      // Predicated region
      $region93: #{loss_header_forward.1} parent=5 // pred_check
        %p6740 = pneg %p6739
      $region94: #{loss_header_forward.1} parent=5 // pred_check_branch
        %6742 = sbr.rel (%p6740) target = $region96
      $region95: #{loss_header_forward.1} parent=5 // pred_region
        %s6743 = ssub.s32 %s20, 2
      $region96: #{loss_header_forward.1} parent=5 // pred_fallthru
        _
    $region6: #{loss_header_forward.1} parent=1 // loop_footer
      %s24 = sadd.s32 1, %s20
    $region7: #{loss_header_forward.1} parent=1 // loop_footer_branch
      %19 = sbr.rel target = $region3
    $region8: #{loss_header_forward.1} parent=1 // loop_exit
      _
    %6744 = vsyncpa [#allocation5], 1
    %s6745 = scalar_lea.sflag [#allocation5], 1
    %6746 = vsyncpa %s6745, 1
    %6747 = vsyncpa [#allocation7], 1
    %6748 = vsyncpa [#allocation10], 1
    %s6749 = scalar_lea.sflag [#allocation10], 1
    %6750 = vsyncpa %s6749, 1
    %6751 = vsyncpa [#allocation13], 1

</llo_original>
